<compile_context>
chip_gen: v5e
topology: v5e:2x2
jax: 0.10.0
libtpu: 0.0.40
codegen_flags: <defaults>
</compile_context>

<pallas_src>
import functools

import jax
import jax.numpy as jnp
from jax.experimental import pallas as pl
from jax.experimental.pallas import tpu as pltpu

LANE = 128      # TPU lane width: head/output padding target
SUBLANE = 8     # f32 sublane height: batch padding target


def _round_up(n, m):
    return ((n + m - 1) // m) * m


def dueling_q_kernel(
    x_ref,
    w1_ref, b1_ref,
    w2_ref, b2_ref,
    w3_ref, b3_ref,
    wh1_ref, bh1_ref,
    wh2_ref, bh2_ref,
    q_ref,
    *,
    batch, n_actions,
):
    # x is tiny and arrives f32; cast once to bf16 so every matmul feeds the
    # MXU with bf16 operands and f32 accumulation.
    x = x_ref[...].astype(jnp.bfloat16)

    def lin_relu(a, w_ref, b_ref):
        y = jnp.dot(a, w_ref[...], preferred_element_type=jnp.float32) + b_ref[...]
        return jnp.maximum(y, 0.0).astype(jnp.bfloat16)

    # trunk: fc1 -> relu -> fc2 -> relu -> fc3 -> relu
    h = lin_relu(x, w1_ref, b1_ref)
    h = lin_relu(h, w2_ref, b2_ref)
    h = lin_relu(h, w3_ref, b3_ref)

    # fused heads, stage 1: [v_h | a_h] in a single full-width matmul
    hh = lin_relu(h, wh1_ref, bh1_ref)

    # fused heads, stage 2: block weight -> (B_pad, 2*LANE)
    out2 = jnp.dot(hh, wh2_ref[...], preferred_element_type=jnp.float32) + bh2_ref[...]
    adv = out2[:, :LANE]    # cols >= n_actions are exactly 0 (zero weights/bias)
    val = out2[:, LANE:]    # value replicated across all 128 lanes

    # PyTorch semantics: advantage.mean() is a GLOBAL scalar mean over
    # (batch, n_actions). Mask out padded rows and padded lanes.
    rows = jax.lax.broadcasted_iota(jnp.int32, adv.shape, 0)
    cols = jax.lax.broadcasted_iota(jnp.int32, adv.shape, 1)
    mask = (rows < batch) & (cols < n_actions)
    adv_mean = jnp.sum(jnp.where(mask, adv, 0.0)) * (1.0 / (batch * n_actions))

    q_ref[...] = (val + adv - adv_mean).astype(q_ref.dtype)


def fuse_params(params):
    """Fuse the value/advantage heads and cast weights to bf16.

    `params` is the flat tuple (w1,b1,w2,b2,w3,b3,wv1,bv1,wv2,bv2,wa1,ba1,
    wa2,ba2) with weights in (in, out) layout and biases (1, out), all f32.
    Returns (fused_params, n_actions).
    """
    (w1, b1, w2, b2, w3, b3,
     wv1, bv1, wv2, bv2, wa1, ba1, wa2, ba2) = params

    vh = wv1.shape[1]          # 256
    ah = wa1.shape[1]          # 256
    n_actions = wa2.shape[1]
    assert n_actions <= LANE, "output_dim must fit one lane block"

    # stage 1: (hidden, vh+ah) producing [v_h | a_h]
    wh1 = jnp.concatenate([wv1, wa1], axis=1)
    bh1 = jnp.concatenate([bv1, ba1], axis=1)

    # stage 2: block weight (vh+ah, 2*LANE)
    #   cols [0, LANE)      : advantage (wa2 lives in rows vh:, cols :A; rest 0)
    #   cols [LANE, 2*LANE) : value column replicated across all 128 lanes
    wh2 = jnp.zeros((vh + ah, 2 * LANE), jnp.float32)
    wh2 = wh2.at[vh:, :n_actions].set(wa2)
    wh2 = wh2.at[:vh, LANE:].set(jnp.broadcast_to(wv2, (vh, LANE)))
    bh2 = jnp.zeros((1, 2 * LANE), jnp.float32)
    bh2 = bh2.at[:, :n_actions].set(ba2)
    bh2 = bh2.at[:, LANE:].set(jnp.broadcast_to(bv2, (1, LANE)))

    bf = lambda w: w.astype(jnp.bfloat16)
    fused = (bf(w1), b1, bf(w2), b2, bf(w3), b3, bf(wh1), bh1, bf(wh2), bh2)
    return fused, n_actions


@functools.partial(jax.jit, static_argnums=(2,))
def dueling_q_forward(x, fused_params, n_actions):
    """x: (B, input_dim) f32.  Returns q-values (B, n_actions) f32."""
    batch = x.shape[0]
    b_pad = _round_up(max(batch, SUBLANE), SUBLANE)
    if b_pad != batch:
        x = jnp.pad(x, ((0, b_pad - batch), (0, 0)))

    vmem = pl.BlockSpec(memory_space=pltpu.MemorySpace.VMEM)
    kernel = functools.partial(dueling_q_kernel, batch=batch, n_actions=n_actions)

    q_pad = pl.pallas_call(
        kernel,
        out_shape=jax.ShapeDtypeStruct((b_pad, LANE), jnp.float32),
        in_specs=[vmem] * (1 + len(fused_params)),
        out_specs=vmem,
        compiler_params=pltpu.CompilerParams(vmem_limit_bytes=32 * 1024 * 1024),
    )(x, *fused_params)

    return q_pad[:batch, :n_actions]


def _torch_linear_init(key, in_features, out_features):
    """Deterministic stand-in for nn.Linear default init: U(-k, k), k=1/sqrt(in)."""
    kw, kb = jax.random.split(key)
    bound = 1.0 / jnp.sqrt(jnp.float32(in_features))
    w = jax.random.uniform(kw, (in_features, out_features), jnp.float32, -bound, bound)
    b = jax.random.uniform(kb, (1, out_features), jnp.float32, -bound, bound)
    return w, b


def make_params(key, input_dim, output_dim, hidden=512, head_hidden=256):
    keys = jax.random.split(key, 7)
    w1, b1 = _torch_linear_init(keys[0], input_dim, hidden)         # fc1
    w2, b2 = _torch_linear_init(keys[1], hidden, hidden)            # fc2
    w3, b3 = _torch_linear_init(keys[2], hidden, hidden)            # fc3
    wv1, bv1 = _torch_linear_init(keys[3], hidden, head_hidden)     # value_fc
    wv2, bv2 = _torch_linear_init(keys[4], head_hidden, 1)          # value
    wa1, ba1 = _torch_linear_init(keys[5], hidden, head_hidden)     # advantage_fc
    wa2, ba2 = _torch_linear_init(keys[6], head_hidden, output_dim)  # advantage
    return (w1, b1, w2, b2, w3, b3, wv1, bv1, wv2, bv2, wa1, ba1, wa2, ba2)


def reference_forward(x, params):
    """Pure-JAX reference emulating the same bf16-weight / f32-accumulate math."""
    (w1, b1, w2, b2, w3, b3,
     wv1, bv1, wv2, bv2, wa1, ba1, wa2, ba2) = params

    def lin(a, w, b):
        return jnp.dot(a.astype(jnp.bfloat16), w.astype(jnp.bfloat16),
                       preferred_element_type=jnp.float32) + b

    h = jnp.maximum(lin(x, w1, b1), 0.0)
    h = jnp.maximum(lin(h, w2, b2), 0.0)
    h = jnp.maximum(lin(h, w3, b3), 0.0)
    v = lin(jnp.maximum(lin(h, wv1, bv1), 0.0), wv2, bv2)
    a = lin(jnp.maximum(lin(h, wa1, ba1), 0.0), wa2, ba2)
    return v + a - jnp.mean(a)   # global scalar mean, like advantage.mean()


if __name__ == "__main__":
    key = jax.random.PRNGKey(0)
    k_params, k_x = jax.random.split(key)

    batch = 2
    input_dim = 32
    output_dim = 8

    params = make_params(k_params, input_dim, output_dim)
    fused, n_actions = fuse_params(params)

    x = jax.random.normal(k_x, (batch, input_dim), jnp.float32)

    q = dueling_q_forward(x, fused, n_actions)
    q = jax.block_until_ready(q)

    q_ref = reference_forward(x, params)
    assert q.shape == (batch, output_dim)
    assert jnp.allclose(q, q_ref, atol=2e-3, rtol=2e-3), "mismatch vs reference"

    print("KERNEL_OK")
</pallas_src>

<mosaic_0001>
module attributes {stable_mosaic.version = 11 : i64} {
  func.func @dueling_q_kernel(%arg0: memref<8x32xf32, #tpu.memory_space<vmem>>, %arg1: memref<32x512xbf16, #tpu.memory_space<vmem>>, %arg2: memref<1x512xf32, #tpu.memory_space<vmem>>, %arg3: memref<512x512xbf16, #tpu.memory_space<vmem>>, %arg4: memref<1x512xf32, #tpu.memory_space<vmem>>, %arg5: memref<512x512xbf16, #tpu.memory_space<vmem>>, %arg6: memref<1x512xf32, #tpu.memory_space<vmem>>, %arg7: memref<512x512xbf16, #tpu.memory_space<vmem>>, %arg8: memref<1x512xf32, #tpu.memory_space<vmem>>, %arg9: memref<512x256xbf16, #tpu.memory_space<vmem>>, %arg10: memref<1x256xf32, #tpu.memory_space<vmem>>, %arg11: memref<8x128xf32, #tpu.memory_space<vmem>>) attributes {dimension_semantics = [], scalar_prefetch = 0 : i64, scratch_operands = 0 : i64, tpu.core_type = #tpu.core_type<tc>} {
    %c0 = arith.constant 0 : index
    %c0_0 = arith.constant 0 : index
    %0 = vector.load %arg0[%c0, %c0_0] : memref<8x32xf32, #tpu.memory_space<vmem>>, vector<8x32xf32>
    %1 = arith.truncf %0 : vector<8x32xf32> to vector<8x32xbf16>
    %c0_1 = arith.constant 0 : index
    %c0_2 = arith.constant 0 : index
    %2 = vector.load %arg1[%c0_1, %c0_2] : memref<32x512xbf16, #tpu.memory_space<vmem>>, vector<32x512xbf16>
    %cst = arith.constant dense<0.000000e+00> : vector<8x512xf32>
    %3 = tpu.matmul %1, %2, %cst {dimension_numbers = #tpu.dot_dimension_numbers<[1], [0], [0], [1], [0, 0, 1, 1], [], []>} : vector<8x32xbf16>, vector<32x512xbf16>, vector<8x512xf32> -> vector<8x512xf32>
    %c0_3 = arith.constant 0 : index
    %c0_4 = arith.constant 0 : index
    %4 = vector.load %arg2[%c0_3, %c0_4] : memref<1x512xf32, #tpu.memory_space<vmem>>, vector<1x512xf32>
    %5 = vector.broadcast %4 : vector<1x512xf32> to vector<8x512xf32>
    %6 = arith.addf %3, %5 : vector<8x512xf32>
    %cst_5 = arith.constant 0.000000e+00 : f32
    %7 = vector.broadcast %cst_5 : f32 to vector<8x512xf32>
    %8 = arith.maximumf %6, %7 : vector<8x512xf32>
    %9 = arith.truncf %8 : vector<8x512xf32> to vector<8x512xbf16>
    %c0_6 = arith.constant 0 : index
    %c0_7 = arith.constant 0 : index
    %10 = vector.load %arg3[%c0_6, %c0_7] : memref<512x512xbf16, #tpu.memory_space<vmem>>, vector<512x512xbf16>
    %cst_8 = arith.constant dense<0.000000e+00> : vector<8x512xf32>
    %11 = tpu.matmul %9, %10, %cst_8 {dimension_numbers = #tpu.dot_dimension_numbers<[1], [0], [0], [1], [0, 0, 1, 1], [], []>} : vector<8x512xbf16>, vector<512x512xbf16>, vector<8x512xf32> -> vector<8x512xf32>
    %c0_9 = arith.constant 0 : index
    %c0_10 = arith.constant 0 : index
    %12 = vector.load %arg4[%c0_9, %c0_10] : memref<1x512xf32, #tpu.memory_space<vmem>>, vector<1x512xf32>
    %13 = vector.broadcast %12 : vector<1x512xf32> to vector<8x512xf32>
    %14 = arith.addf %11, %13 : vector<8x512xf32>
    %cst_11 = arith.constant 0.000000e+00 : f32
    %15 = vector.broadcast %cst_11 : f32 to vector<8x512xf32>
    %16 = arith.maximumf %14, %15 : vector<8x512xf32>
    %17 = arith.truncf %16 : vector<8x512xf32> to vector<8x512xbf16>
    %c0_12 = arith.constant 0 : index
    %c0_13 = arith.constant 0 : index
    %18 = vector.load %arg5[%c0_12, %c0_13] : memref<512x512xbf16, #tpu.memory_space<vmem>>, vector<512x512xbf16>
    %cst_14 = arith.constant dense<0.000000e+00> : vector<8x512xf32>
    %19 = tpu.matmul %17, %18, %cst_14 {dimension_numbers = #tpu.dot_dimension_numbers<[1], [0], [0], [1], [0, 0, 1, 1], [], []>} : vector<8x512xbf16>, vector<512x512xbf16>, vector<8x512xf32> -> vector<8x512xf32>
    %c0_15 = arith.constant 0 : index
    %c0_16 = arith.constant 0 : index
    %20 = vector.load %arg6[%c0_15, %c0_16] : memref<1x512xf32, #tpu.memory_space<vmem>>, vector<1x512xf32>
    %21 = vector.broadcast %20 : vector<1x512xf32> to vector<8x512xf32>
    %22 = arith.addf %19, %21 : vector<8x512xf32>
    %cst_17 = arith.constant 0.000000e+00 : f32
    %23 = vector.broadcast %cst_17 : f32 to vector<8x512xf32>
    %24 = arith.maximumf %22, %23 : vector<8x512xf32>
    %25 = arith.truncf %24 : vector<8x512xf32> to vector<8x512xbf16>
    %c0_18 = arith.constant 0 : index
    %c0_19 = arith.constant 0 : index
    %26 = vector.load %arg7[%c0_18, %c0_19] : memref<512x512xbf16, #tpu.memory_space<vmem>>, vector<512x512xbf16>
    %cst_20 = arith.constant dense<0.000000e+00> : vector<8x512xf32>
    %27 = tpu.matmul %25, %26, %cst_20 {dimension_numbers = #tpu.dot_dimension_numbers<[1], [0], [0], [1], [0, 0, 1, 1], [], []>} : vector<8x512xbf16>, vector<512x512xbf16>, vector<8x512xf32> -> vector<8x512xf32>
    %c0_21 = arith.constant 0 : index
    %c0_22 = arith.constant 0 : index
    %28 = vector.load %arg8[%c0_21, %c0_22] : memref<1x512xf32, #tpu.memory_space<vmem>>, vector<1x512xf32>
    %29 = vector.broadcast %28 : vector<1x512xf32> to vector<8x512xf32>
    %30 = arith.addf %27, %29 : vector<8x512xf32>
    %cst_23 = arith.constant 0.000000e+00 : f32
    %31 = vector.broadcast %cst_23 : f32 to vector<8x512xf32>
    %32 = arith.maximumf %30, %31 : vector<8x512xf32>
    %33 = arith.truncf %32 : vector<8x512xf32> to vector<8x512xbf16>
    %c0_24 = arith.constant 0 : index
    %c0_25 = arith.constant 0 : index
    %34 = vector.load %arg9[%c0_24, %c0_25] : memref<512x256xbf16, #tpu.memory_space<vmem>>, vector<512x256xbf16>
    %cst_26 = arith.constant dense<0.000000e+00> : vector<8x256xf32>
    %35 = tpu.matmul %33, %34, %cst_26 {dimension_numbers = #tpu.dot_dimension_numbers<[1], [0], [0], [1], [0, 0, 1, 1], [], []>} : vector<8x512xbf16>, vector<512x256xbf16>, vector<8x256xf32> -> vector<8x256xf32>
    %c0_27 = arith.constant 0 : index
    %c0_28 = arith.constant 0 : index
    %36 = vector.load %arg10[%c0_27, %c0_28] : memref<1x256xf32, #tpu.memory_space<vmem>>, vector<1x256xf32>
    %37 = vector.broadcast %36 : vector<1x256xf32> to vector<8x256xf32>
    %38 = arith.addf %35, %37 : vector<8x256xf32>
    %39 = vector.extract_strided_slice %38 {offsets = [0, 0], sizes = [8, 128], strides = [1, 1]} : vector<8x256xf32> to vector<8x128xf32>
    %40 = vector.extract_strided_slice %38 {offsets = [0, 128], sizes = [8, 128], strides = [1, 1]} : vector<8x256xf32> to vector<8x128xf32>
    %41 = tpu.iota {dimensions = array<i32: 0>} : vector<8x128xi32>
    %42 = tpu.iota {dimensions = array<i32: 1>} : vector<8x128xi32>
    %c2_i32 = arith.constant 2 : i32
    %43 = vector.broadcast %c2_i32 : i32 to vector<8x128xi32>
    %44 = arith.cmpi slt, %41, %43 : vector<8x128xi32>
    %c8_i32 = arith.constant 8 : i32
    %45 = vector.broadcast %c8_i32 : i32 to vector<8x128xi32>
    %46 = arith.cmpi slt, %42, %45 : vector<8x128xi32>
    %47 = arith.andi %44, %46 : vector<8x128xi1>
    %cst_29 = arith.constant 0.000000e+00 : f32
    %48 = vector.broadcast %cst_29 : f32 to vector<8x128xf32>
    %49 = arith.select %47, %39, %48 : vector<8x128xi1>, vector<8x128xf32>
    %50 = vector.shape_cast %49 : vector<8x128xf32> to vector<1x8x128xf32>
    %cst_30 = arith.constant dense<0.000000e+00> : vector<1xf32>
    %51 = vector.multi_reduction <add>, %50, %cst_30 [1, 2] : vector<1x8x128xf32> to vector<1xf32>
    %52 = vector.shape_cast %51 : vector<1xf32> to vector<1x1x1xf32>
    %53 = vector.extract %52[0, 0, 0] : f32 from vector<1x1x1xf32>
    %cst_31 = arith.constant 6.250000e-02 : f32
    %54 = arith.mulf %53, %cst_31 : f32
    %55 = arith.addf %40, %39 : vector<8x128xf32>
    %56 = vector.broadcast %54 : f32 to vector<8x128xf32>
    %57 = arith.subf %55, %56 : vector<8x128xf32>
    %c0_32 = arith.constant 0 : index
    %c0_33 = arith.constant 0 : index
    %58 = vector.load %arg11[%c0_32, %c0_33] : memref<8x128xf32, #tpu.memory_space<vmem>>, vector<8x128xf32>
    tpu.vector_store %arg11[%c0_32, %c0_33], %57 {strides = array<i32>} : memref<8x128xf32, #tpu.memory_space<vmem>>, vector<8x128xf32>,
    return
  }
}

</mosaic_0001>

<llo_original>
// kernel: dueling_q_forward.1
$region0: #{dueling_q_forward.1}
  #allocation0 [shape = 'u32[]', space=smem, size = 0x4, offset = 0x4, fixed_abs, tag = 'smem constant byte address 0x4 - core index']
  #allocation1 [shape = 'u32[72,128]{1,0:T(1,128)}', space=vmem, size = 0x9000, scoped, tag = 'internal scratch']
  %s0 = inlined_call_operand.vmem [shape: f32[8,32], index: 0, kind: input, shape index: {}]
  %s1 = inlined_call_operand.hbm [shape: bf16[32,512], index: 1, kind: input, shape index: {}]
  %s2 = inlined_call_operand.vmem [shape: f32[1,512], index: 2, kind: input, shape index: {}]
  %s3 = inlined_call_operand.hbm [shape: bf16[512,512], index: 3, kind: input, shape index: {}]
  %s4 = inlined_call_operand.vmem [shape: f32[1,512], index: 4, kind: input, shape index: {}]
  %s5 = inlined_call_operand.hbm [shape: bf16[512,512], index: 5, kind: input, shape index: {}]
  %s6 = inlined_call_operand.vmem [shape: f32[1,512], index: 6, kind: input, shape index: {}]
  %s7 = inlined_call_operand.hbm [shape: bf16[512,512], index: 7, kind: input, shape index: {}]
  %s8 = inlined_call_operand.vmem [shape: f32[1,512], index: 8, kind: input, shape index: {}]
  %s9 = inlined_call_operand.hbm [shape: bf16[512,256], index: 9, kind: input, shape index: {}]
  %s10 = inlined_call_operand.vmem [shape: f32[1,256], index: 10, kind: input, shape index: {}]
  %s11 = inlined_call_operand.vmem [shape: f32[8,128], index: 11, kind: output, shape index: {}]
  %s12 = sld [smem:[#allocation0]]
  $region74: #{dueling_q_forward.1} parent=0
    _
  %s14 = ssub.s32 1, %s12
  %s15 = scalar_select 0, %s14, %s12
  $region1: #{dueling_q_forward.1} parent=0
    #allocation2 [shape = 'u8[32768]{0}', space=vmem, size = 0x8000, scoped, tag = 'input window, operand 1, single buffered']
    #allocation3 [shape = 's32[1]{0}', space=sflag, size = 0x4, scoped, tag = 'scoped memory for dueling_q_forward.1']
    #allocation4 [shape = 'u8[524288]{0}', space=vmem, size = 0x80000, scoped, tag = 'input window, operand 3, single buffered']
    #allocation5 [shape = 's32[1]{0}', space=sflag, size = 0x4, scoped, tag = 'scoped memory for dueling_q_forward.1']
    #allocation6 [shape = 'u8[524288]{0}', space=vmem, size = 0x80000, scoped, tag = 'input window, operand 5, single buffered']
    #allocation7 [shape = 'u8[524288]{0}', space=vmem, size = 0x80000, scoped, tag = 'input window, operand 7, single buffered']
    #allocation8 [shape = 's32[1]{0}', space=sflag, size = 0x4, scoped, tag = 'scoped memory for dueling_q_forward.1']
    #allocation9 [shape = 'u8[262144]{0}', space=vmem, size = 0x40000, scoped, tag = 'input window, operand 9, single buffered']
    %16 = vsyncpa [#allocation3], 0
    %17 = vsyncpa [#allocation5], 0
    %18 = vsyncpa [#allocation8], 0
    // Predicated region
    $region2: #{dueling_q_forward.1} parent=1 // pred_check
      _
    $region3: #{dueling_q_forward.1} parent=1 // pred_check_branch
      %20 = sbr.rel (0) target = $region5
    $region4: #{dueling_q_forward.1} parent=1 // pred_region
      _
    $region5: #{dueling_q_forward.1} parent=1 // pred_fallthru
      _
    // Predicated region
    $region6: #{dueling_q_forward.1} parent=1 // pred_check
      _
    $region7: #{dueling_q_forward.1} parent=1 // pred_check_branch
      %22 = sbr.rel (0) target = $region9
    $region8: #{dueling_q_forward.1} parent=1 // pred_region
      %24 = vsyncadd [#allocation3], 0
      %s25 = sshll.u32 %s1, 4
      %s26 = int_to_ptr.hbm [resolvable:$true] %s25
      %s27 = sshll.u32 [#allocation2], 4
      %s28 = int_to_ptr.vmem [resolvable:$true] %s27
      %33 = dma.hbm_to_vmem [thread:$0]  %s26, 1024, %s28, [#allocation3], 256, 256, 16
    $region9: #{dueling_q_forward.1} parent=1 // pred_fallthru
      _
    // Predicated region
    $region10: #{dueling_q_forward.1} parent=1 // pred_check
      _
    $region11: #{dueling_q_forward.1} parent=1 // pred_check_branch
      %35 = sbr.rel (0) target = $region13
    $region12: #{dueling_q_forward.1} parent=1 // pred_region
      _
    $region13: #{dueling_q_forward.1} parent=1 // pred_fallthru
      _
    // Predicated region
    $region14: #{dueling_q_forward.1} parent=1 // pred_check
      _
    $region15: #{dueling_q_forward.1} parent=1 // pred_check_branch
      %37 = sbr.rel (0) target = $region17
    $region16: #{dueling_q_forward.1} parent=1 // pred_region
      %39 = vsyncadd [#allocation5], 0
      %s40 = sshll.u32 %s3, 4
      %s41 = int_to_ptr.hbm [resolvable:$true] %s40
      %s42 = sshll.u32 [#allocation4], 4
      %s43 = int_to_ptr.vmem [resolvable:$true] %s42
      %48 = dma.hbm_to_vmem [thread:$0]  %s41, 16384, %s43, [#allocation5], 256, 256, 16
    $region17: #{dueling_q_forward.1} parent=1 // pred_fallthru
      _
    // Predicated region
    $region18: #{dueling_q_forward.1} parent=1 // pred_check
      _
    $region19: #{dueling_q_forward.1} parent=1 // pred_check_branch
      %50 = sbr.rel (0) target = $region21
    $region20: #{dueling_q_forward.1} parent=1 // pred_region
      _
    $region21: #{dueling_q_forward.1} parent=1 // pred_fallthru
      _
    // Predicated region
    $region22: #{dueling_q_forward.1} parent=1 // pred_check
      _
    $region23: #{dueling_q_forward.1} parent=1 // pred_check_branch
      %52 = sbr.rel (0) target = $region25
    $region24: #{dueling_q_forward.1} parent=1 // pred_region
      %54 = vsyncadd [#allocation5], 0
      %s55 = sshll.u32 %s5, 4
      %s56 = int_to_ptr.hbm [resolvable:$true] %s55
      %s57 = sshll.u32 [#allocation6], 4
      %s58 = int_to_ptr.vmem [resolvable:$true] %s57
      %63 = dma.hbm_to_vmem [thread:$0]  %s56, 16384, %s58, [#allocation5], 256, 256, 16
    $region25: #{dueling_q_forward.1} parent=1 // pred_fallthru
      _
    // Predicated region
    $region26: #{dueling_q_forward.1} parent=1 // pred_check
      _
    $region27: #{dueling_q_forward.1} parent=1 // pred_check_branch
      %65 = sbr.rel (0) target = $region29
    $region28: #{dueling_q_forward.1} parent=1 // pred_region
      _
    $region29: #{dueling_q_forward.1} parent=1 // pred_fallthru
      _
    // Predicated region
    $region30: #{dueling_q_forward.1} parent=1 // pred_check
      _
    $region31: #{dueling_q_forward.1} parent=1 // pred_check_branch
      %67 = sbr.rel (0) target = $region33
    $region32: #{dueling_q_forward.1} parent=1 // pred_region
      %69 = vsyncadd [#allocation8], 0
      %s70 = sshll.u32 %s7, 4
      %s71 = int_to_ptr.hbm [resolvable:$true] %s70
      %s72 = sshll.u32 [#allocation7], 4
      %s73 = int_to_ptr.vmem [resolvable:$true] %s72
      %78 = dma.hbm_to_vmem [thread:$0]  %s71, 16384, %s73, [#allocation8], 256, 256, 16
    $region33: #{dueling_q_forward.1} parent=1 // pred_fallthru
      _
    // Predicated region
    $region34: #{dueling_q_forward.1} parent=1 // pred_check
      _
    $region35: #{dueling_q_forward.1} parent=1 // pred_check_branch
      %80 = sbr.rel (0) target = $region37
    $region36: #{dueling_q_forward.1} parent=1 // pred_region
      _
    $region37: #{dueling_q_forward.1} parent=1 // pred_fallthru
      _
    // Predicated region
    $region38: #{dueling_q_forward.1} parent=1 // pred_check
      _
    $region39: #{dueling_q_forward.1} parent=1 // pred_check_branch
      %82 = sbr.rel (0) target = $region41
    $region40: #{dueling_q_forward.1} parent=1 // pred_region
      %84 = vsyncadd [#allocation8], 0
      %s85 = sshll.u32 %s9, 4
      %s86 = int_to_ptr.hbm [resolvable:$true] %s85
      %s87 = sshll.u32 [#allocation9], 4
      %s88 = int_to_ptr.vmem [resolvable:$true] %s87
      %93 = dma.hbm_to_vmem [thread:$0]  %s86, 8192, %s88, [#allocation8], 128, 128, 8
    $region41: #{dueling_q_forward.1} parent=1 // pred_fallthru
      _
    // Predicated region
    $region42: #{dueling_q_forward.1} parent=1 // pred_check
      _
    $region43: #{dueling_q_forward.1} parent=1 // pred_check_branch
      %95 = sbr.rel (0) target = $region45
    $region44: #{dueling_q_forward.1} parent=1 // pred_region
      _
    $region45: #{dueling_q_forward.1} parent=1 // pred_fallthru
      _
    // Predicated region
    $region46: #{dueling_q_forward.1} parent=1 // pred_check
      _
    $region47: #{dueling_q_forward.1} parent=1 // pred_check_branch
      %97 = sbr.rel (0) target = $region49
    $region48: #{dueling_q_forward.1} parent=1 // pred_region
      %99 = dma.done [#allocation3], 1024
    $region49: #{dueling_q_forward.1} parent=1 // pred_fallthru
      _
    // Predicated region
    $region50: #{dueling_q_forward.1} parent=1 // pred_check
      _
    $region51: #{dueling_q_forward.1} parent=1 // pred_check_branch
      %101 = sbr.rel (0) target = $region53
    $region52: #{dueling_q_forward.1} parent=1 // pred_region
      %103 = dma.done [#allocation5], 16384
    $region53: #{dueling_q_forward.1} parent=1 // pred_fallthru
      _
    // Predicated region
    $region54: #{dueling_q_forward.1} parent=1 // pred_check
      _
    $region55: #{dueling_q_forward.1} parent=1 // pred_check_branch
      %105 = sbr.rel (0) target = $region57
    $region56: #{dueling_q_forward.1} parent=1 // pred_region
      %107 = dma.done [#allocation5], 16384
    $region57: #{dueling_q_forward.1} parent=1 // pred_fallthru
      _
    // Predicated region
    $region58: #{dueling_q_forward.1} parent=1 // pred_check
      _
    $region59: #{dueling_q_forward.1} parent=1 // pred_check_branch
      %109 = sbr.rel (0) target = $region61
    $region60: #{dueling_q_forward.1} parent=1 // pred_region
      %111 = dma.done [#allocation8], 16384
    $region61: #{dueling_q_forward.1} parent=1 // pred_fallthru
      _
    // Predicated region
    $region62: #{dueling_q_forward.1} parent=1 // pred_check
      _
    $region63: #{dueling_q_forward.1} parent=1 // pred_check_branch
      %113 = sbr.rel (0) target = $region65
    $region64: #{dueling_q_forward.1} parent=1 // pred_region
      %115 = dma.done [#allocation8], 8192
    $region65: #{dueling_q_forward.1} parent=1 // pred_fallthru
      _
    %v117 = vld [vmem:[%s0] sm:$0xff]
    %v118 = vpack.c.bf16 %v117, %v117
    %v119 = vld [vmem:[#allocation2] sm:$0xff]
    %v120 = vld [vmem:[#allocation2 + $0x8] sm:$0xff]
    %v121 = vld [vmem:[#allocation2 + $0x10] sm:$0xff]
    %v122 = vld [vmem:[#allocation2 + $0x18] sm:$0xff]
    %v123 = vld [vmem:[#allocation2 + $0x20] sm:$0xff]
    %v124 = vld [vmem:[#allocation2 + $0x28] sm:$0xff]
    %v125 = vld [vmem:[#allocation2 + $0x30] sm:$0xff]
    %v126 = vld [vmem:[#allocation2 + $0x38] sm:$0xff]
    %v127 = vld [vmem:[%s2] sm:$0xf]
    %v129 = vperm.slane %v127, 0
    %v130 = vperm.slane %v127, 1
    %v131 = vperm.slane %v127, 2
    %v132 = vperm.slane %v127, 3
    %v145 = vunpack.c.l.b16 %v119
    %v146 = vunpack.c.h.b16 %v119
    %v147 = vunpack.c.l.b16 %v120
    %v148 = vunpack.c.h.b16 %v120
    %v149 = vunpack.c.l.b16 %v121
    %v150 = vunpack.c.h.b16 %v121
    %v151 = vunpack.c.l.b16 %v122
    %v152 = vunpack.c.h.b16 %v122
    %v153 = vunpack.c.l.b16 %v123
    %v154 = vunpack.c.h.b16 %v123
    %v155 = vunpack.c.l.b16 %v124
    %v156 = vunpack.c.h.b16 %v124
    %v157 = vunpack.c.l.b16 %v125
    %v158 = vunpack.c.h.b16 %v125
    %v159 = vunpack.c.l.b16 %v126
    %v160 = vunpack.c.h.b16 %v126
    %v161 = vpack.c.b16 %v149, %v145
    %v162 = vpack.c.b16 %v150, %v146
    %v163 = vpack.c.b16 %v151, %v147
    %v164 = vpack.c.b16 %v152, %v148
    %v165 = vpack.c.b16 %v157, %v153
    %v166 = vpack.c.b16 %v158, %v154
    %v167 = vpack.c.b16 %v159, %v155
    %v168 = vpack.c.b16 %v160, %v156
    %vm177 = vcmask 261120
    %v179 = vsel %vm177, %v118, 0
    %181 = vmatpush.bf16.msra.mxu0 0
    %182 = vmatpush.bf16.msra.mxu0 0
    %183 = vmatpush.bf16.msra.mxu0 0
    %184 = vmatpush.bf16.msra.mxu0 0
    %185 = vmatpush.bf16.msra.mxu0 0
    %186 = vmatpush.bf16.msra.mxu0 0
    %187 = vmatpush.bf16.msra.mxu0 %v165
    %188 = vmatpush.bf16.msra.mxu0 %v161
    %189 = vmatmul.bf16.gmra.mxu0 %v179
    %v190 = vpop.f32.mrf.mxu0
    %v191 = vadd.f32 %v129, %v190
    %v192 = vpop.f32.mrf.mxu0
    %193 = vdwg.mxu0
    %194 = vmatpush.bf16.msra.mxu0 0
    %195 = vmatpush.bf16.msra.mxu0 0
    %196 = vmatpush.bf16.msra.mxu0 0
    %197 = vmatpush.bf16.msra.mxu0 0
    %198 = vmatpush.bf16.msra.mxu0 0
    %199 = vmatpush.bf16.msra.mxu0 0
    %200 = vmatpush.bf16.msra.mxu0 %v166
    %201 = vmatpush.bf16.msra.mxu0 %v162
    %202 = vmatmul.bf16.gmra.mxu0 %v179
    %v203 = vpop.f32.mrf.mxu0
    %v204 = vadd.f32 %v130, %v203
    %v205 = vpop.f32.mrf.mxu0
    %206 = vdwg.mxu0
    %207 = vmatpush.bf16.msra.mxu0 0
    %208 = vmatpush.bf16.msra.mxu0 0
    %209 = vmatpush.bf16.msra.mxu0 0
    %210 = vmatpush.bf16.msra.mxu0 0
    %211 = vmatpush.bf16.msra.mxu0 0
    %212 = vmatpush.bf16.msra.mxu0 0
    %213 = vmatpush.bf16.msra.mxu0 %v167
    %214 = vmatpush.bf16.msra.mxu0 %v163
    %215 = vmatmul.bf16.gmra.mxu0 %v179
    %v216 = vpop.f32.mrf.mxu0
    %v217 = vadd.f32 %v131, %v216
    %v218 = vpop.f32.mrf.mxu0
    %219 = vdwg.mxu0
    %220 = vmatpush.bf16.msra.mxu0 0
    %221 = vmatpush.bf16.msra.mxu0 0
    %222 = vmatpush.bf16.msra.mxu0 0
    %223 = vmatpush.bf16.msra.mxu0 0
    %224 = vmatpush.bf16.msra.mxu0 0
    %225 = vmatpush.bf16.msra.mxu0 0
    %226 = vmatpush.bf16.msra.mxu0 %v168
    %227 = vmatpush.bf16.msra.mxu0 %v164
    %228 = vmatmul.bf16.gmra.mxu0 %v179
    %v229 = vpop.f32.mrf.mxu0
    %v230 = vadd.f32 %v132, %v229
    %v231 = vpop.f32.mrf.mxu0
    %232 = vdwg.mxu0
    %v233 = vmax.f32 %v191, 0.0
    %v234 = vmax.f32 %v204, 0.0
    %v235 = vmax.f32 %v217, 0.0
    %v236 = vmax.f32 %v230, 0.0
    %v237 = vpack.c.bf16 %v233, %v233
    %v238 = vpack.c.bf16 %v234, %v234
    %v239 = vpack.c.bf16 %v235, %v235
    %v240 = vpack.c.bf16 %v236, %v236
    %v241 = vld [vmem:[#allocation4] sm:$0xff]
    %v242 = vld [vmem:[#allocation4 + $0x8] sm:$0xff]
    %v243 = vld [vmem:[#allocation4 + $0x10] sm:$0xff]
    %v244 = vld [vmem:[#allocation4 + $0x18] sm:$0xff]
    %v245 = vld [vmem:[#allocation4 + $0x20] sm:$0xff]
    %v246 = vld [vmem:[#allocation4 + $0x28] sm:$0xff]
    %v247 = vld [vmem:[#allocation4 + $0x30] sm:$0xff]
    %v248 = vld [vmem:[#allocation4 + $0x38] sm:$0xff]
    %v249 = vld [vmem:[#allocation4 + $0x40] sm:$0xff]
    %v250 = vld [vmem:[#allocation4 + $0x48] sm:$0xff]
    %v251 = vld [vmem:[#allocation4 + $0x50] sm:$0xff]
    %v252 = vld [vmem:[#allocation4 + $0x58] sm:$0xff]
    %v253 = vld [vmem:[#allocation4 + $0x60] sm:$0xff]
    %v254 = vld [vmem:[#allocation4 + $0x68] sm:$0xff]
    %v255 = vld [vmem:[#allocation4 + $0x70] sm:$0xff]
    %v256 = vld [vmem:[#allocation4 + $0x78] sm:$0xff]
    %v257 = vld [vmem:[#allocation4 + $0x80] sm:$0xff]
    %v258 = vld [vmem:[#allocation4 + $0x88] sm:$0xff]
    %v259 = vld [vmem:[#allocation4 + $0x90] sm:$0xff]
    %v260 = vld [vmem:[#allocation4 + $0x98] sm:$0xff]
    %v261 = vld [vmem:[#allocation4 + $0xa0] sm:$0xff]
    %v262 = vld [vmem:[#allocation4 + $0xa8] sm:$0xff]
    %v263 = vld [vmem:[#allocation4 + $0xb0] sm:$0xff]
    %v264 = vld [vmem:[#allocation4 + $0xb8] sm:$0xff]
    %v265 = vld [vmem:[#allocation4 + $0xc0] sm:$0xff]
    %v266 = vld [vmem:[#allocation4 + $0xc8] sm:$0xff]
    %v267 = vld [vmem:[#allocation4 + $0xd0] sm:$0xff]
    %v268 = vld [vmem:[#allocation4 + $0xd8] sm:$0xff]
    %v269 = vld [vmem:[#allocation4 + $0xe0] sm:$0xff]
    %v270 = vld [vmem:[#allocation4 + $0xe8] sm:$0xff]
    %v271 = vld [vmem:[#allocation4 + $0xf0] sm:$0xff]
    %v272 = vld [vmem:[#allocation4 + $0xf8] sm:$0xff]
    %v273 = vld [vmem:[#allocation4 + $0x100] sm:$0xff]
    %v274 = vld [vmem:[#allocation4 + $0x108] sm:$0xff]
    %v275 = vld [vmem:[#allocation4 + $0x110] sm:$0xff]
    %v276 = vld [vmem:[#allocation4 + $0x118] sm:$0xff]
    %v277 = vld [vmem:[#allocation4 + $0x120] sm:$0xff]
    %v278 = vld [vmem:[#allocation4 + $0x128] sm:$0xff]
    %v279 = vld [vmem:[#allocation4 + $0x130] sm:$0xff]
    %v280 = vld [vmem:[#allocation4 + $0x138] sm:$0xff]
    %v281 = vld [vmem:[#allocation4 + $0x140] sm:$0xff]
    %v282 = vld [vmem:[#allocation4 + $0x148] sm:$0xff]
    %v283 = vld [vmem:[#allocation4 + $0x150] sm:$0xff]
    %v284 = vld [vmem:[#allocation4 + $0x158] sm:$0xff]
    %v285 = vld [vmem:[#allocation4 + $0x160] sm:$0xff]
    %v286 = vld [vmem:[#allocation4 + $0x168] sm:$0xff]
    %v287 = vld [vmem:[#allocation4 + $0x170] sm:$0xff]
    %v288 = vld [vmem:[#allocation4 + $0x178] sm:$0xff]
    %v289 = vld [vmem:[#allocation4 + $0x180] sm:$0xff]
    %v290 = vld [vmem:[#allocation4 + $0x188] sm:$0xff]
    %v291 = vld [vmem:[#allocation4 + $0x190] sm:$0xff]
    %v292 = vld [vmem:[#allocation4 + $0x198] sm:$0xff]
    %v293 = vld [vmem:[#allocation4 + $0x1a0] sm:$0xff]
    %v294 = vld [vmem:[#allocation4 + $0x1a8] sm:$0xff]
    %v295 = vld [vmem:[#allocation4 + $0x1b0] sm:$0xff]
    %v296 = vld [vmem:[#allocation4 + $0x1b8] sm:$0xff]
    %v297 = vld [vmem:[#allocation4 + $0x1c0] sm:$0xff]
    %v298 = vld [vmem:[#allocation4 + $0x1c8] sm:$0xff]
    %v299 = vld [vmem:[#allocation4 + $0x1d0] sm:$0xff]
    %v300 = vld [vmem:[#allocation4 + $0x1d8] sm:$0xff]
    %v301 = vld [vmem:[#allocation4 + $0x1e0] sm:$0xff]
    %v302 = vld [vmem:[#allocation4 + $0x1e8] sm:$0xff]
    %v303 = vld [vmem:[#allocation4 + $0x1f0] sm:$0xff]
    %v304 = vld [vmem:[#allocation4 + $0x1f8] sm:$0xff]
    %v305 = vld [vmem:[#allocation4 + $0x200] sm:$0xff]
    %v306 = vld [vmem:[#allocation4 + $0x208] sm:$0xff]
    %v307 = vld [vmem:[#allocation4 + $0x210] sm:$0xff]
    %v308 = vld [vmem:[#allocation4 + $0x218] sm:$0xff]
    %v309 = vld [vmem:[#allocation4 + $0x220] sm:$0xff]
    %v310 = vld [vmem:[#allocation4 + $0x228] sm:$0xff]
    %v311 = vld [vmem:[#allocation4 + $0x230] sm:$0xff]
    %v312 = vld [vmem:[#allocation4 + $0x238] sm:$0xff]
    %v313 = vld [vmem:[#allocation4 + $0x240] sm:$0xff]
    %v314 = vld [vmem:[#allocation4 + $0x248] sm:$0xff]
    %v315 = vld [vmem:[#allocation4 + $0x250] sm:$0xff]
    %v316 = vld [vmem:[#allocation4 + $0x258] sm:$0xff]
    %v317 = vld [vmem:[#allocation4 + $0x260] sm:$0xff]
    %v318 = vld [vmem:[#allocation4 + $0x268] sm:$0xff]
    %v319 = vld [vmem:[#allocation4 + $0x270] sm:$0xff]
    %v320 = vld [vmem:[#allocation4 + $0x278] sm:$0xff]
    %v321 = vld [vmem:[#allocation4 + $0x280] sm:$0xff]
    %v322 = vld [vmem:[#allocation4 + $0x288] sm:$0xff]
    %v323 = vld [vmem:[#allocation4 + $0x290] sm:$0xff]
    %v324 = vld [vmem:[#allocation4 + $0x298] sm:$0xff]
    %v325 = vld [vmem:[#allocation4 + $0x2a0] sm:$0xff]
    %v326 = vld [vmem:[#allocation4 + $0x2a8] sm:$0xff]
    %v327 = vld [vmem:[#allocation4 + $0x2b0] sm:$0xff]
    %v328 = vld [vmem:[#allocation4 + $0x2b8] sm:$0xff]
    %v329 = vld [vmem:[#allocation4 + $0x2c0] sm:$0xff]
    %v330 = vld [vmem:[#allocation4 + $0x2c8] sm:$0xff]
    %v331 = vld [vmem:[#allocation4 + $0x2d0] sm:$0xff]
    %v332 = vld [vmem:[#allocation4 + $0x2d8] sm:$0xff]
    %v333 = vld [vmem:[#allocation4 + $0x2e0] sm:$0xff]
    %v334 = vld [vmem:[#allocation4 + $0x2e8] sm:$0xff]
    %v335 = vld [vmem:[#allocation4 + $0x2f0] sm:$0xff]
    %v336 = vld [vmem:[#allocation4 + $0x2f8] sm:$0xff]
    %v337 = vld [vmem:[#allocation4 + $0x300] sm:$0xff]
    %v338 = vld [vmem:[#allocation4 + $0x308] sm:$0xff]
    %v339 = vld [vmem:[#allocation4 + $0x310] sm:$0xff]
    %v340 = vld [vmem:[#allocation4 + $0x318] sm:$0xff]
    %v341 = vld [vmem:[#allocation4 + $0x320] sm:$0xff]
    %v342 = vld [vmem:[#allocation4 + $0x328] sm:$0xff]
    %v343 = vld [vmem:[#allocation4 + $0x330] sm:$0xff]
    %v344 = vld [vmem:[#allocation4 + $0x338] sm:$0xff]
    %v345 = vld [vmem:[#allocation4 + $0x340] sm:$0xff]
    %v346 = vld [vmem:[#allocation4 + $0x348] sm:$0xff]
    %v347 = vld [vmem:[#allocation4 + $0x350] sm:$0xff]
    %v348 = vld [vmem:[#allocation4 + $0x358] sm:$0xff]
    %v349 = vld [vmem:[#allocation4 + $0x360] sm:$0xff]
    %v350 = vld [vmem:[#allocation4 + $0x368] sm:$0xff]
    %v351 = vld [vmem:[#allocation4 + $0x370] sm:$0xff]
    %v352 = vld [vmem:[#allocation4 + $0x378] sm:$0xff]
    %v353 = vld [vmem:[#allocation4 + $0x380] sm:$0xff]
    %v354 = vld [vmem:[#allocation4 + $0x388] sm:$0xff]
    %v355 = vld [vmem:[#allocation4 + $0x390] sm:$0xff]
    %v356 = vld [vmem:[#allocation4 + $0x398] sm:$0xff]
    %v357 = vld [vmem:[#allocation4 + $0x3a0] sm:$0xff]
    %v358 = vld [vmem:[#allocation4 + $0x3a8] sm:$0xff]
    %v359 = vld [vmem:[#allocation4 + $0x3b0] sm:$0xff]
    %v360 = vld [vmem:[#allocation4 + $0x3b8] sm:$0xff]
    %v361 = vld [vmem:[#allocation4 + $0x3c0] sm:$0xff]
    %v362 = vld [vmem:[#allocation4 + $0x3c8] sm:$0xff]
    %v363 = vld [vmem:[#allocation4 + $0x3d0] sm:$0xff]
    %v364 = vld [vmem:[#allocation4 + $0x3d8] sm:$0xff]
    %v365 = vld [vmem:[#allocation4 + $0x3e0] sm:$0xff]
    %v366 = vld [vmem:[#allocation4 + $0x3e8] sm:$0xff]
    %v367 = vld [vmem:[#allocation4 + $0x3f0] sm:$0xff]
    %v368 = vld [vmem:[#allocation4 + $0x3f8] sm:$0xff]
    %v369 = vld [vmem:[%s4] sm:$0xf]
    %v371 = vperm.slane %v369, 0
    %v372 = vperm.slane %v369, 1
    %v373 = vperm.slane %v369, 2
    %v374 = vperm.slane %v369, 3
    %v507 = vunpack.c.l.b16 %v241
    %v508 = vunpack.c.h.b16 %v241
    %v509 = vunpack.c.l.b16 %v242
    %v510 = vunpack.c.h.b16 %v242
    %v511 = vunpack.c.l.b16 %v243
    %v512 = vunpack.c.h.b16 %v243
    %v513 = vunpack.c.l.b16 %v244
    %v514 = vunpack.c.h.b16 %v244
    %v515 = vunpack.c.l.b16 %v245
    %v516 = vunpack.c.h.b16 %v245
    %v517 = vunpack.c.l.b16 %v246
    %v518 = vunpack.c.h.b16 %v246
    %v519 = vunpack.c.l.b16 %v247
    %v520 = vunpack.c.h.b16 %v247
    %v521 = vunpack.c.l.b16 %v248
    %v522 = vunpack.c.h.b16 %v248
    %v523 = vunpack.c.l.b16 %v249
    %v524 = vunpack.c.h.b16 %v249
    %v525 = vunpack.c.l.b16 %v250
    %v526 = vunpack.c.h.b16 %v250
    %v527 = vunpack.c.l.b16 %v251
    %v528 = vunpack.c.h.b16 %v251
    %v529 = vunpack.c.l.b16 %v252
    %v530 = vunpack.c.h.b16 %v252
    %v531 = vunpack.c.l.b16 %v253
    %v532 = vunpack.c.h.b16 %v253
    %v533 = vunpack.c.l.b16 %v254
    %v534 = vunpack.c.h.b16 %v254
    %v535 = vunpack.c.l.b16 %v255
    %v536 = vunpack.c.h.b16 %v255
    %v537 = vunpack.c.l.b16 %v256
    %v538 = vunpack.c.h.b16 %v256
    %v539 = vunpack.c.l.b16 %v257
    %v540 = vunpack.c.h.b16 %v257
    %v541 = vunpack.c.l.b16 %v258
    %v542 = vunpack.c.h.b16 %v258
    %v543 = vunpack.c.l.b16 %v259
    %v544 = vunpack.c.h.b16 %v259
    %v545 = vunpack.c.l.b16 %v260
    %v546 = vunpack.c.h.b16 %v260
    %v547 = vunpack.c.l.b16 %v261
    %v548 = vunpack.c.h.b16 %v261
    %v549 = vunpack.c.l.b16 %v262
    %v550 = vunpack.c.h.b16 %v262
    %v551 = vunpack.c.l.b16 %v263
    %v552 = vunpack.c.h.b16 %v263
    %v553 = vunpack.c.l.b16 %v264
    %v554 = vunpack.c.h.b16 %v264
    %v555 = vunpack.c.l.b16 %v265
    %v556 = vunpack.c.h.b16 %v265
    %v557 = vunpack.c.l.b16 %v266
    %v558 = vunpack.c.h.b16 %v266
    %v559 = vunpack.c.l.b16 %v267
    %v560 = vunpack.c.h.b16 %v267
    %v561 = vunpack.c.l.b16 %v268
    %v562 = vunpack.c.h.b16 %v268
    %v563 = vunpack.c.l.b16 %v269
    %v564 = vunpack.c.h.b16 %v269
    %v565 = vunpack.c.l.b16 %v270
    %v566 = vunpack.c.h.b16 %v270
    %v567 = vunpack.c.l.b16 %v271
    %v568 = vunpack.c.h.b16 %v271
    %v569 = vunpack.c.l.b16 %v272
    %v570 = vunpack.c.h.b16 %v272
    %v571 = vunpack.c.l.b16 %v273
    %v572 = vunpack.c.h.b16 %v273
    %v573 = vunpack.c.l.b16 %v274
    %v574 = vunpack.c.h.b16 %v274
    %v575 = vunpack.c.l.b16 %v275
    %v576 = vunpack.c.h.b16 %v275
    %v577 = vunpack.c.l.b16 %v276
    %v578 = vunpack.c.h.b16 %v276
    %v579 = vunpack.c.l.b16 %v277
    %v580 = vunpack.c.h.b16 %v277
    %v581 = vunpack.c.l.b16 %v278
    %v582 = vunpack.c.h.b16 %v278
    %v583 = vunpack.c.l.b16 %v279
    %v584 = vunpack.c.h.b16 %v279
    %v585 = vunpack.c.l.b16 %v280
    %v586 = vunpack.c.h.b16 %v280
    %v587 = vunpack.c.l.b16 %v281
    %v588 = vunpack.c.h.b16 %v281
    %v589 = vunpack.c.l.b16 %v282
    %v590 = vunpack.c.h.b16 %v282
    %v591 = vunpack.c.l.b16 %v283
    %v592 = vunpack.c.h.b16 %v283
    %v593 = vunpack.c.l.b16 %v284
    %v594 = vunpack.c.h.b16 %v284
    %v595 = vunpack.c.l.b16 %v285
    %v596 = vunpack.c.h.b16 %v285
    %v597 = vunpack.c.l.b16 %v286
    %v598 = vunpack.c.h.b16 %v286
    %v599 = vunpack.c.l.b16 %v287
    %v600 = vunpack.c.h.b16 %v287
    %v601 = vunpack.c.l.b16 %v288
    %v602 = vunpack.c.h.b16 %v288
    %v603 = vunpack.c.l.b16 %v289
    %v604 = vunpack.c.h.b16 %v289
    %v605 = vunpack.c.l.b16 %v290
    %v606 = vunpack.c.h.b16 %v290
    %v607 = vunpack.c.l.b16 %v291
    %v608 = vunpack.c.h.b16 %v291
    %v609 = vunpack.c.l.b16 %v292
    %v610 = vunpack.c.h.b16 %v292
    %v611 = vunpack.c.l.b16 %v293
    %v612 = vunpack.c.h.b16 %v293
    %v613 = vunpack.c.l.b16 %v294
    %v614 = vunpack.c.h.b16 %v294
    %v615 = vunpack.c.l.b16 %v295
    %v616 = vunpack.c.h.b16 %v295
    %v617 = vunpack.c.l.b16 %v296
    %v618 = vunpack.c.h.b16 %v296
    %v619 = vunpack.c.l.b16 %v297
    %v620 = vunpack.c.h.b16 %v297
    %v621 = vunpack.c.l.b16 %v298
    %v622 = vunpack.c.h.b16 %v298
    %v623 = vunpack.c.l.b16 %v299
    %v624 = vunpack.c.h.b16 %v299
    %v625 = vunpack.c.l.b16 %v300
    %v626 = vunpack.c.h.b16 %v300
    %v627 = vunpack.c.l.b16 %v301
    %v628 = vunpack.c.h.b16 %v301
    %v629 = vunpack.c.l.b16 %v302
    %v630 = vunpack.c.h.b16 %v302
    %v631 = vunpack.c.l.b16 %v303
    %v632 = vunpack.c.h.b16 %v303
    %v633 = vunpack.c.l.b16 %v304
    %v634 = vunpack.c.h.b16 %v304
    %v635 = vunpack.c.l.b16 %v305
    %v636 = vunpack.c.h.b16 %v305
    %v637 = vunpack.c.l.b16 %v306
    %v638 = vunpack.c.h.b16 %v306
    %v639 = vunpack.c.l.b16 %v307
    %v640 = vunpack.c.h.b16 %v307
    %v641 = vunpack.c.l.b16 %v308
    %v642 = vunpack.c.h.b16 %v308
    %v643 = vunpack.c.l.b16 %v309
    %v644 = vunpack.c.h.b16 %v309
    %v645 = vunpack.c.l.b16 %v310
    %v646 = vunpack.c.h.b16 %v310
    %v647 = vunpack.c.l.b16 %v311
    %v648 = vunpack.c.h.b16 %v311
    %v649 = vunpack.c.l.b16 %v312
    %v650 = vunpack.c.h.b16 %v312
    %v651 = vunpack.c.l.b16 %v313
    %v652 = vunpack.c.h.b16 %v313
    %v653 = vunpack.c.l.b16 %v314
    %v654 = vunpack.c.h.b16 %v314
    %v655 = vunpack.c.l.b16 %v315
    %v656 = vunpack.c.h.b16 %v315
    %v657 = vunpack.c.l.b16 %v316
    %v658 = vunpack.c.h.b16 %v316
    %v659 = vunpack.c.l.b16 %v317
    %v660 = vunpack.c.h.b16 %v317
    %v661 = vunpack.c.l.b16 %v318
    %v662 = vunpack.c.h.b16 %v318
    %v663 = vunpack.c.l.b16 %v319
    %v664 = vunpack.c.h.b16 %v319
    %v665 = vunpack.c.l.b16 %v320
    %v666 = vunpack.c.h.b16 %v320
    %v667 = vunpack.c.l.b16 %v321
    %v668 = vunpack.c.h.b16 %v321
    %v669 = vunpack.c.l.b16 %v322
    %v670 = vunpack.c.h.b16 %v322
    %v671 = vunpack.c.l.b16 %v323
    %v672 = vunpack.c.h.b16 %v323
    %v673 = vunpack.c.l.b16 %v324
    %v674 = vunpack.c.h.b16 %v324
    %v675 = vunpack.c.l.b16 %v325
    %v676 = vunpack.c.h.b16 %v325
    %v677 = vunpack.c.l.b16 %v326
    %v678 = vunpack.c.h.b16 %v326
    %v679 = vunpack.c.l.b16 %v327
    %v680 = vunpack.c.h.b16 %v327
    %v681 = vunpack.c.l.b16 %v328
    %v682 = vunpack.c.h.b16 %v328
    %v683 = vunpack.c.l.b16 %v329
    %v684 = vunpack.c.h.b16 %v329
    %v685 = vunpack.c.l.b16 %v330
    %v686 = vunpack.c.h.b16 %v330
    %v687 = vunpack.c.l.b16 %v331
    %v688 = vunpack.c.h.b16 %v331
    %v689 = vunpack.c.l.b16 %v332
    %v690 = vunpack.c.h.b16 %v332
    %v691 = vunpack.c.l.b16 %v333
    %v692 = vunpack.c.h.b16 %v333
    %v693 = vunpack.c.l.b16 %v334
    %v694 = vunpack.c.h.b16 %v334
    %v695 = vunpack.c.l.b16 %v335
    %v696 = vunpack.c.h.b16 %v335
    %v697 = vunpack.c.l.b16 %v336
    %v698 = vunpack.c.h.b16 %v336
    %v699 = vunpack.c.l.b16 %v337
    %v700 = vunpack.c.h.b16 %v337
    %v701 = vunpack.c.l.b16 %v338
    %v702 = vunpack.c.h.b16 %v338
    %v703 = vunpack.c.l.b16 %v339
    %v704 = vunpack.c.h.b16 %v339
    %v705 = vunpack.c.l.b16 %v340
    %v706 = vunpack.c.h.b16 %v340
    %v707 = vunpack.c.l.b16 %v341
    %v708 = vunpack.c.h.b16 %v341
    %v709 = vunpack.c.l.b16 %v342
    %v710 = vunpack.c.h.b16 %v342
    %v711 = vunpack.c.l.b16 %v343
    %v712 = vunpack.c.h.b16 %v343
    %v713 = vunpack.c.l.b16 %v344
    %v714 = vunpack.c.h.b16 %v344
    %v715 = vunpack.c.l.b16 %v345
    %v716 = vunpack.c.h.b16 %v345
    %v717 = vunpack.c.l.b16 %v346
    %v718 = vunpack.c.h.b16 %v346
    %v719 = vunpack.c.l.b16 %v347
    %v720 = vunpack.c.h.b16 %v347
    %v721 = vunpack.c.l.b16 %v348
    %v722 = vunpack.c.h.b16 %v348
    %v723 = vunpack.c.l.b16 %v349
    %v724 = vunpack.c.h.b16 %v349
    %v725 = vunpack.c.l.b16 %v350
    %v726 = vunpack.c.h.b16 %v350
    %v727 = vunpack.c.l.b16 %v351
    %v728 = vunpack.c.h.b16 %v351
    %v729 = vunpack.c.l.b16 %v352
    %v730 = vunpack.c.h.b16 %v352
    %v731 = vunpack.c.l.b16 %v353
    %v732 = vunpack.c.h.b16 %v353
    %v733 = vunpack.c.l.b16 %v354
    %v734 = vunpack.c.h.b16 %v354
    %v735 = vunpack.c.l.b16 %v355
    %v736 = vunpack.c.h.b16 %v355
    %v737 = vunpack.c.l.b16 %v356
    %v738 = vunpack.c.h.b16 %v356
    %v739 = vunpack.c.l.b16 %v357
    %v740 = vunpack.c.h.b16 %v357
    %v741 = vunpack.c.l.b16 %v358
    %v742 = vunpack.c.h.b16 %v358
    %v743 = vunpack.c.l.b16 %v359
    %v744 = vunpack.c.h.b16 %v359
    %v745 = vunpack.c.l.b16 %v360
    %v746 = vunpack.c.h.b16 %v360
    %v747 = vunpack.c.l.b16 %v361
    %v748 = vunpack.c.h.b16 %v361
    %v749 = vunpack.c.l.b16 %v362
    %v750 = vunpack.c.h.b16 %v362
    %v751 = vunpack.c.l.b16 %v363
    %v752 = vunpack.c.h.b16 %v363
    %v753 = vunpack.c.l.b16 %v364
    %v754 = vunpack.c.h.b16 %v364
    %v755 = vunpack.c.l.b16 %v365
    %v756 = vunpack.c.h.b16 %v365
    %v757 = vunpack.c.l.b16 %v366
    %v758 = vunpack.c.h.b16 %v366
    %v759 = vunpack.c.l.b16 %v367
    %v760 = vunpack.c.h.b16 %v367
    %v761 = vunpack.c.l.b16 %v368
    %v762 = vunpack.c.h.b16 %v368
    %v763 = vpack.c.b16 %v511, %v507
    %v764 = vpack.c.b16 %v512, %v508
    %v765 = vpack.c.b16 %v513, %v509
    %v766 = vpack.c.b16 %v514, %v510
    %v767 = vpack.c.b16 %v519, %v515
    %v768 = vpack.c.b16 %v520, %v516
    %v769 = vpack.c.b16 %v521, %v517
    %v770 = vpack.c.b16 %v522, %v518
    %v771 = vpack.c.b16 %v527, %v523
    %v772 = vpack.c.b16 %v528, %v524
    %v773 = vpack.c.b16 %v529, %v525
    %v774 = vpack.c.b16 %v530, %v526
    %v775 = vpack.c.b16 %v535, %v531
    %v776 = vpack.c.b16 %v536, %v532
    %v777 = vpack.c.b16 %v537, %v533
    %v778 = vpack.c.b16 %v538, %v534
    %v779 = vpack.c.b16 %v543, %v539
    %v780 = vpack.c.b16 %v544, %v540
    %v781 = vpack.c.b16 %v545, %v541
    %v782 = vpack.c.b16 %v546, %v542
    %v783 = vpack.c.b16 %v551, %v547
    %v784 = vpack.c.b16 %v552, %v548
    %v785 = vpack.c.b16 %v553, %v549
    %v786 = vpack.c.b16 %v554, %v550
    %v787 = vpack.c.b16 %v559, %v555
    %v788 = vpack.c.b16 %v560, %v556
    %v789 = vpack.c.b16 %v561, %v557
    %v790 = vpack.c.b16 %v562, %v558
    %v791 = vpack.c.b16 %v567, %v563
    %v792 = vpack.c.b16 %v568, %v564
    %v793 = vpack.c.b16 %v569, %v565
    %v794 = vpack.c.b16 %v570, %v566
    %v795 = vpack.c.b16 %v575, %v571
    %v796 = vpack.c.b16 %v576, %v572
    %v797 = vpack.c.b16 %v577, %v573
    %v798 = vpack.c.b16 %v578, %v574
    %v799 = vpack.c.b16 %v583, %v579
    %v800 = vpack.c.b16 %v584, %v580
    %v801 = vpack.c.b16 %v585, %v581
    %v802 = vpack.c.b16 %v586, %v582
    %v803 = vpack.c.b16 %v591, %v587
    %v804 = vpack.c.b16 %v592, %v588
    %v805 = vpack.c.b16 %v593, %v589
    %v806 = vpack.c.b16 %v594, %v590
    %v807 = vpack.c.b16 %v599, %v595
    %v808 = vpack.c.b16 %v600, %v596
    %v809 = vpack.c.b16 %v601, %v597
    %v810 = vpack.c.b16 %v602, %v598
    %v811 = vpack.c.b16 %v607, %v603
    %v812 = vpack.c.b16 %v608, %v604
    %v813 = vpack.c.b16 %v609, %v605
    %v814 = vpack.c.b16 %v610, %v606
    %v815 = vpack.c.b16 %v615, %v611
    %v816 = vpack.c.b16 %v616, %v612
    %v817 = vpack.c.b16 %v617, %v613
    %v818 = vpack.c.b16 %v618, %v614
    %v819 = vpack.c.b16 %v623, %v619
    %v820 = vpack.c.b16 %v624, %v620
    %v821 = vpack.c.b16 %v625, %v621
    %v822 = vpack.c.b16 %v626, %v622
    %v823 = vpack.c.b16 %v631, %v627
    %v824 = vpack.c.b16 %v632, %v628
    %v825 = vpack.c.b16 %v633, %v629
    %v826 = vpack.c.b16 %v634, %v630
    %v827 = vpack.c.b16 %v639, %v635
    %v828 = vpack.c.b16 %v640, %v636
    %v829 = vpack.c.b16 %v641, %v637
    %v830 = vpack.c.b16 %v642, %v638
    %v831 = vpack.c.b16 %v647, %v643
    %v832 = vpack.c.b16 %v648, %v644
    %v833 = vpack.c.b16 %v649, %v645
    %v834 = vpack.c.b16 %v650, %v646
    %v835 = vpack.c.b16 %v655, %v651
    %v836 = vpack.c.b16 %v656, %v652
    %v837 = vpack.c.b16 %v657, %v653
    %v838 = vpack.c.b16 %v658, %v654
    %v839 = vpack.c.b16 %v663, %v659
    %v840 = vpack.c.b16 %v664, %v660
    %v841 = vpack.c.b16 %v665, %v661
    %v842 = vpack.c.b16 %v666, %v662
    %v843 = vpack.c.b16 %v671, %v667
    %v844 = vpack.c.b16 %v672, %v668
    %v845 = vpack.c.b16 %v673, %v669
    %v846 = vpack.c.b16 %v674, %v670
    %v847 = vpack.c.b16 %v679, %v675
    %v848 = vpack.c.b16 %v680, %v676
    %v849 = vpack.c.b16 %v681, %v677
    %v850 = vpack.c.b16 %v682, %v678
    %v851 = vpack.c.b16 %v687, %v683
    %v852 = vpack.c.b16 %v688, %v684
    %v853 = vpack.c.b16 %v689, %v685
    %v854 = vpack.c.b16 %v690, %v686
    %v855 = vpack.c.b16 %v695, %v691
    %v856 = vpack.c.b16 %v696, %v692
    %v857 = vpack.c.b16 %v697, %v693
    %v858 = vpack.c.b16 %v698, %v694
    %v859 = vpack.c.b16 %v703, %v699
    %v860 = vpack.c.b16 %v704, %v700
    %v861 = vpack.c.b16 %v705, %v701
    %v862 = vpack.c.b16 %v706, %v702
    %v863 = vpack.c.b16 %v711, %v707
    %v864 = vpack.c.b16 %v712, %v708
    %v865 = vpack.c.b16 %v713, %v709
    %v866 = vpack.c.b16 %v714, %v710
    %v867 = vpack.c.b16 %v719, %v715
    %v868 = vpack.c.b16 %v720, %v716
    %v869 = vpack.c.b16 %v721, %v717
    %v870 = vpack.c.b16 %v722, %v718
    %v871 = vpack.c.b16 %v727, %v723
    %v872 = vpack.c.b16 %v728, %v724
    %v873 = vpack.c.b16 %v729, %v725
    %v874 = vpack.c.b16 %v730, %v726
    %v875 = vpack.c.b16 %v735, %v731
    %v876 = vpack.c.b16 %v736, %v732
    %v877 = vpack.c.b16 %v737, %v733
    %v878 = vpack.c.b16 %v738, %v734
    %v879 = vpack.c.b16 %v743, %v739
    %v880 = vpack.c.b16 %v744, %v740
    %v881 = vpack.c.b16 %v745, %v741
    %v882 = vpack.c.b16 %v746, %v742
    %v883 = vpack.c.b16 %v751, %v747
    %v884 = vpack.c.b16 %v752, %v748
    %v885 = vpack.c.b16 %v753, %v749
    %v886 = vpack.c.b16 %v754, %v750
    %v887 = vpack.c.b16 %v759, %v755
    %v888 = vpack.c.b16 %v760, %v756
    %v889 = vpack.c.b16 %v761, %v757
    %v890 = vpack.c.b16 %v762, %v758
    %1019 = vmatpush.bf16.msra.mxu0 %v791
    %1020 = vmatpush.bf16.msra.mxu0 %v787
    %1021 = vmatpush.bf16.msra.mxu0 %v783
    %1022 = vmatpush.bf16.msra.mxu0 %v779
    %1023 = vmatpush.bf16.msra.mxu0 %v775
    %1024 = vmatpush.bf16.msra.mxu0 %v771
    %1025 = vmatpush.bf16.msra.mxu0 %v767
    %1026 = vmatpush.bf16.msra.mxu0 %v763
    %1027 = vmatmul.bf16.gmra.mxu0 %v237
    %v1028 = vpop.f32.mrf.mxu0
    %v1029 = vadd.f32 %v371, %v1028
    %v1030 = vpop.f32.mrf.mxu0
    %1031 = vdwg.mxu0
    %1032 = vmatpush.bf16.msra.mxu0 %v823
    %1033 = vmatpush.bf16.msra.mxu0 %v819
    %1034 = vmatpush.bf16.msra.mxu0 %v815
    %1035 = vmatpush.bf16.msra.mxu0 %v811
    %1036 = vmatpush.bf16.msra.mxu0 %v807
    %1037 = vmatpush.bf16.msra.mxu0 %v803
    %1038 = vmatpush.bf16.msra.mxu0 %v799
    %1039 = vmatpush.bf16.msra.mxu0 %v795
    %1040 = vmatmul.bf16.gmra.mxu0 %v238
    %v1041 = vpop.f32.mrf.mxu0
    %v1042 = vadd.f32 %v1029, %v1041
    %v1043 = vpop.f32.mrf.mxu0
    %1044 = vdwg.mxu0
    %1045 = vmatpush.bf16.msra.mxu0 %v855
    %1046 = vmatpush.bf16.msra.mxu0 %v851
    %1047 = vmatpush.bf16.msra.mxu0 %v847
    %1048 = vmatpush.bf16.msra.mxu0 %v843
    %1049 = vmatpush.bf16.msra.mxu0 %v839
    %1050 = vmatpush.bf16.msra.mxu0 %v835
    %1051 = vmatpush.bf16.msra.mxu0 %v831
    %1052 = vmatpush.bf16.msra.mxu0 %v827
    %1053 = vmatmul.bf16.gmra.mxu0 %v239
    %v1054 = vpop.f32.mrf.mxu0
    %v1055 = vadd.f32 %v1042, %v1054
    %v1056 = vpop.f32.mrf.mxu0
    %1057 = vdwg.mxu0
    %1058 = vmatpush.bf16.msra.mxu0 %v887
    %1059 = vmatpush.bf16.msra.mxu0 %v883
    %1060 = vmatpush.bf16.msra.mxu0 %v879
    %1061 = vmatpush.bf16.msra.mxu0 %v875
    %1062 = vmatpush.bf16.msra.mxu0 %v871
    %1063 = vmatpush.bf16.msra.mxu0 %v867
    %1064 = vmatpush.bf16.msra.mxu0 %v863
    %1065 = vmatpush.bf16.msra.mxu0 %v859
    %1066 = vmatmul.bf16.gmra.mxu0 %v240
    %v1067 = vpop.f32.mrf.mxu0
    %v1068 = vadd.f32 %v1055, %v1067
    %v1069 = vpop.f32.mrf.mxu0
    %1070 = vdwg.mxu0
    %1071 = vmatpush.bf16.msra.mxu0 %v792
    %1072 = vmatpush.bf16.msra.mxu0 %v788
    %1073 = vmatpush.bf16.msra.mxu0 %v784
    %1074 = vmatpush.bf16.msra.mxu0 %v780
    %1075 = vmatpush.bf16.msra.mxu0 %v776
    %1076 = vmatpush.bf16.msra.mxu0 %v772
    %1077 = vmatpush.bf16.msra.mxu0 %v768
    %1078 = vmatpush.bf16.msra.mxu0 %v764
    %1079 = vmatmul.bf16.gmra.mxu0 %v237
    %v1080 = vpop.f32.mrf.mxu0
    %v1081 = vadd.f32 %v372, %v1080
    %v1082 = vpop.f32.mrf.mxu0
    %1083 = vdwg.mxu0
    %1084 = vmatpush.bf16.msra.mxu0 %v824
    %1085 = vmatpush.bf16.msra.mxu0 %v820
    %1086 = vmatpush.bf16.msra.mxu0 %v816
    %1087 = vmatpush.bf16.msra.mxu0 %v812
    %1088 = vmatpush.bf16.msra.mxu0 %v808
    %1089 = vmatpush.bf16.msra.mxu0 %v804
    %1090 = vmatpush.bf16.msra.mxu0 %v800
    %1091 = vmatpush.bf16.msra.mxu0 %v796
    %1092 = vmatmul.bf16.gmra.mxu0 %v238
    %v1093 = vpop.f32.mrf.mxu0
    %v1094 = vadd.f32 %v1081, %v1093
    %v1095 = vpop.f32.mrf.mxu0
    %1096 = vdwg.mxu0
    %1097 = vmatpush.bf16.msra.mxu0 %v856
    %1098 = vmatpush.bf16.msra.mxu0 %v852
    %1099 = vmatpush.bf16.msra.mxu0 %v848
    %1100 = vmatpush.bf16.msra.mxu0 %v844
    %1101 = vmatpush.bf16.msra.mxu0 %v840
    %1102 = vmatpush.bf16.msra.mxu0 %v836
    %1103 = vmatpush.bf16.msra.mxu0 %v832
    %1104 = vmatpush.bf16.msra.mxu0 %v828
    %1105 = vmatmul.bf16.gmra.mxu0 %v239
    %v1106 = vpop.f32.mrf.mxu0
    %v1107 = vadd.f32 %v1094, %v1106
    %v1108 = vpop.f32.mrf.mxu0
    %1109 = vdwg.mxu0
    %1110 = vmatpush.bf16.msra.mxu0 %v888
    %1111 = vmatpush.bf16.msra.mxu0 %v884
    %1112 = vmatpush.bf16.msra.mxu0 %v880
    %1113 = vmatpush.bf16.msra.mxu0 %v876
    %1114 = vmatpush.bf16.msra.mxu0 %v872
    %1115 = vmatpush.bf16.msra.mxu0 %v868
    %1116 = vmatpush.bf16.msra.mxu0 %v864
    %1117 = vmatpush.bf16.msra.mxu0 %v860
    %1118 = vmatmul.bf16.gmra.mxu0 %v240
    %v1119 = vpop.f32.mrf.mxu0
    %v1120 = vadd.f32 %v1107, %v1119
    %v1121 = vpop.f32.mrf.mxu0
    %1122 = vdwg.mxu0
    %1123 = vmatpush.bf16.msra.mxu0 %v793
    %1124 = vmatpush.bf16.msra.mxu0 %v789
    %1125 = vmatpush.bf16.msra.mxu0 %v785
    %1126 = vmatpush.bf16.msra.mxu0 %v781
    %1127 = vmatpush.bf16.msra.mxu0 %v777
    %1128 = vmatpush.bf16.msra.mxu0 %v773
    %1129 = vmatpush.bf16.msra.mxu0 %v769
    %1130 = vmatpush.bf16.msra.mxu0 %v765
    %1131 = vmatmul.bf16.gmra.mxu0 %v237
    %v1132 = vpop.f32.mrf.mxu0
    %v1133 = vadd.f32 %v373, %v1132
    %v1134 = vpop.f32.mrf.mxu0
    %1135 = vdwg.mxu0
    %1136 = vmatpush.bf16.msra.mxu0 %v825
    %1137 = vmatpush.bf16.msra.mxu0 %v821
    %1138 = vmatpush.bf16.msra.mxu0 %v817
    %1139 = vmatpush.bf16.msra.mxu0 %v813
    %1140 = vmatpush.bf16.msra.mxu0 %v809
    %1141 = vmatpush.bf16.msra.mxu0 %v805
    %1142 = vmatpush.bf16.msra.mxu0 %v801
    %1143 = vmatpush.bf16.msra.mxu0 %v797
    %1144 = vmatmul.bf16.gmra.mxu0 %v238
    %v1145 = vpop.f32.mrf.mxu0
    %v1146 = vadd.f32 %v1133, %v1145
    %v1147 = vpop.f32.mrf.mxu0
    %1148 = vdwg.mxu0
    %1149 = vmatpush.bf16.msra.mxu0 %v857
    %1150 = vmatpush.bf16.msra.mxu0 %v853
    %1151 = vmatpush.bf16.msra.mxu0 %v849
    %1152 = vmatpush.bf16.msra.mxu0 %v845
    %1153 = vmatpush.bf16.msra.mxu0 %v841
    %1154 = vmatpush.bf16.msra.mxu0 %v837
    %1155 = vmatpush.bf16.msra.mxu0 %v833
    %1156 = vmatpush.bf16.msra.mxu0 %v829
    %1157 = vmatmul.bf16.gmra.mxu0 %v239
    %v1158 = vpop.f32.mrf.mxu0
    %v1159 = vadd.f32 %v1146, %v1158
    %v1160 = vpop.f32.mrf.mxu0
    %1161 = vdwg.mxu0
    %1162 = vmatpush.bf16.msra.mxu0 %v889
    %1163 = vmatpush.bf16.msra.mxu0 %v885
    %1164 = vmatpush.bf16.msra.mxu0 %v881
    %1165 = vmatpush.bf16.msra.mxu0 %v877
    %1166 = vmatpush.bf16.msra.mxu0 %v873
    %1167 = vmatpush.bf16.msra.mxu0 %v869
    %1168 = vmatpush.bf16.msra.mxu0 %v865
    %1169 = vmatpush.bf16.msra.mxu0 %v861
    %1170 = vmatmul.bf16.gmra.mxu0 %v240
    %v1171 = vpop.f32.mrf.mxu0
    %v1172 = vadd.f32 %v1159, %v1171
    %v1173 = vpop.f32.mrf.mxu0
    %1174 = vdwg.mxu0
    %1175 = vmatpush.bf16.msra.mxu0 %v794
    %1176 = vmatpush.bf16.msra.mxu0 %v790
    %1177 = vmatpush.bf16.msra.mxu0 %v786
    %1178 = vmatpush.bf16.msra.mxu0 %v782
    %1179 = vmatpush.bf16.msra.mxu0 %v778
    %1180 = vmatpush.bf16.msra.mxu0 %v774
    %1181 = vmatpush.bf16.msra.mxu0 %v770
    %1182 = vmatpush.bf16.msra.mxu0 %v766
    %1183 = vmatmul.bf16.gmra.mxu0 %v237
    %v1184 = vpop.f32.mrf.mxu0
    %v1185 = vadd.f32 %v374, %v1184
    %v1186 = vpop.f32.mrf.mxu0
    %1187 = vdwg.mxu0
    %1188 = vmatpush.bf16.msra.mxu0 %v826
    %1189 = vmatpush.bf16.msra.mxu0 %v822
    %1190 = vmatpush.bf16.msra.mxu0 %v818
    %1191 = vmatpush.bf16.msra.mxu0 %v814
    %1192 = vmatpush.bf16.msra.mxu0 %v810
    %1193 = vmatpush.bf16.msra.mxu0 %v806
    %1194 = vmatpush.bf16.msra.mxu0 %v802
    %1195 = vmatpush.bf16.msra.mxu0 %v798
    %1196 = vmatmul.bf16.gmra.mxu0 %v238
    %v1197 = vpop.f32.mrf.mxu0
    %v1198 = vadd.f32 %v1185, %v1197
    %v1199 = vpop.f32.mrf.mxu0
    %1200 = vdwg.mxu0
    %1201 = vmatpush.bf16.msra.mxu0 %v858
    %1202 = vmatpush.bf16.msra.mxu0 %v854
    %1203 = vmatpush.bf16.msra.mxu0 %v850
    %1204 = vmatpush.bf16.msra.mxu0 %v846
    %1205 = vmatpush.bf16.msra.mxu0 %v842
    %1206 = vmatpush.bf16.msra.mxu0 %v838
    %1207 = vmatpush.bf16.msra.mxu0 %v834
    %1208 = vmatpush.bf16.msra.mxu0 %v830
    %1209 = vmatmul.bf16.gmra.mxu0 %v239
    %v1210 = vpop.f32.mrf.mxu0
    %v1211 = vadd.f32 %v1198, %v1210
    %v1212 = vpop.f32.mrf.mxu0
    %1213 = vdwg.mxu0
    %1214 = vmatpush.bf16.msra.mxu0 %v890
    %1215 = vmatpush.bf16.msra.mxu0 %v886
    %1216 = vmatpush.bf16.msra.mxu0 %v882
    %1217 = vmatpush.bf16.msra.mxu0 %v878
    %1218 = vmatpush.bf16.msra.mxu0 %v874
    %1219 = vmatpush.bf16.msra.mxu0 %v870
    %1220 = vmatpush.bf16.msra.mxu0 %v866
    %1221 = vmatpush.bf16.msra.mxu0 %v862
    %1222 = vmatmul.bf16.gmra.mxu0 %v240
    %v1223 = vpop.f32.mrf.mxu0
    %v1224 = vadd.f32 %v1211, %v1223
    %v1225 = vpop.f32.mrf.mxu0
    %1226 = vdwg.mxu0
    %v1227 = vmax.f32 %v1068, 0.0
    %v1228 = vmax.f32 %v1120, 0.0
    %v1229 = vmax.f32 %v1172, 0.0
    %v1230 = vmax.f32 %v1224, 0.0
    %v1231 = vpack.c.bf16 %v1227, %v1227
    %v1232 = vpack.c.bf16 %v1228, %v1228
    %v1233 = vpack.c.bf16 %v1229, %v1229
    %v1234 = vpack.c.bf16 %v1230, %v1230
    %v1235 = vld [vmem:[#allocation6] sm:$0xff]
    %v1236 = vld [vmem:[#allocation6 + $0x8] sm:$0xff]
    %v1237 = vld [vmem:[#allocation6 + $0x10] sm:$0xff]
    %v1238 = vld [vmem:[#allocation6 + $0x18] sm:$0xff]
    %v1239 = vld [vmem:[#allocation6 + $0x20] sm:$0xff]
    %v1240 = vld [vmem:[#allocation6 + $0x28] sm:$0xff]
    %v1241 = vld [vmem:[#allocation6 + $0x30] sm:$0xff]
    %v1242 = vld [vmem:[#allocation6 + $0x38] sm:$0xff]
    %v1243 = vld [vmem:[#allocation6 + $0x40] sm:$0xff]
    %v1244 = vld [vmem:[#allocation6 + $0x48] sm:$0xff]
    %v1245 = vld [vmem:[#allocation6 + $0x50] sm:$0xff]
    %v1246 = vld [vmem:[#allocation6 + $0x58] sm:$0xff]
    %v1247 = vld [vmem:[#allocation6 + $0x60] sm:$0xff]
    %v1248 = vld [vmem:[#allocation6 + $0x68] sm:$0xff]
    %v1249 = vld [vmem:[#allocation6 + $0x70] sm:$0xff]
    %v1250 = vld [vmem:[#allocation6 + $0x78] sm:$0xff]
    %v1251 = vld [vmem:[#allocation6 + $0x80] sm:$0xff]
    %v1252 = vld [vmem:[#allocation6 + $0x88] sm:$0xff]
    %v1253 = vld [vmem:[#allocation6 + $0x90] sm:$0xff]
    %v1254 = vld [vmem:[#allocation6 + $0x98] sm:$0xff]
    %v1255 = vld [vmem:[#allocation6 + $0xa0] sm:$0xff]
    %v1256 = vld [vmem:[#allocation6 + $0xa8] sm:$0xff]
    %v1257 = vld [vmem:[#allocation6 + $0xb0] sm:$0xff]
    %v1258 = vld [vmem:[#allocation6 + $0xb8] sm:$0xff]
    %v1259 = vld [vmem:[#allocation6 + $0xc0] sm:$0xff]
    %v1260 = vld [vmem:[#allocation6 + $0xc8] sm:$0xff]
    %v1261 = vld [vmem:[#allocation6 + $0xd0] sm:$0xff]
    %v1262 = vld [vmem:[#allocation6 + $0xd8] sm:$0xff]
    %v1263 = vld [vmem:[#allocation6 + $0xe0] sm:$0xff]
    %v1264 = vld [vmem:[#allocation6 + $0xe8] sm:$0xff]
    %v1265 = vld [vmem:[#allocation6 + $0xf0] sm:$0xff]
    %v1266 = vld [vmem:[#allocation6 + $0xf8] sm:$0xff]
    %v1267 = vld [vmem:[#allocation6 + $0x100] sm:$0xff]
    %v1268 = vld [vmem:[#allocation6 + $0x108] sm:$0xff]
    %v1269 = vld [vmem:[#allocation6 + $0x110] sm:$0xff]
    %v1270 = vld [vmem:[#allocation6 + $0x118] sm:$0xff]
    %v1271 = vld [vmem:[#allocation6 + $0x120] sm:$0xff]
    %v1272 = vld [vmem:[#allocation6 + $0x128] sm:$0xff]
    %v1273 = vld [vmem:[#allocation6 + $0x130] sm:$0xff]
    %v1274 = vld [vmem:[#allocation6 + $0x138] sm:$0xff]
    %v1275 = vld [vmem:[#allocation6 + $0x140] sm:$0xff]
    %v1276 = vld [vmem:[#allocation6 + $0x148] sm:$0xff]
    %v1277 = vld [vmem:[#allocation6 + $0x150] sm:$0xff]
    %v1278 = vld [vmem:[#allocation6 + $0x158] sm:$0xff]
    %v1279 = vld [vmem:[#allocation6 + $0x160] sm:$0xff]
    %v1280 = vld [vmem:[#allocation6 + $0x168] sm:$0xff]
    %v1281 = vld [vmem:[#allocation6 + $0x170] sm:$0xff]
    %v1282 = vld [vmem:[#allocation6 + $0x178] sm:$0xff]
    %v1283 = vld [vmem:[#allocation6 + $0x180] sm:$0xff]
    %v1284 = vld [vmem:[#allocation6 + $0x188] sm:$0xff]
    %v1285 = vld [vmem:[#allocation6 + $0x190] sm:$0xff]
    %v1286 = vld [vmem:[#allocation6 + $0x198] sm:$0xff]
    %v1287 = vld [vmem:[#allocation6 + $0x1a0] sm:$0xff]
    %v1288 = vld [vmem:[#allocation6 + $0x1a8] sm:$0xff]
    %v1289 = vld [vmem:[#allocation6 + $0x1b0] sm:$0xff]
    %v1290 = vld [vmem:[#allocation6 + $0x1b8] sm:$0xff]
    %v1291 = vld [vmem:[#allocation6 + $0x1c0] sm:$0xff]
    %v1292 = vld [vmem:[#allocation6 + $0x1c8] sm:$0xff]
    %v1293 = vld [vmem:[#allocation6 + $0x1d0] sm:$0xff]
    %v1294 = vld [vmem:[#allocation6 + $0x1d8] sm:$0xff]
    %v1295 = vld [vmem:[#allocation6 + $0x1e0] sm:$0xff]
    %v1296 = vld [vmem:[#allocation6 + $0x1e8] sm:$0xff]
    %v1297 = vld [vmem:[#allocation6 + $0x1f0] sm:$0xff]
    %v1298 = vld [vmem:[#allocation6 + $0x1f8] sm:$0xff]
    %v1299 = vld [vmem:[#allocation6 + $0x200] sm:$0xff]
    %v1300 = vld [vmem:[#allocation6 + $0x208] sm:$0xff]
    %v1301 = vld [vmem:[#allocation6 + $0x210] sm:$0xff]
    %v1302 = vld [vmem:[#allocation6 + $0x218] sm:$0xff]
    %v1303 = vld [vmem:[#allocation6 + $0x220] sm:$0xff]
    %v1304 = vld [vmem:[#allocation6 + $0x228] sm:$0xff]
    %v1305 = vld [vmem:[#allocation6 + $0x230] sm:$0xff]
    %v1306 = vld [vmem:[#allocation6 + $0x238] sm:$0xff]
    %v1307 = vld [vmem:[#allocation6 + $0x240] sm:$0xff]
    %v1308 = vld [vmem:[#allocation6 + $0x248] sm:$0xff]
    %v1309 = vld [vmem:[#allocation6 + $0x250] sm:$0xff]
    %v1310 = vld [vmem:[#allocation6 + $0x258] sm:$0xff]
    %v1311 = vld [vmem:[#allocation6 + $0x260] sm:$0xff]
    %v1312 = vld [vmem:[#allocation6 + $0x268] sm:$0xff]
    %v1313 = vld [vmem:[#allocation6 + $0x270] sm:$0xff]
    %v1314 = vld [vmem:[#allocation6 + $0x278] sm:$0xff]
    %v1315 = vld [vmem:[#allocation6 + $0x280] sm:$0xff]
    %v1316 = vld [vmem:[#allocation6 + $0x288] sm:$0xff]
    %v1317 = vld [vmem:[#allocation6 + $0x290] sm:$0xff]
    %v1318 = vld [vmem:[#allocation6 + $0x298] sm:$0xff]
    %v1319 = vld [vmem:[#allocation6 + $0x2a0] sm:$0xff]
    %v1320 = vld [vmem:[#allocation6 + $0x2a8] sm:$0xff]
    %v1321 = vld [vmem:[#allocation6 + $0x2b0] sm:$0xff]
    %v1322 = vld [vmem:[#allocation6 + $0x2b8] sm:$0xff]
    %v1323 = vld [vmem:[#allocation6 + $0x2c0] sm:$0xff]
    %v1324 = vld [vmem:[#allocation6 + $0x2c8] sm:$0xff]
    %v1325 = vld [vmem:[#allocation6 + $0x2d0] sm:$0xff]
    %v1326 = vld [vmem:[#allocation6 + $0x2d8] sm:$0xff]
    %v1327 = vld [vmem:[#allocation6 + $0x2e0] sm:$0xff]
    %v1328 = vld [vmem:[#allocation6 + $0x2e8] sm:$0xff]
    %v1329 = vld [vmem:[#allocation6 + $0x2f0] sm:$0xff]
    %v1330 = vld [vmem:[#allocation6 + $0x2f8] sm:$0xff]
    %v1331 = vld [vmem:[#allocation6 + $0x300] sm:$0xff]
    %v1332 = vld [vmem:[#allocation6 + $0x308] sm:$0xff]
    %v1333 = vld [vmem:[#allocation6 + $0x310] sm:$0xff]
    %v1334 = vld [vmem:[#allocation6 + $0x318] sm:$0xff]
    %v1335 = vld [vmem:[#allocation6 + $0x320] sm:$0xff]
    %v1336 = vld [vmem:[#allocation6 + $0x328] sm:$0xff]
    %v1337 = vld [vmem:[#allocation6 + $0x330] sm:$0xff]
    %v1338 = vld [vmem:[#allocation6 + $0x338] sm:$0xff]
    %v1339 = vld [vmem:[#allocation6 + $0x340] sm:$0xff]
    %v1340 = vld [vmem:[#allocation6 + $0x348] sm:$0xff]
    %v1341 = vld [vmem:[#allocation6 + $0x350] sm:$0xff]
    %v1342 = vld [vmem:[#allocation6 + $0x358] sm:$0xff]
    %v1343 = vld [vmem:[#allocation6 + $0x360] sm:$0xff]
    %v1344 = vld [vmem:[#allocation6 + $0x368] sm:$0xff]
    %v1345 = vld [vmem:[#allocation6 + $0x370] sm:$0xff]
    %v1346 = vld [vmem:[#allocation6 + $0x378] sm:$0xff]
    %v1347 = vld [vmem:[#allocation6 + $0x380] sm:$0xff]
    %v1348 = vld [vmem:[#allocation6 + $0x388] sm:$0xff]
    %v1349 = vld [vmem:[#allocation6 + $0x390] sm:$0xff]
    %v1350 = vld [vmem:[#allocation6 + $0x398] sm:$0xff]
    %v1351 = vld [vmem:[#allocation6 + $0x3a0] sm:$0xff]
    %v1352 = vld [vmem:[#allocation6 + $0x3a8] sm:$0xff]
    %v1353 = vld [vmem:[#allocation6 + $0x3b0] sm:$0xff]
    %v1354 = vld [vmem:[#allocation6 + $0x3b8] sm:$0xff]
    %v1355 = vld [vmem:[#allocation6 + $0x3c0] sm:$0xff]
    %v1356 = vld [vmem:[#allocation6 + $0x3c8] sm:$0xff]
    %v1357 = vld [vmem:[#allocation6 + $0x3d0] sm:$0xff]
    %v1358 = vld [vmem:[#allocation6 + $0x3d8] sm:$0xff]
    %v1359 = vld [vmem:[#allocation6 + $0x3e0] sm:$0xff]
    %v1360 = vld [vmem:[#allocation6 + $0x3e8] sm:$0xff]
    %v1361 = vld [vmem:[#allocation6 + $0x3f0] sm:$0xff]
    %v1362 = vld [vmem:[#allocation6 + $0x3f8] sm:$0xff]
    %v1363 = vld [vmem:[%s6] sm:$0xf]
    %v1365 = vperm.slane %v1363, 0
    %v1366 = vperm.slane %v1363, 1
    %v1367 = vperm.slane %v1363, 2
    %v1368 = vperm.slane %v1363, 3
    %v1501 = vunpack.c.l.b16 %v1235
    %v1502 = vunpack.c.h.b16 %v1235
    %v1503 = vunpack.c.l.b16 %v1236
    %v1504 = vunpack.c.h.b16 %v1236
    %v1505 = vunpack.c.l.b16 %v1237
    %v1506 = vunpack.c.h.b16 %v1237
    %v1507 = vunpack.c.l.b16 %v1238
    %v1508 = vunpack.c.h.b16 %v1238
    %v1509 = vunpack.c.l.b16 %v1239
    %v1510 = vunpack.c.h.b16 %v1239
    %v1511 = vunpack.c.l.b16 %v1240
    %v1512 = vunpack.c.h.b16 %v1240
    %v1513 = vunpack.c.l.b16 %v1241
    %v1514 = vunpack.c.h.b16 %v1241
    %v1515 = vunpack.c.l.b16 %v1242
    %v1516 = vunpack.c.h.b16 %v1242
    %v1517 = vunpack.c.l.b16 %v1243
    %v1518 = vunpack.c.h.b16 %v1243
    %v1519 = vunpack.c.l.b16 %v1244
    %v1520 = vunpack.c.h.b16 %v1244
    %v1521 = vunpack.c.l.b16 %v1245
    %v1522 = vunpack.c.h.b16 %v1245
    %v1523 = vunpack.c.l.b16 %v1246
    %v1524 = vunpack.c.h.b16 %v1246
    %v1525 = vunpack.c.l.b16 %v1247
    %v1526 = vunpack.c.h.b16 %v1247
    %v1527 = vunpack.c.l.b16 %v1248
    %v1528 = vunpack.c.h.b16 %v1248
    %v1529 = vunpack.c.l.b16 %v1249
    %v1530 = vunpack.c.h.b16 %v1249
    %v1531 = vunpack.c.l.b16 %v1250
    %v1532 = vunpack.c.h.b16 %v1250
    %v1533 = vunpack.c.l.b16 %v1251
    %v1534 = vunpack.c.h.b16 %v1251
    %v1535 = vunpack.c.l.b16 %v1252
    %v1536 = vunpack.c.h.b16 %v1252
    %v1537 = vunpack.c.l.b16 %v1253
    %v1538 = vunpack.c.h.b16 %v1253
    %v1539 = vunpack.c.l.b16 %v1254
    %v1540 = vunpack.c.h.b16 %v1254
    %v1541 = vunpack.c.l.b16 %v1255
    %v1542 = vunpack.c.h.b16 %v1255
    %v1543 = vunpack.c.l.b16 %v1256
    %v1544 = vunpack.c.h.b16 %v1256
    %v1545 = vunpack.c.l.b16 %v1257
    %v1546 = vunpack.c.h.b16 %v1257
    %v1547 = vunpack.c.l.b16 %v1258
    %v1548 = vunpack.c.h.b16 %v1258
    %v1549 = vunpack.c.l.b16 %v1259
    %v1550 = vunpack.c.h.b16 %v1259
    %v1551 = vunpack.c.l.b16 %v1260
    %v1552 = vunpack.c.h.b16 %v1260
    %v1553 = vunpack.c.l.b16 %v1261
    %v1554 = vunpack.c.h.b16 %v1261
    %v1555 = vunpack.c.l.b16 %v1262
    %v1556 = vunpack.c.h.b16 %v1262
    %v1557 = vunpack.c.l.b16 %v1263
    %v1558 = vunpack.c.h.b16 %v1263
    %v1559 = vunpack.c.l.b16 %v1264
    %v1560 = vunpack.c.h.b16 %v1264
    %v1561 = vunpack.c.l.b16 %v1265
    %v1562 = vunpack.c.h.b16 %v1265
    %v1563 = vunpack.c.l.b16 %v1266
    %v1564 = vunpack.c.h.b16 %v1266
    %v1565 = vunpack.c.l.b16 %v1267
    %v1566 = vunpack.c.h.b16 %v1267
    %v1567 = vunpack.c.l.b16 %v1268
    %v1568 = vunpack.c.h.b16 %v1268
    %v1569 = vunpack.c.l.b16 %v1269
    %v1570 = vunpack.c.h.b16 %v1269
    %v1571 = vunpack.c.l.b16 %v1270
    %v1572 = vunpack.c.h.b16 %v1270
    %v1573 = vunpack.c.l.b16 %v1271
    %v1574 = vunpack.c.h.b16 %v1271
    %v1575 = vunpack.c.l.b16 %v1272
    %v1576 = vunpack.c.h.b16 %v1272
    %v1577 = vunpack.c.l.b16 %v1273
    %v1578 = vunpack.c.h.b16 %v1273
    %v1579 = vunpack.c.l.b16 %v1274
    %v1580 = vunpack.c.h.b16 %v1274
    %v1581 = vunpack.c.l.b16 %v1275
    %v1582 = vunpack.c.h.b16 %v1275
    %v1583 = vunpack.c.l.b16 %v1276
    %v1584 = vunpack.c.h.b16 %v1276
    %v1585 = vunpack.c.l.b16 %v1277
    %v1586 = vunpack.c.h.b16 %v1277
    %v1587 = vunpack.c.l.b16 %v1278
    %v1588 = vunpack.c.h.b16 %v1278
    %v1589 = vunpack.c.l.b16 %v1279
    %v1590 = vunpack.c.h.b16 %v1279
    %v1591 = vunpack.c.l.b16 %v1280
    %v1592 = vunpack.c.h.b16 %v1280
    %v1593 = vunpack.c.l.b16 %v1281
    %v1594 = vunpack.c.h.b16 %v1281
    %v1595 = vunpack.c.l.b16 %v1282
    %v1596 = vunpack.c.h.b16 %v1282
    %v1597 = vunpack.c.l.b16 %v1283
    %v1598 = vunpack.c.h.b16 %v1283
    %v1599 = vunpack.c.l.b16 %v1284
    %v1600 = vunpack.c.h.b16 %v1284
    %v1601 = vunpack.c.l.b16 %v1285
    %v1602 = vunpack.c.h.b16 %v1285
    %v1603 = vunpack.c.l.b16 %v1286
    %v1604 = vunpack.c.h.b16 %v1286
    %v1605 = vunpack.c.l.b16 %v1287
    %v1606 = vunpack.c.h.b16 %v1287
    %v1607 = vunpack.c.l.b16 %v1288
    %v1608 = vunpack.c.h.b16 %v1288
    %v1609 = vunpack.c.l.b16 %v1289
    %v1610 = vunpack.c.h.b16 %v1289
    %v1611 = vunpack.c.l.b16 %v1290
    %v1612 = vunpack.c.h.b16 %v1290
    %v1613 = vunpack.c.l.b16 %v1291
    %v1614 = vunpack.c.h.b16 %v1291
    %v1615 = vunpack.c.l.b16 %v1292
    %v1616 = vunpack.c.h.b16 %v1292
    %v1617 = vunpack.c.l.b16 %v1293
    %v1618 = vunpack.c.h.b16 %v1293
    %v1619 = vunpack.c.l.b16 %v1294
    %v1620 = vunpack.c.h.b16 %v1294
    %v1621 = vunpack.c.l.b16 %v1295
    %v1622 = vunpack.c.h.b16 %v1295
    %v1623 = vunpack.c.l.b16 %v1296
    %v1624 = vunpack.c.h.b16 %v1296
    %v1625 = vunpack.c.l.b16 %v1297
    %v1626 = vunpack.c.h.b16 %v1297
    %v1627 = vunpack.c.l.b16 %v1298
    %v1628 = vunpack.c.h.b16 %v1298
    %v1629 = vunpack.c.l.b16 %v1299
    %v1630 = vunpack.c.h.b16 %v1299
    %v1631 = vunpack.c.l.b16 %v1300
    %v1632 = vunpack.c.h.b16 %v1300
    %v1633 = vunpack.c.l.b16 %v1301
    %v1634 = vunpack.c.h.b16 %v1301
    %v1635 = vunpack.c.l.b16 %v1302
    %v1636 = vunpack.c.h.b16 %v1302
    %v1637 = vunpack.c.l.b16 %v1303
    %v1638 = vunpack.c.h.b16 %v1303
    %v1639 = vunpack.c.l.b16 %v1304
    %v1640 = vunpack.c.h.b16 %v1304
    %v1641 = vunpack.c.l.b16 %v1305
    %v1642 = vunpack.c.h.b16 %v1305
    %v1643 = vunpack.c.l.b16 %v1306
    %v1644 = vunpack.c.h.b16 %v1306
    %v1645 = vunpack.c.l.b16 %v1307
    %v1646 = vunpack.c.h.b16 %v1307
    %v1647 = vunpack.c.l.b16 %v1308
    %v1648 = vunpack.c.h.b16 %v1308
    %v1649 = vunpack.c.l.b16 %v1309
    %v1650 = vunpack.c.h.b16 %v1309
    %v1651 = vunpack.c.l.b16 %v1310
    %v1652 = vunpack.c.h.b16 %v1310
    %v1653 = vunpack.c.l.b16 %v1311
    %v1654 = vunpack.c.h.b16 %v1311
    %v1655 = vunpack.c.l.b16 %v1312
    %v1656 = vunpack.c.h.b16 %v1312
    %v1657 = vunpack.c.l.b16 %v1313
    %v1658 = vunpack.c.h.b16 %v1313
    %v1659 = vunpack.c.l.b16 %v1314
    %v1660 = vunpack.c.h.b16 %v1314
    %v1661 = vunpack.c.l.b16 %v1315
    %v1662 = vunpack.c.h.b16 %v1315
    %v1663 = vunpack.c.l.b16 %v1316
    %v1664 = vunpack.c.h.b16 %v1316
    %v1665 = vunpack.c.l.b16 %v1317
    %v1666 = vunpack.c.h.b16 %v1317
    %v1667 = vunpack.c.l.b16 %v1318
    %v1668 = vunpack.c.h.b16 %v1318
    %v1669 = vunpack.c.l.b16 %v1319
    %v1670 = vunpack.c.h.b16 %v1319
    %v1671 = vunpack.c.l.b16 %v1320
    %v1672 = vunpack.c.h.b16 %v1320
    %v1673 = vunpack.c.l.b16 %v1321
    %v1674 = vunpack.c.h.b16 %v1321
    %v1675 = vunpack.c.l.b16 %v1322
    %v1676 = vunpack.c.h.b16 %v1322
    %v1677 = vunpack.c.l.b16 %v1323
    %v1678 = vunpack.c.h.b16 %v1323
    %v1679 = vunpack.c.l.b16 %v1324
    %v1680 = vunpack.c.h.b16 %v1324
    %v1681 = vunpack.c.l.b16 %v1325
    %v1682 = vunpack.c.h.b16 %v1325
    %v1683 = vunpack.c.l.b16 %v1326
    %v1684 = vunpack.c.h.b16 %v1326
    %v1685 = vunpack.c.l.b16 %v1327
    %v1686 = vunpack.c.h.b16 %v1327
    %v1687 = vunpack.c.l.b16 %v1328
    %v1688 = vunpack.c.h.b16 %v1328
    %v1689 = vunpack.c.l.b16 %v1329
    %v1690 = vunpack.c.h.b16 %v1329
    %v1691 = vunpack.c.l.b16 %v1330
    %v1692 = vunpack.c.h.b16 %v1330
    %v1693 = vunpack.c.l.b16 %v1331
    %v1694 = vunpack.c.h.b16 %v1331
    %v1695 = vunpack.c.l.b16 %v1332
    %v1696 = vunpack.c.h.b16 %v1332
    %v1697 = vunpack.c.l.b16 %v1333
    %v1698 = vunpack.c.h.b16 %v1333
    %v1699 = vunpack.c.l.b16 %v1334
    %v1700 = vunpack.c.h.b16 %v1334
    %v1701 = vunpack.c.l.b16 %v1335
    %v1702 = vunpack.c.h.b16 %v1335
    %v1703 = vunpack.c.l.b16 %v1336
    %v1704 = vunpack.c.h.b16 %v1336
    %v1705 = vunpack.c.l.b16 %v1337
    %v1706 = vunpack.c.h.b16 %v1337
    %v1707 = vunpack.c.l.b16 %v1338
    %v1708 = vunpack.c.h.b16 %v1338
    %v1709 = vunpack.c.l.b16 %v1339
    %v1710 = vunpack.c.h.b16 %v1339
    %v1711 = vunpack.c.l.b16 %v1340
    %v1712 = vunpack.c.h.b16 %v1340
    %v1713 = vunpack.c.l.b16 %v1341
    %v1714 = vunpack.c.h.b16 %v1341
    %v1715 = vunpack.c.l.b16 %v1342
    %v1716 = vunpack.c.h.b16 %v1342
    %v1717 = vunpack.c.l.b16 %v1343
    %v1718 = vunpack.c.h.b16 %v1343
    %v1719 = vunpack.c.l.b16 %v1344
    %v1720 = vunpack.c.h.b16 %v1344
    %v1721 = vunpack.c.l.b16 %v1345
    %v1722 = vunpack.c.h.b16 %v1345
    %v1723 = vunpack.c.l.b16 %v1346
    %v1724 = vunpack.c.h.b16 %v1346
    %v1725 = vunpack.c.l.b16 %v1347
    %v1726 = vunpack.c.h.b16 %v1347
    %v1727 = vunpack.c.l.b16 %v1348
    %v1728 = vunpack.c.h.b16 %v1348
    %v1729 = vunpack.c.l.b16 %v1349
    %v1730 = vunpack.c.h.b16 %v1349
    %v1731 = vunpack.c.l.b16 %v1350
    %v1732 = vunpack.c.h.b16 %v1350
    %v1733 = vunpack.c.l.b16 %v1351
    %v1734 = vunpack.c.h.b16 %v1351
    %v1735 = vunpack.c.l.b16 %v1352
    %v1736 = vunpack.c.h.b16 %v1352
    %v1737 = vunpack.c.l.b16 %v1353
    %v1738 = vunpack.c.h.b16 %v1353
    %v1739 = vunpack.c.l.b16 %v1354
    %v1740 = vunpack.c.h.b16 %v1354
    %v1741 = vunpack.c.l.b16 %v1355
    %v1742 = vunpack.c.h.b16 %v1355
    %v1743 = vunpack.c.l.b16 %v1356
    %v1744 = vunpack.c.h.b16 %v1356
    %v1745 = vunpack.c.l.b16 %v1357
    %v1746 = vunpack.c.h.b16 %v1357
    %v1747 = vunpack.c.l.b16 %v1358
    %v1748 = vunpack.c.h.b16 %v1358
    %v1749 = vunpack.c.l.b16 %v1359
    %v1750 = vunpack.c.h.b16 %v1359
    %v1751 = vunpack.c.l.b16 %v1360
    %v1752 = vunpack.c.h.b16 %v1360
    %v1753 = vunpack.c.l.b16 %v1361
    %v1754 = vunpack.c.h.b16 %v1361
    %v1755 = vunpack.c.l.b16 %v1362
    %v1756 = vunpack.c.h.b16 %v1362
    %v1757 = vpack.c.b16 %v1505, %v1501
    %v1758 = vpack.c.b16 %v1506, %v1502
    %v1759 = vpack.c.b16 %v1507, %v1503
    %v1760 = vpack.c.b16 %v1508, %v1504
    %v1761 = vpack.c.b16 %v1513, %v1509
    %v1762 = vpack.c.b16 %v1514, %v1510
    %v1763 = vpack.c.b16 %v1515, %v1511
    %v1764 = vpack.c.b16 %v1516, %v1512
    %v1765 = vpack.c.b16 %v1521, %v1517
    %v1766 = vpack.c.b16 %v1522, %v1518
    %v1767 = vpack.c.b16 %v1523, %v1519
    %v1768 = vpack.c.b16 %v1524, %v1520
    %v1769 = vpack.c.b16 %v1529, %v1525
    %v1770 = vpack.c.b16 %v1530, %v1526
    %v1771 = vpack.c.b16 %v1531, %v1527
    %v1772 = vpack.c.b16 %v1532, %v1528
    %v1773 = vpack.c.b16 %v1537, %v1533
    %v1774 = vpack.c.b16 %v1538, %v1534
    %v1775 = vpack.c.b16 %v1539, %v1535
    %v1776 = vpack.c.b16 %v1540, %v1536
    %v1777 = vpack.c.b16 %v1545, %v1541
    %v1778 = vpack.c.b16 %v1546, %v1542
    %v1779 = vpack.c.b16 %v1547, %v1543
    %v1780 = vpack.c.b16 %v1548, %v1544
    %v1781 = vpack.c.b16 %v1553, %v1549
    %v1782 = vpack.c.b16 %v1554, %v1550
    %v1783 = vpack.c.b16 %v1555, %v1551
    %v1784 = vpack.c.b16 %v1556, %v1552
    %v1785 = vpack.c.b16 %v1561, %v1557
    %v1786 = vpack.c.b16 %v1562, %v1558
    %v1787 = vpack.c.b16 %v1563, %v1559
    %v1788 = vpack.c.b16 %v1564, %v1560
    %v1789 = vpack.c.b16 %v1569, %v1565
    %v1790 = vpack.c.b16 %v1570, %v1566
    %v1791 = vpack.c.b16 %v1571, %v1567
    %v1792 = vpack.c.b16 %v1572, %v1568
    %v1793 = vpack.c.b16 %v1577, %v1573
    %v1794 = vpack.c.b16 %v1578, %v1574
    %v1795 = vpack.c.b16 %v1579, %v1575
    %v1796 = vpack.c.b16 %v1580, %v1576
    %v1797 = vpack.c.b16 %v1585, %v1581
    %v1798 = vpack.c.b16 %v1586, %v1582
    %v1799 = vpack.c.b16 %v1587, %v1583
    %v1800 = vpack.c.b16 %v1588, %v1584
    %v1801 = vpack.c.b16 %v1593, %v1589
    %v1802 = vpack.c.b16 %v1594, %v1590
    %v1803 = vpack.c.b16 %v1595, %v1591
    %v1804 = vpack.c.b16 %v1596, %v1592
    %v1805 = vpack.c.b16 %v1601, %v1597
    %v1806 = vpack.c.b16 %v1602, %v1598
    %v1807 = vpack.c.b16 %v1603, %v1599
    %v1808 = vpack.c.b16 %v1604, %v1600
    %v1809 = vpack.c.b16 %v1609, %v1605
    %v1810 = vpack.c.b16 %v1610, %v1606
    %v1811 = vpack.c.b16 %v1611, %v1607
    %v1812 = vpack.c.b16 %v1612, %v1608
    %v1813 = vpack.c.b16 %v1617, %v1613
    %v1814 = vpack.c.b16 %v1618, %v1614
    %v1815 = vpack.c.b16 %v1619, %v1615
    %v1816 = vpack.c.b16 %v1620, %v1616
    %v1817 = vpack.c.b16 %v1625, %v1621
    %v1818 = vpack.c.b16 %v1626, %v1622
    %v1819 = vpack.c.b16 %v1627, %v1623
    %v1820 = vpack.c.b16 %v1628, %v1624
    %v1821 = vpack.c.b16 %v1633, %v1629
    %v1822 = vpack.c.b16 %v1634, %v1630
    %v1823 = vpack.c.b16 %v1635, %v1631
    %v1824 = vpack.c.b16 %v1636, %v1632
    %v1825 = vpack.c.b16 %v1641, %v1637
    %v1826 = vpack.c.b16 %v1642, %v1638
    %v1827 = vpack.c.b16 %v1643, %v1639
    %v1828 = vpack.c.b16 %v1644, %v1640
    %v1829 = vpack.c.b16 %v1649, %v1645
    %v1830 = vpack.c.b16 %v1650, %v1646
    %v1831 = vpack.c.b16 %v1651, %v1647
    %v1832 = vpack.c.b16 %v1652, %v1648
    %v1833 = vpack.c.b16 %v1657, %v1653
    %v1834 = vpack.c.b16 %v1658, %v1654
    %v1835 = vpack.c.b16 %v1659, %v1655
    %v1836 = vpack.c.b16 %v1660, %v1656
    %v1837 = vpack.c.b16 %v1665, %v1661
    %v1838 = vpack.c.b16 %v1666, %v1662
    %v1839 = vpack.c.b16 %v1667, %v1663
    %v1840 = vpack.c.b16 %v1668, %v1664
    %v1841 = vpack.c.b16 %v1673, %v1669
    %v1842 = vpack.c.b16 %v1674, %v1670
    %v1843 = vpack.c.b16 %v1675, %v1671
    %v1844 = vpack.c.b16 %v1676, %v1672
    %v1845 = vpack.c.b16 %v1681, %v1677
    %v1846 = vpack.c.b16 %v1682, %v1678
    %v1847 = vpack.c.b16 %v1683, %v1679
    %v1848 = vpack.c.b16 %v1684, %v1680
    %v1849 = vpack.c.b16 %v1689, %v1685
    %v1850 = vpack.c.b16 %v1690, %v1686
    %v1851 = vpack.c.b16 %v1691, %v1687
    %v1852 = vpack.c.b16 %v1692, %v1688
    %v1853 = vpack.c.b16 %v1697, %v1693
    %v1854 = vpack.c.b16 %v1698, %v1694
    %v1855 = vpack.c.b16 %v1699, %v1695
    %v1856 = vpack.c.b16 %v1700, %v1696
    %v1857 = vpack.c.b16 %v1705, %v1701
    %v1858 = vpack.c.b16 %v1706, %v1702
    %v1859 = vpack.c.b16 %v1707, %v1703
    %v1860 = vpack.c.b16 %v1708, %v1704
    %v1861 = vpack.c.b16 %v1713, %v1709
    %v1862 = vpack.c.b16 %v1714, %v1710
    %v1863 = vpack.c.b16 %v1715, %v1711
    %v1864 = vpack.c.b16 %v1716, %v1712
    %v1865 = vpack.c.b16 %v1721, %v1717
    %v1866 = vpack.c.b16 %v1722, %v1718
    %v1867 = vpack.c.b16 %v1723, %v1719
    %v1868 = vpack.c.b16 %v1724, %v1720
    %v1869 = vpack.c.b16 %v1729, %v1725
    %v1870 = vpack.c.b16 %v1730, %v1726
    %v1871 = vpack.c.b16 %v1731, %v1727
    %v1872 = vpack.c.b16 %v1732, %v1728
    %v1873 = vpack.c.b16 %v1737, %v1733
    %v1874 = vpack.c.b16 %v1738, %v1734
    %v1875 = vpack.c.b16 %v1739, %v1735
    %v1876 = vpack.c.b16 %v1740, %v1736
    %v1877 = vpack.c.b16 %v1745, %v1741
    %v1878 = vpack.c.b16 %v1746, %v1742
    %v1879 = vpack.c.b16 %v1747, %v1743
    %v1880 = vpack.c.b16 %v1748, %v1744
    %v1881 = vpack.c.b16 %v1753, %v1749
    %v1882 = vpack.c.b16 %v1754, %v1750
    %v1883 = vpack.c.b16 %v1755, %v1751
    %v1884 = vpack.c.b16 %v1756, %v1752
    %2013 = vmatpush.bf16.msra.mxu0 %v1785
    %2014 = vmatpush.bf16.msra.mxu0 %v1781
    %2015 = vmatpush.bf16.msra.mxu0 %v1777
    %2016 = vmatpush.bf16.msra.mxu0 %v1773
    %2017 = vmatpush.bf16.msra.mxu0 %v1769
    %2018 = vmatpush.bf16.msra.mxu0 %v1765
    %2019 = vmatpush.bf16.msra.mxu0 %v1761
    %2020 = vmatpush.bf16.msra.mxu0 %v1757
    %2021 = vmatmul.bf16.gmra.mxu0 %v1231
    %v2022 = vpop.f32.mrf.mxu0
    %v2023 = vadd.f32 %v1365, %v2022
    %v2024 = vpop.f32.mrf.mxu0
    %2025 = vdwg.mxu0
    %2026 = vmatpush.bf16.msra.mxu0 %v1817
    %2027 = vmatpush.bf16.msra.mxu0 %v1813
    %2028 = vmatpush.bf16.msra.mxu0 %v1809
    %2029 = vmatpush.bf16.msra.mxu0 %v1805
    %2030 = vmatpush.bf16.msra.mxu0 %v1801
    %2031 = vmatpush.bf16.msra.mxu0 %v1797
    %2032 = vmatpush.bf16.msra.mxu0 %v1793
    %2033 = vmatpush.bf16.msra.mxu0 %v1789
    %2034 = vmatmul.bf16.gmra.mxu0 %v1232
    %v2035 = vpop.f32.mrf.mxu0
    %v2036 = vadd.f32 %v2023, %v2035
    %v2037 = vpop.f32.mrf.mxu0
    %2038 = vdwg.mxu0
    %2039 = vmatpush.bf16.msra.mxu0 %v1849
    %2040 = vmatpush.bf16.msra.mxu0 %v1845
    %2041 = vmatpush.bf16.msra.mxu0 %v1841
    %2042 = vmatpush.bf16.msra.mxu0 %v1837
    %2043 = vmatpush.bf16.msra.mxu0 %v1833
    %2044 = vmatpush.bf16.msra.mxu0 %v1829
    %2045 = vmatpush.bf16.msra.mxu0 %v1825
    %2046 = vmatpush.bf16.msra.mxu0 %v1821
    %2047 = vmatmul.bf16.gmra.mxu0 %v1233
    %v2048 = vpop.f32.mrf.mxu0
    %v2049 = vadd.f32 %v2036, %v2048
    %v2050 = vpop.f32.mrf.mxu0
    %2051 = vdwg.mxu0
    %2052 = vmatpush.bf16.msra.mxu0 %v1881
    %2053 = vmatpush.bf16.msra.mxu0 %v1877
    %2054 = vmatpush.bf16.msra.mxu0 %v1873
    %2055 = vmatpush.bf16.msra.mxu0 %v1869
    %2056 = vmatpush.bf16.msra.mxu0 %v1865
    %2057 = vmatpush.bf16.msra.mxu0 %v1861
    %2058 = vmatpush.bf16.msra.mxu0 %v1857
    %2059 = vmatpush.bf16.msra.mxu0 %v1853
    %2060 = vmatmul.bf16.gmra.mxu0 %v1234
    %v2061 = vpop.f32.mrf.mxu0
    %v2062 = vadd.f32 %v2049, %v2061
    %v2063 = vpop.f32.mrf.mxu0
    %2064 = vdwg.mxu0
    %2065 = vmatpush.bf16.msra.mxu0 %v1786
    %2066 = vmatpush.bf16.msra.mxu0 %v1782
    %2067 = vmatpush.bf16.msra.mxu0 %v1778
    %2068 = vmatpush.bf16.msra.mxu0 %v1774
    %2069 = vmatpush.bf16.msra.mxu0 %v1770
    %2070 = vmatpush.bf16.msra.mxu0 %v1766
    %2071 = vmatpush.bf16.msra.mxu0 %v1762
    %2072 = vmatpush.bf16.msra.mxu0 %v1758
    %2073 = vmatmul.bf16.gmra.mxu0 %v1231
    %v2074 = vpop.f32.mrf.mxu0
    %v2075 = vadd.f32 %v1366, %v2074
    %v2076 = vpop.f32.mrf.mxu0
    %2077 = vdwg.mxu0
    %2078 = vmatpush.bf16.msra.mxu0 %v1818
    %2079 = vmatpush.bf16.msra.mxu0 %v1814
    %2080 = vmatpush.bf16.msra.mxu0 %v1810
    %2081 = vmatpush.bf16.msra.mxu0 %v1806
    %2082 = vmatpush.bf16.msra.mxu0 %v1802
    %2083 = vmatpush.bf16.msra.mxu0 %v1798
    %2084 = vmatpush.bf16.msra.mxu0 %v1794
    %2085 = vmatpush.bf16.msra.mxu0 %v1790
    %2086 = vmatmul.bf16.gmra.mxu0 %v1232
    %v2087 = vpop.f32.mrf.mxu0
    %v2088 = vadd.f32 %v2075, %v2087
    %v2089 = vpop.f32.mrf.mxu0
    %2090 = vdwg.mxu0
    %2091 = vmatpush.bf16.msra.mxu0 %v1850
    %2092 = vmatpush.bf16.msra.mxu0 %v1846
    %2093 = vmatpush.bf16.msra.mxu0 %v1842
    %2094 = vmatpush.bf16.msra.mxu0 %v1838
    %2095 = vmatpush.bf16.msra.mxu0 %v1834
    %2096 = vmatpush.bf16.msra.mxu0 %v1830
    %2097 = vmatpush.bf16.msra.mxu0 %v1826
    %2098 = vmatpush.bf16.msra.mxu0 %v1822
    %2099 = vmatmul.bf16.gmra.mxu0 %v1233
    %v2100 = vpop.f32.mrf.mxu0
    %v2101 = vadd.f32 %v2088, %v2100
    %v2102 = vpop.f32.mrf.mxu0
    %2103 = vdwg.mxu0
    %2104 = vmatpush.bf16.msra.mxu0 %v1882
    %2105 = vmatpush.bf16.msra.mxu0 %v1878
    %2106 = vmatpush.bf16.msra.mxu0 %v1874
    %2107 = vmatpush.bf16.msra.mxu0 %v1870
    %2108 = vmatpush.bf16.msra.mxu0 %v1866
    %2109 = vmatpush.bf16.msra.mxu0 %v1862
    %2110 = vmatpush.bf16.msra.mxu0 %v1858
    %2111 = vmatpush.bf16.msra.mxu0 %v1854
    %2112 = vmatmul.bf16.gmra.mxu0 %v1234
    %v2113 = vpop.f32.mrf.mxu0
    %v2114 = vadd.f32 %v2101, %v2113
    %v2115 = vpop.f32.mrf.mxu0
    %2116 = vdwg.mxu0
    %2117 = vmatpush.bf16.msra.mxu0 %v1787
    %2118 = vmatpush.bf16.msra.mxu0 %v1783
    %2119 = vmatpush.bf16.msra.mxu0 %v1779
    %2120 = vmatpush.bf16.msra.mxu0 %v1775
    %2121 = vmatpush.bf16.msra.mxu0 %v1771
    %2122 = vmatpush.bf16.msra.mxu0 %v1767
    %2123 = vmatpush.bf16.msra.mxu0 %v1763
    %2124 = vmatpush.bf16.msra.mxu0 %v1759
    %2125 = vmatmul.bf16.gmra.mxu0 %v1231
    %v2126 = vpop.f32.mrf.mxu0
    %v2127 = vadd.f32 %v1367, %v2126
    %v2128 = vpop.f32.mrf.mxu0
    %2129 = vdwg.mxu0
    %2130 = vmatpush.bf16.msra.mxu0 %v1819
    %2131 = vmatpush.bf16.msra.mxu0 %v1815
    %2132 = vmatpush.bf16.msra.mxu0 %v1811
    %2133 = vmatpush.bf16.msra.mxu0 %v1807
    %2134 = vmatpush.bf16.msra.mxu0 %v1803
    %2135 = vmatpush.bf16.msra.mxu0 %v1799
    %2136 = vmatpush.bf16.msra.mxu0 %v1795
    %2137 = vmatpush.bf16.msra.mxu0 %v1791
    %2138 = vmatmul.bf16.gmra.mxu0 %v1232
    %v2139 = vpop.f32.mrf.mxu0
    %v2140 = vadd.f32 %v2127, %v2139
    %v2141 = vpop.f32.mrf.mxu0
    %2142 = vdwg.mxu0
    %2143 = vmatpush.bf16.msra.mxu0 %v1851
    %2144 = vmatpush.bf16.msra.mxu0 %v1847
    %2145 = vmatpush.bf16.msra.mxu0 %v1843
    %2146 = vmatpush.bf16.msra.mxu0 %v1839
    %2147 = vmatpush.bf16.msra.mxu0 %v1835
    %2148 = vmatpush.bf16.msra.mxu0 %v1831
    %2149 = vmatpush.bf16.msra.mxu0 %v1827
    %2150 = vmatpush.bf16.msra.mxu0 %v1823
    %2151 = vmatmul.bf16.gmra.mxu0 %v1233
    %v2152 = vpop.f32.mrf.mxu0
    %v2153 = vadd.f32 %v2140, %v2152
    %v2154 = vpop.f32.mrf.mxu0
    %2155 = vdwg.mxu0
    %2156 = vmatpush.bf16.msra.mxu0 %v1883
    %2157 = vmatpush.bf16.msra.mxu0 %v1879
    %2158 = vmatpush.bf16.msra.mxu0 %v1875
    %2159 = vmatpush.bf16.msra.mxu0 %v1871
    %2160 = vmatpush.bf16.msra.mxu0 %v1867
    %2161 = vmatpush.bf16.msra.mxu0 %v1863
    %2162 = vmatpush.bf16.msra.mxu0 %v1859
    %2163 = vmatpush.bf16.msra.mxu0 %v1855
    %2164 = vmatmul.bf16.gmra.mxu0 %v1234
    %v2165 = vpop.f32.mrf.mxu0
    %v2166 = vadd.f32 %v2153, %v2165
    %v2167 = vpop.f32.mrf.mxu0
    %2168 = vdwg.mxu0
    %2169 = vmatpush.bf16.msra.mxu0 %v1788
    %2170 = vmatpush.bf16.msra.mxu0 %v1784
    %2171 = vmatpush.bf16.msra.mxu0 %v1780
    %2172 = vmatpush.bf16.msra.mxu0 %v1776
    %2173 = vmatpush.bf16.msra.mxu0 %v1772
    %2174 = vmatpush.bf16.msra.mxu0 %v1768
    %2175 = vmatpush.bf16.msra.mxu0 %v1764
    %2176 = vmatpush.bf16.msra.mxu0 %v1760
    %2177 = vmatmul.bf16.gmra.mxu0 %v1231
    %v2178 = vpop.f32.mrf.mxu0
    %v2179 = vadd.f32 %v1368, %v2178
    %v2180 = vpop.f32.mrf.mxu0
    %2181 = vdwg.mxu0
    %2182 = vmatpush.bf16.msra.mxu0 %v1820
    %2183 = vmatpush.bf16.msra.mxu0 %v1816
    %2184 = vmatpush.bf16.msra.mxu0 %v1812
    %2185 = vmatpush.bf16.msra.mxu0 %v1808
    %2186 = vmatpush.bf16.msra.mxu0 %v1804
    %2187 = vmatpush.bf16.msra.mxu0 %v1800
    %2188 = vmatpush.bf16.msra.mxu0 %v1796
    %2189 = vmatpush.bf16.msra.mxu0 %v1792
    %2190 = vmatmul.bf16.gmra.mxu0 %v1232
    %v2191 = vpop.f32.mrf.mxu0
    %v2192 = vadd.f32 %v2179, %v2191
    %v2193 = vpop.f32.mrf.mxu0
    %2194 = vdwg.mxu0
    %2195 = vmatpush.bf16.msra.mxu0 %v1852
    %2196 = vmatpush.bf16.msra.mxu0 %v1848
    %2197 = vmatpush.bf16.msra.mxu0 %v1844
    %2198 = vmatpush.bf16.msra.mxu0 %v1840
    %2199 = vmatpush.bf16.msra.mxu0 %v1836
    %2200 = vmatpush.bf16.msra.mxu0 %v1832
    %2201 = vmatpush.bf16.msra.mxu0 %v1828
    %2202 = vmatpush.bf16.msra.mxu0 %v1824
    %2203 = vmatmul.bf16.gmra.mxu0 %v1233
    %v2204 = vpop.f32.mrf.mxu0
    %v2205 = vadd.f32 %v2192, %v2204
    %v2206 = vpop.f32.mrf.mxu0
    %2207 = vdwg.mxu0
    %2208 = vmatpush.bf16.msra.mxu0 %v1884
    %2209 = vmatpush.bf16.msra.mxu0 %v1880
    %2210 = vmatpush.bf16.msra.mxu0 %v1876
    %2211 = vmatpush.bf16.msra.mxu0 %v1872
    %2212 = vmatpush.bf16.msra.mxu0 %v1868
    %2213 = vmatpush.bf16.msra.mxu0 %v1864
    %2214 = vmatpush.bf16.msra.mxu0 %v1860
    %2215 = vmatpush.bf16.msra.mxu0 %v1856
    %2216 = vmatmul.bf16.gmra.mxu0 %v1234
    %v2217 = vpop.f32.mrf.mxu0
    %v2218 = vadd.f32 %v2205, %v2217
    %v2219 = vpop.f32.mrf.mxu0
    %2220 = vdwg.mxu0
    %v2221 = vmax.f32 %v2062, 0.0
    %v2222 = vmax.f32 %v2114, 0.0
    %v2223 = vmax.f32 %v2166, 0.0
    %v2224 = vmax.f32 %v2218, 0.0
    %v2225 = vpack.c.bf16 %v2221, %v2221
    %v2226 = vpack.c.bf16 %v2222, %v2222
    %v2227 = vpack.c.bf16 %v2223, %v2223
    %v2228 = vpack.c.bf16 %v2224, %v2224
    %v2229 = vld [vmem:[#allocation7] sm:$0xff]
    %v2230 = vld [vmem:[#allocation7 + $0x8] sm:$0xff]
    %v2231 = vld [vmem:[#allocation7 + $0x10] sm:$0xff]
    %v2232 = vld [vmem:[#allocation7 + $0x18] sm:$0xff]
    %v2233 = vld [vmem:[#allocation7 + $0x20] sm:$0xff]
    %v2234 = vld [vmem:[#allocation7 + $0x28] sm:$0xff]
    %v2235 = vld [vmem:[#allocation7 + $0x30] sm:$0xff]
    %v2236 = vld [vmem:[#allocation7 + $0x38] sm:$0xff]
    %v2237 = vld [vmem:[#allocation7 + $0x40] sm:$0xff]
    %v2238 = vld [vmem:[#allocation7 + $0x48] sm:$0xff]
    %v2239 = vld [vmem:[#allocation7 + $0x50] sm:$0xff]
    %v2240 = vld [vmem:[#allocation7 + $0x58] sm:$0xff]
    %v2241 = vld [vmem:[#allocation7 + $0x60] sm:$0xff]
    %v2242 = vld [vmem:[#allocation7 + $0x68] sm:$0xff]
    %v2243 = vld [vmem:[#allocation7 + $0x70] sm:$0xff]
    %v2244 = vld [vmem:[#allocation7 + $0x78] sm:$0xff]
    %v2245 = vld [vmem:[#allocation7 + $0x80] sm:$0xff]
    %v2246 = vld [vmem:[#allocation7 + $0x88] sm:$0xff]
    %v2247 = vld [vmem:[#allocation7 + $0x90] sm:$0xff]
    %v2248 = vld [vmem:[#allocation7 + $0x98] sm:$0xff]
    %v2249 = vld [vmem:[#allocation7 + $0xa0] sm:$0xff]
    %v2250 = vld [vmem:[#allocation7 + $0xa8] sm:$0xff]
    %v2251 = vld [vmem:[#allocation7 + $0xb0] sm:$0xff]
    %v2252 = vld [vmem:[#allocation7 + $0xb8] sm:$0xff]
    %v2253 = vld [vmem:[#allocation7 + $0xc0] sm:$0xff]
    %v2254 = vld [vmem:[#allocation7 + $0xc8] sm:$0xff]
    %v2255 = vld [vmem:[#allocation7 + $0xd0] sm:$0xff]
    %v2256 = vld [vmem:[#allocation7 + $0xd8] sm:$0xff]
    %v2257 = vld [vmem:[#allocation7 + $0xe0] sm:$0xff]
    %v2258 = vld [vmem:[#allocation7 + $0xe8] sm:$0xff]
    %v2259 = vld [vmem:[#allocation7 + $0xf0] sm:$0xff]
    %v2260 = vld [vmem:[#allocation7 + $0xf8] sm:$0xff]
    %v2261 = vld [vmem:[#allocation7 + $0x100] sm:$0xff]
    %v2262 = vld [vmem:[#allocation7 + $0x108] sm:$0xff]
    %v2263 = vld [vmem:[#allocation7 + $0x110] sm:$0xff]
    %v2264 = vld [vmem:[#allocation7 + $0x118] sm:$0xff]
    %v2265 = vld [vmem:[#allocation7 + $0x120] sm:$0xff]
    %v2266 = vld [vmem:[#allocation7 + $0x128] sm:$0xff]
    %v2267 = vld [vmem:[#allocation7 + $0x130] sm:$0xff]
    %v2268 = vld [vmem:[#allocation7 + $0x138] sm:$0xff]
    %v2269 = vld [vmem:[#allocation7 + $0x140] sm:$0xff]
    %v2270 = vld [vmem:[#allocation7 + $0x148] sm:$0xff]
    %v2271 = vld [vmem:[#allocation7 + $0x150] sm:$0xff]
    %v2272 = vld [vmem:[#allocation7 + $0x158] sm:$0xff]
    %v2273 = vld [vmem:[#allocation7 + $0x160] sm:$0xff]
    %v2274 = vld [vmem:[#allocation7 + $0x168] sm:$0xff]
    %v2275 = vld [vmem:[#allocation7 + $0x170] sm:$0xff]
    %v2276 = vld [vmem:[#allocation7 + $0x178] sm:$0xff]
    %v2277 = vld [vmem:[#allocation7 + $0x180] sm:$0xff]
    %v2278 = vld [vmem:[#allocation7 + $0x188] sm:$0xff]
    %v2279 = vld [vmem:[#allocation7 + $0x190] sm:$0xff]
    %v2280 = vld [vmem:[#allocation7 + $0x198] sm:$0xff]
    %v2281 = vld [vmem:[#allocation7 + $0x1a0] sm:$0xff]
    %v2282 = vld [vmem:[#allocation7 + $0x1a8] sm:$0xff]
    %v2283 = vld [vmem:[#allocation7 + $0x1b0] sm:$0xff]
    %v2284 = vld [vmem:[#allocation7 + $0x1b8] sm:$0xff]
    %v2285 = vld [vmem:[#allocation7 + $0x1c0] sm:$0xff]
    %v2286 = vld [vmem:[#allocation7 + $0x1c8] sm:$0xff]
    %v2287 = vld [vmem:[#allocation7 + $0x1d0] sm:$0xff]
    %v2288 = vld [vmem:[#allocation7 + $0x1d8] sm:$0xff]
    %v2289 = vld [vmem:[#allocation7 + $0x1e0] sm:$0xff]
    %v2290 = vld [vmem:[#allocation7 + $0x1e8] sm:$0xff]
    %v2291 = vld [vmem:[#allocation7 + $0x1f0] sm:$0xff]
    %v2292 = vld [vmem:[#allocation7 + $0x1f8] sm:$0xff]
    %v2293 = vld [vmem:[#allocation7 + $0x200] sm:$0xff]
    %v2294 = vld [vmem:[#allocation7 + $0x208] sm:$0xff]
    %v2295 = vld [vmem:[#allocation7 + $0x210] sm:$0xff]
    %v2296 = vld [vmem:[#allocation7 + $0x218] sm:$0xff]
    %v2297 = vld [vmem:[#allocation7 + $0x220] sm:$0xff]
    %v2298 = vld [vmem:[#allocation7 + $0x228] sm:$0xff]
    %v2299 = vld [vmem:[#allocation7 + $0x230] sm:$0xff]
    %v2300 = vld [vmem:[#allocation7 + $0x238] sm:$0xff]
    %v2301 = vld [vmem:[#allocation7 + $0x240] sm:$0xff]
    %v2302 = vld [vmem:[#allocation7 + $0x248] sm:$0xff]
    %v2303 = vld [vmem:[#allocation7 + $0x250] sm:$0xff]
    %v2304 = vld [vmem:[#allocation7 + $0x258] sm:$0xff]
    %v2305 = vld [vmem:[#allocation7 + $0x260] sm:$0xff]
    %v2306 = vld [vmem:[#allocation7 + $0x268] sm:$0xff]
    %v2307 = vld [vmem:[#allocation7 + $0x270] sm:$0xff]
    %v2308 = vld [vmem:[#allocation7 + $0x278] sm:$0xff]
    %v2309 = vld [vmem:[#allocation7 + $0x280] sm:$0xff]
    %v2310 = vld [vmem:[#allocation7 + $0x288] sm:$0xff]
    %v2311 = vld [vmem:[#allocation7 + $0x290] sm:$0xff]
    %v2312 = vld [vmem:[#allocation7 + $0x298] sm:$0xff]
    %v2313 = vld [vmem:[#allocation7 + $0x2a0] sm:$0xff]
    %v2314 = vld [vmem:[#allocation7 + $0x2a8] sm:$0xff]
    %v2315 = vld [vmem:[#allocation7 + $0x2b0] sm:$0xff]
    %v2316 = vld [vmem:[#allocation7 + $0x2b8] sm:$0xff]
    %v2317 = vld [vmem:[#allocation7 + $0x2c0] sm:$0xff]
    %v2318 = vld [vmem:[#allocation7 + $0x2c8] sm:$0xff]
    %v2319 = vld [vmem:[#allocation7 + $0x2d0] sm:$0xff]
    %v2320 = vld [vmem:[#allocation7 + $0x2d8] sm:$0xff]
    %v2321 = vld [vmem:[#allocation7 + $0x2e0] sm:$0xff]
    %v2322 = vld [vmem:[#allocation7 + $0x2e8] sm:$0xff]
    %v2323 = vld [vmem:[#allocation7 + $0x2f0] sm:$0xff]
    %v2324 = vld [vmem:[#allocation7 + $0x2f8] sm:$0xff]
    %v2325 = vld [vmem:[#allocation7 + $0x300] sm:$0xff]
    %v2326 = vld [vmem:[#allocation7 + $0x308] sm:$0xff]
    %v2327 = vld [vmem:[#allocation7 + $0x310] sm:$0xff]
    %v2328 = vld [vmem:[#allocation7 + $0x318] sm:$0xff]
    %v2329 = vld [vmem:[#allocation7 + $0x320] sm:$0xff]
    %v2330 = vld [vmem:[#allocation7 + $0x328] sm:$0xff]
    %v2331 = vld [vmem:[#allocation7 + $0x330] sm:$0xff]
    %v2332 = vld [vmem:[#allocation7 + $0x338] sm:$0xff]
    %v2333 = vld [vmem:[#allocation7 + $0x340] sm:$0xff]
    %v2334 = vld [vmem:[#allocation7 + $0x348] sm:$0xff]
    %v2335 = vld [vmem:[#allocation7 + $0x350] sm:$0xff]
    %v2336 = vld [vmem:[#allocation7 + $0x358] sm:$0xff]
    %v2337 = vld [vmem:[#allocation7 + $0x360] sm:$0xff]
    %v2338 = vld [vmem:[#allocation7 + $0x368] sm:$0xff]
    %v2339 = vld [vmem:[#allocation7 + $0x370] sm:$0xff]
    %v2340 = vld [vmem:[#allocation7 + $0x378] sm:$0xff]
    %v2341 = vld [vmem:[#allocation7 + $0x380] sm:$0xff]
    %v2342 = vld [vmem:[#allocation7 + $0x388] sm:$0xff]
    %v2343 = vld [vmem:[#allocation7 + $0x390] sm:$0xff]
    %v2344 = vld [vmem:[#allocation7 + $0x398] sm:$0xff]
    %v2345 = vld [vmem:[#allocation7 + $0x3a0] sm:$0xff]
    %v2346 = vld [vmem:[#allocation7 + $0x3a8] sm:$0xff]
    %v2347 = vld [vmem:[#allocation7 + $0x3b0] sm:$0xff]
    %v2348 = vld [vmem:[#allocation7 + $0x3b8] sm:$0xff]
    %v2349 = vld [vmem:[#allocation7 + $0x3c0] sm:$0xff]
    %v2350 = vld [vmem:[#allocation7 + $0x3c8] sm:$0xff]
    %v2351 = vld [vmem:[#allocation7 + $0x3d0] sm:$0xff]
    %v2352 = vld [vmem:[#allocation7 + $0x3d8] sm:$0xff]
    %v2353 = vld [vmem:[#allocation7 + $0x3e0] sm:$0xff]
    %v2354 = vld [vmem:[#allocation7 + $0x3e8] sm:$0xff]
    %v2355 = vld [vmem:[#allocation7 + $0x3f0] sm:$0xff]
    %v2356 = vld [vmem:[#allocation7 + $0x3f8] sm:$0xff]
    %v2357 = vld [vmem:[%s8] sm:$0xf]
    %v2359 = vperm.slane %v2357, 0
    %v2360 = vperm.slane %v2357, 1
    %v2361 = vperm.slane %v2357, 2
    %v2362 = vperm.slane %v2357, 3
    %v2495 = vunpack.c.l.b16 %v2229
    %v2496 = vunpack.c.h.b16 %v2229
    %v2497 = vunpack.c.l.b16 %v2230
    %v2498 = vunpack.c.h.b16 %v2230
    %v2499 = vunpack.c.l.b16 %v2231
    %v2500 = vunpack.c.h.b16 %v2231
    %v2501 = vunpack.c.l.b16 %v2232
    %v2502 = vunpack.c.h.b16 %v2232
    %v2503 = vunpack.c.l.b16 %v2233
    %v2504 = vunpack.c.h.b16 %v2233
    %v2505 = vunpack.c.l.b16 %v2234
    %v2506 = vunpack.c.h.b16 %v2234
    %v2507 = vunpack.c.l.b16 %v2235
    %v2508 = vunpack.c.h.b16 %v2235
    %v2509 = vunpack.c.l.b16 %v2236
    %v2510 = vunpack.c.h.b16 %v2236
    %v2511 = vunpack.c.l.b16 %v2237
    %v2512 = vunpack.c.h.b16 %v2237
    %v2513 = vunpack.c.l.b16 %v2238
    %v2514 = vunpack.c.h.b16 %v2238
    %v2515 = vunpack.c.l.b16 %v2239
    %v2516 = vunpack.c.h.b16 %v2239
    %v2517 = vunpack.c.l.b16 %v2240
    %v2518 = vunpack.c.h.b16 %v2240
    %v2519 = vunpack.c.l.b16 %v2241
    %v2520 = vunpack.c.h.b16 %v2241
    %v2521 = vunpack.c.l.b16 %v2242
    %v2522 = vunpack.c.h.b16 %v2242
    %v2523 = vunpack.c.l.b16 %v2243
    %v2524 = vunpack.c.h.b16 %v2243
    %v2525 = vunpack.c.l.b16 %v2244
    %v2526 = vunpack.c.h.b16 %v2244
    %v2527 = vunpack.c.l.b16 %v2245
    %v2528 = vunpack.c.h.b16 %v2245
    %v2529 = vunpack.c.l.b16 %v2246
    %v2530 = vunpack.c.h.b16 %v2246
    %v2531 = vunpack.c.l.b16 %v2247
    %v2532 = vunpack.c.h.b16 %v2247
    %v2533 = vunpack.c.l.b16 %v2248
    %v2534 = vunpack.c.h.b16 %v2248
    %v2535 = vunpack.c.l.b16 %v2249
    %v2536 = vunpack.c.h.b16 %v2249
    %v2537 = vunpack.c.l.b16 %v2250
    %v2538 = vunpack.c.h.b16 %v2250
    %v2539 = vunpack.c.l.b16 %v2251
    %v2540 = vunpack.c.h.b16 %v2251
    %v2541 = vunpack.c.l.b16 %v2252
    %v2542 = vunpack.c.h.b16 %v2252
    %v2543 = vunpack.c.l.b16 %v2253
    %v2544 = vunpack.c.h.b16 %v2253
    %v2545 = vunpack.c.l.b16 %v2254
    %v2546 = vunpack.c.h.b16 %v2254
    %v2547 = vunpack.c.l.b16 %v2255
    %v2548 = vunpack.c.h.b16 %v2255
    %v2549 = vunpack.c.l.b16 %v2256
    %v2550 = vunpack.c.h.b16 %v2256
    %v2551 = vunpack.c.l.b16 %v2257
    %v2552 = vunpack.c.h.b16 %v2257
    %v2553 = vunpack.c.l.b16 %v2258
    %v2554 = vunpack.c.h.b16 %v2258
    %v2555 = vunpack.c.l.b16 %v2259
    %v2556 = vunpack.c.h.b16 %v2259
    %v2557 = vunpack.c.l.b16 %v2260
    %v2558 = vunpack.c.h.b16 %v2260
    %v2559 = vunpack.c.l.b16 %v2261
    %v2560 = vunpack.c.h.b16 %v2261
    %v2561 = vunpack.c.l.b16 %v2262
    %v2562 = vunpack.c.h.b16 %v2262
    %v2563 = vunpack.c.l.b16 %v2263
    %v2564 = vunpack.c.h.b16 %v2263
    %v2565 = vunpack.c.l.b16 %v2264
    %v2566 = vunpack.c.h.b16 %v2264
    %v2567 = vunpack.c.l.b16 %v2265
    %v2568 = vunpack.c.h.b16 %v2265
    %v2569 = vunpack.c.l.b16 %v2266
    %v2570 = vunpack.c.h.b16 %v2266
    %v2571 = vunpack.c.l.b16 %v2267
    %v2572 = vunpack.c.h.b16 %v2267
    %v2573 = vunpack.c.l.b16 %v2268
    %v2574 = vunpack.c.h.b16 %v2268
    %v2575 = vunpack.c.l.b16 %v2269
    %v2576 = vunpack.c.h.b16 %v2269
    %v2577 = vunpack.c.l.b16 %v2270
    %v2578 = vunpack.c.h.b16 %v2270
    %v2579 = vunpack.c.l.b16 %v2271
    %v2580 = vunpack.c.h.b16 %v2271
    %v2581 = vunpack.c.l.b16 %v2272
    %v2582 = vunpack.c.h.b16 %v2272
    %v2583 = vunpack.c.l.b16 %v2273
    %v2584 = vunpack.c.h.b16 %v2273
    %v2585 = vunpack.c.l.b16 %v2274
    %v2586 = vunpack.c.h.b16 %v2274
    %v2587 = vunpack.c.l.b16 %v2275
    %v2588 = vunpack.c.h.b16 %v2275
    %v2589 = vunpack.c.l.b16 %v2276
    %v2590 = vunpack.c.h.b16 %v2276
    %v2591 = vunpack.c.l.b16 %v2277
    %v2592 = vunpack.c.h.b16 %v2277
    %v2593 = vunpack.c.l.b16 %v2278
    %v2594 = vunpack.c.h.b16 %v2278
    %v2595 = vunpack.c.l.b16 %v2279
    %v2596 = vunpack.c.h.b16 %v2279
    %v2597 = vunpack.c.l.b16 %v2280
    %v2598 = vunpack.c.h.b16 %v2280
    %v2599 = vunpack.c.l.b16 %v2281
    %v2600 = vunpack.c.h.b16 %v2281
    %v2601 = vunpack.c.l.b16 %v2282
    %v2602 = vunpack.c.h.b16 %v2282
    %v2603 = vunpack.c.l.b16 %v2283
    %v2604 = vunpack.c.h.b16 %v2283
    %v2605 = vunpack.c.l.b16 %v2284
    %v2606 = vunpack.c.h.b16 %v2284
    %v2607 = vunpack.c.l.b16 %v2285
    %v2608 = vunpack.c.h.b16 %v2285
    %v2609 = vunpack.c.l.b16 %v2286
    %v2610 = vunpack.c.h.b16 %v2286
    %v2611 = vunpack.c.l.b16 %v2287
    %v2612 = vunpack.c.h.b16 %v2287
    %v2613 = vunpack.c.l.b16 %v2288
    %v2614 = vunpack.c.h.b16 %v2288
    %v2615 = vunpack.c.l.b16 %v2289
    %v2616 = vunpack.c.h.b16 %v2289
    %v2617 = vunpack.c.l.b16 %v2290
    %v2618 = vunpack.c.h.b16 %v2290
    %v2619 = vunpack.c.l.b16 %v2291
    %v2620 = vunpack.c.h.b16 %v2291
    %v2621 = vunpack.c.l.b16 %v2292
    %v2622 = vunpack.c.h.b16 %v2292
    %v2623 = vunpack.c.l.b16 %v2293
    %v2624 = vunpack.c.h.b16 %v2293
    %v2625 = vunpack.c.l.b16 %v2294
    %v2626 = vunpack.c.h.b16 %v2294
    %v2627 = vunpack.c.l.b16 %v2295
    %v2628 = vunpack.c.h.b16 %v2295
    %v2629 = vunpack.c.l.b16 %v2296
    %v2630 = vunpack.c.h.b16 %v2296
    %v2631 = vunpack.c.l.b16 %v2297
    %v2632 = vunpack.c.h.b16 %v2297
    %v2633 = vunpack.c.l.b16 %v2298
    %v2634 = vunpack.c.h.b16 %v2298
    %v2635 = vunpack.c.l.b16 %v2299
    %v2636 = vunpack.c.h.b16 %v2299
    %v2637 = vunpack.c.l.b16 %v2300
    %v2638 = vunpack.c.h.b16 %v2300
    %v2639 = vunpack.c.l.b16 %v2301
    %v2640 = vunpack.c.h.b16 %v2301
    %v2641 = vunpack.c.l.b16 %v2302
    %v2642 = vunpack.c.h.b16 %v2302
    %v2643 = vunpack.c.l.b16 %v2303
    %v2644 = vunpack.c.h.b16 %v2303
    %v2645 = vunpack.c.l.b16 %v2304
    %v2646 = vunpack.c.h.b16 %v2304
    %v2647 = vunpack.c.l.b16 %v2305
    %v2648 = vunpack.c.h.b16 %v2305
    %v2649 = vunpack.c.l.b16 %v2306
    %v2650 = vunpack.c.h.b16 %v2306
    %v2651 = vunpack.c.l.b16 %v2307
    %v2652 = vunpack.c.h.b16 %v2307
    %v2653 = vunpack.c.l.b16 %v2308
    %v2654 = vunpack.c.h.b16 %v2308
    %v2655 = vunpack.c.l.b16 %v2309
    %v2656 = vunpack.c.h.b16 %v2309
    %v2657 = vunpack.c.l.b16 %v2310
    %v2658 = vunpack.c.h.b16 %v2310
    %v2659 = vunpack.c.l.b16 %v2311
    %v2660 = vunpack.c.h.b16 %v2311
    %v2661 = vunpack.c.l.b16 %v2312
    %v2662 = vunpack.c.h.b16 %v2312
    %v2663 = vunpack.c.l.b16 %v2313
    %v2664 = vunpack.c.h.b16 %v2313
    %v2665 = vunpack.c.l.b16 %v2314
    %v2666 = vunpack.c.h.b16 %v2314
    %v2667 = vunpack.c.l.b16 %v2315
    %v2668 = vunpack.c.h.b16 %v2315
    %v2669 = vunpack.c.l.b16 %v2316
    %v2670 = vunpack.c.h.b16 %v2316
    %v2671 = vunpack.c.l.b16 %v2317
    %v2672 = vunpack.c.h.b16 %v2317
    %v2673 = vunpack.c.l.b16 %v2318
    %v2674 = vunpack.c.h.b16 %v2318
    %v2675 = vunpack.c.l.b16 %v2319
    %v2676 = vunpack.c.h.b16 %v2319
    %v2677 = vunpack.c.l.b16 %v2320
    %v2678 = vunpack.c.h.b16 %v2320
    %v2679 = vunpack.c.l.b16 %v2321
    %v2680 = vunpack.c.h.b16 %v2321
    %v2681 = vunpack.c.l.b16 %v2322
    %v2682 = vunpack.c.h.b16 %v2322
    %v2683 = vunpack.c.l.b16 %v2323
    %v2684 = vunpack.c.h.b16 %v2323
    %v2685 = vunpack.c.l.b16 %v2324
    %v2686 = vunpack.c.h.b16 %v2324
    %v2687 = vunpack.c.l.b16 %v2325
    %v2688 = vunpack.c.h.b16 %v2325
    %v2689 = vunpack.c.l.b16 %v2326
    %v2690 = vunpack.c.h.b16 %v2326
    %v2691 = vunpack.c.l.b16 %v2327
    %v2692 = vunpack.c.h.b16 %v2327
    %v2693 = vunpack.c.l.b16 %v2328
    %v2694 = vunpack.c.h.b16 %v2328
    %v2695 = vunpack.c.l.b16 %v2329
    %v2696 = vunpack.c.h.b16 %v2329
    %v2697 = vunpack.c.l.b16 %v2330
    %v2698 = vunpack.c.h.b16 %v2330
    %v2699 = vunpack.c.l.b16 %v2331
    %v2700 = vunpack.c.h.b16 %v2331
    %v2701 = vunpack.c.l.b16 %v2332
    %v2702 = vunpack.c.h.b16 %v2332
    %v2703 = vunpack.c.l.b16 %v2333
    %v2704 = vunpack.c.h.b16 %v2333
    %v2705 = vunpack.c.l.b16 %v2334
    %v2706 = vunpack.c.h.b16 %v2334
    %v2707 = vunpack.c.l.b16 %v2335
    %v2708 = vunpack.c.h.b16 %v2335
    %v2709 = vunpack.c.l.b16 %v2336
    %v2710 = vunpack.c.h.b16 %v2336
    %v2711 = vunpack.c.l.b16 %v2337
    %v2712 = vunpack.c.h.b16 %v2337
    %v2713 = vunpack.c.l.b16 %v2338
    %v2714 = vunpack.c.h.b16 %v2338
    %v2715 = vunpack.c.l.b16 %v2339
    %v2716 = vunpack.c.h.b16 %v2339
    %v2717 = vunpack.c.l.b16 %v2340
    %v2718 = vunpack.c.h.b16 %v2340
    %v2719 = vunpack.c.l.b16 %v2341
    %v2720 = vunpack.c.h.b16 %v2341
    %v2721 = vunpack.c.l.b16 %v2342
    %v2722 = vunpack.c.h.b16 %v2342
    %v2723 = vunpack.c.l.b16 %v2343
    %v2724 = vunpack.c.h.b16 %v2343
    %v2725 = vunpack.c.l.b16 %v2344
    %v2726 = vunpack.c.h.b16 %v2344
    %v2727 = vunpack.c.l.b16 %v2345
    %v2728 = vunpack.c.h.b16 %v2345
    %v2729 = vunpack.c.l.b16 %v2346
    %v2730 = vunpack.c.h.b16 %v2346
    %v2731 = vunpack.c.l.b16 %v2347
    %v2732 = vunpack.c.h.b16 %v2347
    %v2733 = vunpack.c.l.b16 %v2348
    %v2734 = vunpack.c.h.b16 %v2348
    %v2735 = vunpack.c.l.b16 %v2349
    %v2736 = vunpack.c.h.b16 %v2349
    %v2737 = vunpack.c.l.b16 %v2350
    %v2738 = vunpack.c.h.b16 %v2350
    %v2739 = vunpack.c.l.b16 %v2351
    %v2740 = vunpack.c.h.b16 %v2351
    %v2741 = vunpack.c.l.b16 %v2352
    %v2742 = vunpack.c.h.b16 %v2352
    %v2743 = vunpack.c.l.b16 %v2353
    %v2744 = vunpack.c.h.b16 %v2353
    %v2745 = vunpack.c.l.b16 %v2354
    %v2746 = vunpack.c.h.b16 %v2354
    %v2747 = vunpack.c.l.b16 %v2355
    %v2748 = vunpack.c.h.b16 %v2355
    %v2749 = vunpack.c.l.b16 %v2356
    %v2750 = vunpack.c.h.b16 %v2356
    %v2751 = vpack.c.b16 %v2499, %v2495
    %v2752 = vpack.c.b16 %v2500, %v2496
    %v2753 = vpack.c.b16 %v2501, %v2497
    %v2754 = vpack.c.b16 %v2502, %v2498
    %v2755 = vpack.c.b16 %v2507, %v2503
    %v2756 = vpack.c.b16 %v2508, %v2504
    %v2757 = vpack.c.b16 %v2509, %v2505
    %v2758 = vpack.c.b16 %v2510, %v2506
    %v2759 = vpack.c.b16 %v2515, %v2511
    %v2760 = vpack.c.b16 %v2516, %v2512
    %v2761 = vpack.c.b16 %v2517, %v2513
    %v2762 = vpack.c.b16 %v2518, %v2514
    %v2763 = vpack.c.b16 %v2523, %v2519
    %v2764 = vpack.c.b16 %v2524, %v2520
    %v2765 = vpack.c.b16 %v2525, %v2521
    %v2766 = vpack.c.b16 %v2526, %v2522
    %v2767 = vpack.c.b16 %v2531, %v2527
    %v2768 = vpack.c.b16 %v2532, %v2528
    %v2769 = vpack.c.b16 %v2533, %v2529
    %v2770 = vpack.c.b16 %v2534, %v2530
    %v2771 = vpack.c.b16 %v2539, %v2535
    %v2772 = vpack.c.b16 %v2540, %v2536
    %v2773 = vpack.c.b16 %v2541, %v2537
    %v2774 = vpack.c.b16 %v2542, %v2538
    %v2775 = vpack.c.b16 %v2547, %v2543
    %v2776 = vpack.c.b16 %v2548, %v2544
    %v2777 = vpack.c.b16 %v2549, %v2545
    %v2778 = vpack.c.b16 %v2550, %v2546
    %v2779 = vpack.c.b16 %v2555, %v2551
    %v2780 = vpack.c.b16 %v2556, %v2552
    %v2781 = vpack.c.b16 %v2557, %v2553
    %v2782 = vpack.c.b16 %v2558, %v2554
    %v2783 = vpack.c.b16 %v2563, %v2559
    %v2784 = vpack.c.b16 %v2564, %v2560
    %v2785 = vpack.c.b16 %v2565, %v2561
    %v2786 = vpack.c.b16 %v2566, %v2562
    %v2787 = vpack.c.b16 %v2571, %v2567
    %v2788 = vpack.c.b16 %v2572, %v2568
    %v2789 = vpack.c.b16 %v2573, %v2569
    %v2790 = vpack.c.b16 %v2574, %v2570
    %v2791 = vpack.c.b16 %v2579, %v2575
    %v2792 = vpack.c.b16 %v2580, %v2576
    %v2793 = vpack.c.b16 %v2581, %v2577
    %v2794 = vpack.c.b16 %v2582, %v2578
    %v2795 = vpack.c.b16 %v2587, %v2583
    %v2796 = vpack.c.b16 %v2588, %v2584
    %v2797 = vpack.c.b16 %v2589, %v2585
    %v2798 = vpack.c.b16 %v2590, %v2586
    %v2799 = vpack.c.b16 %v2595, %v2591
    %v2800 = vpack.c.b16 %v2596, %v2592
    %v2801 = vpack.c.b16 %v2597, %v2593
    %v2802 = vpack.c.b16 %v2598, %v2594
    %v2803 = vpack.c.b16 %v2603, %v2599
    %v2804 = vpack.c.b16 %v2604, %v2600
    %v2805 = vpack.c.b16 %v2605, %v2601
    %v2806 = vpack.c.b16 %v2606, %v2602
    %v2807 = vpack.c.b16 %v2611, %v2607
    %v2808 = vpack.c.b16 %v2612, %v2608
    %v2809 = vpack.c.b16 %v2613, %v2609
    %v2810 = vpack.c.b16 %v2614, %v2610
    %v2811 = vpack.c.b16 %v2619, %v2615
    %v2812 = vpack.c.b16 %v2620, %v2616
    %v2813 = vpack.c.b16 %v2621, %v2617
    %v2814 = vpack.c.b16 %v2622, %v2618
    %v2815 = vpack.c.b16 %v2627, %v2623
    %v2816 = vpack.c.b16 %v2628, %v2624
    %v2817 = vpack.c.b16 %v2629, %v2625
    %v2818 = vpack.c.b16 %v2630, %v2626
    %v2819 = vpack.c.b16 %v2635, %v2631
    %v2820 = vpack.c.b16 %v2636, %v2632
    %v2821 = vpack.c.b16 %v2637, %v2633
    %v2822 = vpack.c.b16 %v2638, %v2634
    %v2823 = vpack.c.b16 %v2643, %v2639
    %v2824 = vpack.c.b16 %v2644, %v2640
    %v2825 = vpack.c.b16 %v2645, %v2641
    %v2826 = vpack.c.b16 %v2646, %v2642
    %v2827 = vpack.c.b16 %v2651, %v2647
    %v2828 = vpack.c.b16 %v2652, %v2648
    %v2829 = vpack.c.b16 %v2653, %v2649
    %v2830 = vpack.c.b16 %v2654, %v2650
    %v2831 = vpack.c.b16 %v2659, %v2655
    %v2832 = vpack.c.b16 %v2660, %v2656
    %v2833 = vpack.c.b16 %v2661, %v2657
    %v2834 = vpack.c.b16 %v2662, %v2658
    %v2835 = vpack.c.b16 %v2667, %v2663
    %v2836 = vpack.c.b16 %v2668, %v2664
    %v2837 = vpack.c.b16 %v2669, %v2665
    %v2838 = vpack.c.b16 %v2670, %v2666
    %v2839 = vpack.c.b16 %v2675, %v2671
    %v2840 = vpack.c.b16 %v2676, %v2672
    %v2841 = vpack.c.b16 %v2677, %v2673
    %v2842 = vpack.c.b16 %v2678, %v2674
    %v2843 = vpack.c.b16 %v2683, %v2679
    %v2844 = vpack.c.b16 %v2684, %v2680
    %v2845 = vpack.c.b16 %v2685, %v2681
    %v2846 = vpack.c.b16 %v2686, %v2682
    %v2847 = vpack.c.b16 %v2691, %v2687
    %v2848 = vpack.c.b16 %v2692, %v2688
    %v2849 = vpack.c.b16 %v2693, %v2689
    %v2850 = vpack.c.b16 %v2694, %v2690
    %v2851 = vpack.c.b16 %v2699, %v2695
    %v2852 = vpack.c.b16 %v2700, %v2696
    %v2853 = vpack.c.b16 %v2701, %v2697
    %v2854 = vpack.c.b16 %v2702, %v2698
    %v2855 = vpack.c.b16 %v2707, %v2703
    %v2856 = vpack.c.b16 %v2708, %v2704
    %v2857 = vpack.c.b16 %v2709, %v2705
    %v2858 = vpack.c.b16 %v2710, %v2706
    %v2859 = vpack.c.b16 %v2715, %v2711
    %v2860 = vpack.c.b16 %v2716, %v2712
    %v2861 = vpack.c.b16 %v2717, %v2713
    %v2862 = vpack.c.b16 %v2718, %v2714
    %v2863 = vpack.c.b16 %v2723, %v2719
    %v2864 = vpack.c.b16 %v2724, %v2720
    %v2865 = vpack.c.b16 %v2725, %v2721
    %v2866 = vpack.c.b16 %v2726, %v2722
    %v2867 = vpack.c.b16 %v2731, %v2727
    %v2868 = vpack.c.b16 %v2732, %v2728
    %v2869 = vpack.c.b16 %v2733, %v2729
    %v2870 = vpack.c.b16 %v2734, %v2730
    %v2871 = vpack.c.b16 %v2739, %v2735
    %v2872 = vpack.c.b16 %v2740, %v2736
    %v2873 = vpack.c.b16 %v2741, %v2737
    %v2874 = vpack.c.b16 %v2742, %v2738
    %v2875 = vpack.c.b16 %v2747, %v2743
    %v2876 = vpack.c.b16 %v2748, %v2744
    %v2877 = vpack.c.b16 %v2749, %v2745
    %v2878 = vpack.c.b16 %v2750, %v2746
    %3007 = vmatpush.bf16.msra.mxu0 %v2779
    %3008 = vmatpush.bf16.msra.mxu0 %v2775
    %3009 = vmatpush.bf16.msra.mxu0 %v2771
    %3010 = vmatpush.bf16.msra.mxu0 %v2767
    %3011 = vmatpush.bf16.msra.mxu0 %v2763
    %3012 = vmatpush.bf16.msra.mxu0 %v2759
    %3013 = vmatpush.bf16.msra.mxu0 %v2755
    %3014 = vmatpush.bf16.msra.mxu0 %v2751
    %3015 = vmatmul.bf16.gmra.mxu0 %v2225
    %v3016 = vpop.f32.mrf.mxu0
    %v3017 = vadd.f32 %v2359, %v3016
    %v3018 = vpop.f32.mrf.mxu0
    %3019 = vdwg.mxu0
    %3020 = vmatpush.bf16.msra.mxu0 %v2811
    %3021 = vmatpush.bf16.msra.mxu0 %v2807
    %3022 = vmatpush.bf16.msra.mxu0 %v2803
    %3023 = vmatpush.bf16.msra.mxu0 %v2799
    %3024 = vmatpush.bf16.msra.mxu0 %v2795
    %3025 = vmatpush.bf16.msra.mxu0 %v2791
    %3026 = vmatpush.bf16.msra.mxu0 %v2787
    %3027 = vmatpush.bf16.msra.mxu0 %v2783
    %3028 = vmatmul.bf16.gmra.mxu0 %v2226
    %v3029 = vpop.f32.mrf.mxu0
    %v3030 = vadd.f32 %v3017, %v3029
    %v3031 = vpop.f32.mrf.mxu0
    %3032 = vdwg.mxu0
    %3033 = vmatpush.bf16.msra.mxu0 %v2843
    %3034 = vmatpush.bf16.msra.mxu0 %v2839
    %3035 = vmatpush.bf16.msra.mxu0 %v2835
    %3036 = vmatpush.bf16.msra.mxu0 %v2831
    %3037 = vmatpush.bf16.msra.mxu0 %v2827
    %3038 = vmatpush.bf16.msra.mxu0 %v2823
    %3039 = vmatpush.bf16.msra.mxu0 %v2819
    %3040 = vmatpush.bf16.msra.mxu0 %v2815
    %3041 = vmatmul.bf16.gmra.mxu0 %v2227
    %v3042 = vpop.f32.mrf.mxu0
    %v3043 = vadd.f32 %v3030, %v3042
    %v3044 = vpop.f32.mrf.mxu0
    %3045 = vdwg.mxu0
    %3046 = vmatpush.bf16.msra.mxu0 %v2875
    %3047 = vmatpush.bf16.msra.mxu0 %v2871
    %3048 = vmatpush.bf16.msra.mxu0 %v2867
    %3049 = vmatpush.bf16.msra.mxu0 %v2863
    %3050 = vmatpush.bf16.msra.mxu0 %v2859
    %3051 = vmatpush.bf16.msra.mxu0 %v2855
    %3052 = vmatpush.bf16.msra.mxu0 %v2851
    %3053 = vmatpush.bf16.msra.mxu0 %v2847
    %3054 = vmatmul.bf16.gmra.mxu0 %v2228
    %v3055 = vpop.f32.mrf.mxu0
    %v3056 = vadd.f32 %v3043, %v3055
    %v3057 = vpop.f32.mrf.mxu0
    %3058 = vdwg.mxu0
    %3059 = vmatpush.bf16.msra.mxu0 %v2780
    %3060 = vmatpush.bf16.msra.mxu0 %v2776
    %3061 = vmatpush.bf16.msra.mxu0 %v2772
    %3062 = vmatpush.bf16.msra.mxu0 %v2768
    %3063 = vmatpush.bf16.msra.mxu0 %v2764
    %3064 = vmatpush.bf16.msra.mxu0 %v2760
    %3065 = vmatpush.bf16.msra.mxu0 %v2756
    %3066 = vmatpush.bf16.msra.mxu0 %v2752
    %3067 = vmatmul.bf16.gmra.mxu0 %v2225
    %v3068 = vpop.f32.mrf.mxu0
    %v3069 = vadd.f32 %v2360, %v3068
    %v3070 = vpop.f32.mrf.mxu0
    %3071 = vdwg.mxu0
    %3072 = vmatpush.bf16.msra.mxu0 %v2812
    %3073 = vmatpush.bf16.msra.mxu0 %v2808
    %3074 = vmatpush.bf16.msra.mxu0 %v2804
    %3075 = vmatpush.bf16.msra.mxu0 %v2800
    %3076 = vmatpush.bf16.msra.mxu0 %v2796
    %3077 = vmatpush.bf16.msra.mxu0 %v2792
    %3078 = vmatpush.bf16.msra.mxu0 %v2788
    %3079 = vmatpush.bf16.msra.mxu0 %v2784
    %3080 = vmatmul.bf16.gmra.mxu0 %v2226
    %v3081 = vpop.f32.mrf.mxu0
    %v3082 = vadd.f32 %v3069, %v3081
    %v3083 = vpop.f32.mrf.mxu0
    %3084 = vdwg.mxu0
    %3085 = vmatpush.bf16.msra.mxu0 %v2844
    %3086 = vmatpush.bf16.msra.mxu0 %v2840
    %3087 = vmatpush.bf16.msra.mxu0 %v2836
    %3088 = vmatpush.bf16.msra.mxu0 %v2832
    %3089 = vmatpush.bf16.msra.mxu0 %v2828
    %3090 = vmatpush.bf16.msra.mxu0 %v2824
    %3091 = vmatpush.bf16.msra.mxu0 %v2820
    %3092 = vmatpush.bf16.msra.mxu0 %v2816
    %3093 = vmatmul.bf16.gmra.mxu0 %v2227
    %v3094 = vpop.f32.mrf.mxu0
    %v3095 = vadd.f32 %v3082, %v3094
    %v3096 = vpop.f32.mrf.mxu0
    %3097 = vdwg.mxu0
    %3098 = vmatpush.bf16.msra.mxu0 %v2876
    %3099 = vmatpush.bf16.msra.mxu0 %v2872
    %3100 = vmatpush.bf16.msra.mxu0 %v2868
    %3101 = vmatpush.bf16.msra.mxu0 %v2864
    %3102 = vmatpush.bf16.msra.mxu0 %v2860
    %3103 = vmatpush.bf16.msra.mxu0 %v2856
    %3104 = vmatpush.bf16.msra.mxu0 %v2852
    %3105 = vmatpush.bf16.msra.mxu0 %v2848
    %3106 = vmatmul.bf16.gmra.mxu0 %v2228
    %v3107 = vpop.f32.mrf.mxu0
    %v3108 = vadd.f32 %v3095, %v3107
    %v3109 = vpop.f32.mrf.mxu0
    %3110 = vdwg.mxu0
    %3111 = vmatpush.bf16.msra.mxu0 %v2781
    %3112 = vmatpush.bf16.msra.mxu0 %v2777
    %3113 = vmatpush.bf16.msra.mxu0 %v2773
    %3114 = vmatpush.bf16.msra.mxu0 %v2769
    %3115 = vmatpush.bf16.msra.mxu0 %v2765
    %3116 = vmatpush.bf16.msra.mxu0 %v2761
    %3117 = vmatpush.bf16.msra.mxu0 %v2757
    %3118 = vmatpush.bf16.msra.mxu0 %v2753
    %3119 = vmatmul.bf16.gmra.mxu0 %v2225
    %v3120 = vpop.f32.mrf.mxu0
    %v3121 = vadd.f32 %v2361, %v3120
    %v3122 = vpop.f32.mrf.mxu0
    %3123 = vdwg.mxu0
    %3124 = vmatpush.bf16.msra.mxu0 %v2813
    %3125 = vmatpush.bf16.msra.mxu0 %v2809
    %3126 = vmatpush.bf16.msra.mxu0 %v2805
    %3127 = vmatpush.bf16.msra.mxu0 %v2801
    %3128 = vmatpush.bf16.msra.mxu0 %v2797
    %3129 = vmatpush.bf16.msra.mxu0 %v2793
    %3130 = vmatpush.bf16.msra.mxu0 %v2789
    %3131 = vmatpush.bf16.msra.mxu0 %v2785
    %3132 = vmatmul.bf16.gmra.mxu0 %v2226
    %v3133 = vpop.f32.mrf.mxu0
    %v3134 = vadd.f32 %v3121, %v3133
    %v3135 = vpop.f32.mrf.mxu0
    %3136 = vdwg.mxu0
    %3137 = vmatpush.bf16.msra.mxu0 %v2845
    %3138 = vmatpush.bf16.msra.mxu0 %v2841
    %3139 = vmatpush.bf16.msra.mxu0 %v2837
    %3140 = vmatpush.bf16.msra.mxu0 %v2833
    %3141 = vmatpush.bf16.msra.mxu0 %v2829
    %3142 = vmatpush.bf16.msra.mxu0 %v2825
    %3143 = vmatpush.bf16.msra.mxu0 %v2821
    %3144 = vmatpush.bf16.msra.mxu0 %v2817
    %3145 = vmatmul.bf16.gmra.mxu0 %v2227
    %v3146 = vpop.f32.mrf.mxu0
    %v3147 = vadd.f32 %v3134, %v3146
    %v3148 = vpop.f32.mrf.mxu0
    %3149 = vdwg.mxu0
    %3150 = vmatpush.bf16.msra.mxu0 %v2877
    %3151 = vmatpush.bf16.msra.mxu0 %v2873
    %3152 = vmatpush.bf16.msra.mxu0 %v2869
    %3153 = vmatpush.bf16.msra.mxu0 %v2865
    %3154 = vmatpush.bf16.msra.mxu0 %v2861
    %3155 = vmatpush.bf16.msra.mxu0 %v2857
    %3156 = vmatpush.bf16.msra.mxu0 %v2853
    %3157 = vmatpush.bf16.msra.mxu0 %v2849
    %3158 = vmatmul.bf16.gmra.mxu0 %v2228
    %v3159 = vpop.f32.mrf.mxu0
    %v3160 = vadd.f32 %v3147, %v3159
    %v3161 = vpop.f32.mrf.mxu0
    %3162 = vdwg.mxu0
    %3163 = vmatpush.bf16.msra.mxu0 %v2782
    %3164 = vmatpush.bf16.msra.mxu0 %v2778
    %3165 = vmatpush.bf16.msra.mxu0 %v2774
    %3166 = vmatpush.bf16.msra.mxu0 %v2770
    %3167 = vmatpush.bf16.msra.mxu0 %v2766
    %3168 = vmatpush.bf16.msra.mxu0 %v2762
    %3169 = vmatpush.bf16.msra.mxu0 %v2758
    %3170 = vmatpush.bf16.msra.mxu0 %v2754
    %3171 = vmatmul.bf16.gmra.mxu0 %v2225
    %v3172 = vpop.f32.mrf.mxu0
    %v3173 = vadd.f32 %v2362, %v3172
    %v3174 = vpop.f32.mrf.mxu0
    %3175 = vdwg.mxu0
    %3176 = vmatpush.bf16.msra.mxu0 %v2814
    %3177 = vmatpush.bf16.msra.mxu0 %v2810
    %3178 = vmatpush.bf16.msra.mxu0 %v2806
    %3179 = vmatpush.bf16.msra.mxu0 %v2802
    %3180 = vmatpush.bf16.msra.mxu0 %v2798
    %3181 = vmatpush.bf16.msra.mxu0 %v2794
    %3182 = vmatpush.bf16.msra.mxu0 %v2790
    %3183 = vmatpush.bf16.msra.mxu0 %v2786
    %3184 = vmatmul.bf16.gmra.mxu0 %v2226
    %v3185 = vpop.f32.mrf.mxu0
    %v3186 = vadd.f32 %v3173, %v3185
    %v3187 = vpop.f32.mrf.mxu0
    %3188 = vdwg.mxu0
    %3189 = vmatpush.bf16.msra.mxu0 %v2846
    %3190 = vmatpush.bf16.msra.mxu0 %v2842
    %3191 = vmatpush.bf16.msra.mxu0 %v2838
    %3192 = vmatpush.bf16.msra.mxu0 %v2834
    %3193 = vmatpush.bf16.msra.mxu0 %v2830
    %3194 = vmatpush.bf16.msra.mxu0 %v2826
    %3195 = vmatpush.bf16.msra.mxu0 %v2822
    %3196 = vmatpush.bf16.msra.mxu0 %v2818
    %3197 = vmatmul.bf16.gmra.mxu0 %v2227
    %v3198 = vpop.f32.mrf.mxu0
    %v3199 = vadd.f32 %v3186, %v3198
    %v3200 = vpop.f32.mrf.mxu0
    %3201 = vdwg.mxu0
    %3202 = vmatpush.bf16.msra.mxu0 %v2878
    %3203 = vmatpush.bf16.msra.mxu0 %v2874
    %3204 = vmatpush.bf16.msra.mxu0 %v2870
    %3205 = vmatpush.bf16.msra.mxu0 %v2866
    %3206 = vmatpush.bf16.msra.mxu0 %v2862
    %3207 = vmatpush.bf16.msra.mxu0 %v2858
    %3208 = vmatpush.bf16.msra.mxu0 %v2854
    %3209 = vmatpush.bf16.msra.mxu0 %v2850
    %3210 = vmatmul.bf16.gmra.mxu0 %v2228
    %v3211 = vpop.f32.mrf.mxu0
    %v3212 = vadd.f32 %v3199, %v3211
    %v3213 = vpop.f32.mrf.mxu0
    %3214 = vdwg.mxu0
    %v3215 = vmax.f32 %v3056, 0.0
    %v3216 = vmax.f32 %v3108, 0.0
    %v3217 = vmax.f32 %v3160, 0.0
    %v3218 = vmax.f32 %v3212, 0.0
    %v3219 = vpack.c.bf16 %v3215, %v3215
    %v3220 = vpack.c.bf16 %v3216, %v3216
    %v3221 = vpack.c.bf16 %v3217, %v3217
    %v3222 = vpack.c.bf16 %v3218, %v3218
    %v3223 = vld [vmem:[#allocation9] sm:$0xff]
    %v3224 = vld [vmem:[#allocation9 + $0x8] sm:$0xff]
    %v3225 = vld [vmem:[#allocation9 + $0x10] sm:$0xff]
    %v3226 = vld [vmem:[#allocation9 + $0x18] sm:$0xff]
    %v3227 = vld [vmem:[#allocation9 + $0x20] sm:$0xff]
    %v3228 = vld [vmem:[#allocation9 + $0x28] sm:$0xff]
    %v3229 = vld [vmem:[#allocation9 + $0x30] sm:$0xff]
    %v3230 = vld [vmem:[#allocation9 + $0x38] sm:$0xff]
    %v3231 = vld [vmem:[#allocation9 + $0x40] sm:$0xff]
    %v3232 = vld [vmem:[#allocation9 + $0x48] sm:$0xff]
    %v3233 = vld [vmem:[#allocation9 + $0x50] sm:$0xff]
    %v3234 = vld [vmem:[#allocation9 + $0x58] sm:$0xff]
    %v3235 = vld [vmem:[#allocation9 + $0x60] sm:$0xff]
    %v3236 = vld [vmem:[#allocation9 + $0x68] sm:$0xff]
    %v3237 = vld [vmem:[#allocation9 + $0x70] sm:$0xff]
    %v3238 = vld [vmem:[#allocation9 + $0x78] sm:$0xff]
    %v3239 = vld [vmem:[#allocation9 + $0x80] sm:$0xff]
    %v3240 = vld [vmem:[#allocation9 + $0x88] sm:$0xff]
    %v3241 = vld [vmem:[#allocation9 + $0x90] sm:$0xff]
    %v3242 = vld [vmem:[#allocation9 + $0x98] sm:$0xff]
    %v3243 = vld [vmem:[#allocation9 + $0xa0] sm:$0xff]
    %v3244 = vld [vmem:[#allocation9 + $0xa8] sm:$0xff]
    %v3245 = vld [vmem:[#allocation9 + $0xb0] sm:$0xff]
    %v3246 = vld [vmem:[#allocation9 + $0xb8] sm:$0xff]
    %v3247 = vld [vmem:[#allocation9 + $0xc0] sm:$0xff]
    %v3248 = vld [vmem:[#allocation9 + $0xc8] sm:$0xff]
    %v3249 = vld [vmem:[#allocation9 + $0xd0] sm:$0xff]
    %v3250 = vld [vmem:[#allocation9 + $0xd8] sm:$0xff]
    %v3251 = vld [vmem:[#allocation9 + $0xe0] sm:$0xff]
    %v3252 = vld [vmem:[#allocation9 + $0xe8] sm:$0xff]
    %v3253 = vld [vmem:[#allocation9 + $0xf0] sm:$0xff]
    %v3254 = vld [vmem:[#allocation9 + $0xf8] sm:$0xff]
    %v3255 = vld [vmem:[#allocation9 + $0x100] sm:$0xff]
    %v3256 = vld [vmem:[#allocation9 + $0x108] sm:$0xff]
    %v3257 = vld [vmem:[#allocation9 + $0x110] sm:$0xff]
    %v3258 = vld [vmem:[#allocation9 + $0x118] sm:$0xff]
    %v3259 = vld [vmem:[#allocation9 + $0x120] sm:$0xff]
    %v3260 = vld [vmem:[#allocation9 + $0x128] sm:$0xff]
    %v3261 = vld [vmem:[#allocation9 + $0x130] sm:$0xff]
    %v3262 = vld [vmem:[#allocation9 + $0x138] sm:$0xff]
    %v3263 = vld [vmem:[#allocation9 + $0x140] sm:$0xff]
    %v3264 = vld [vmem:[#allocation9 + $0x148] sm:$0xff]
    %v3265 = vld [vmem:[#allocation9 + $0x150] sm:$0xff]
    %v3266 = vld [vmem:[#allocation9 + $0x158] sm:$0xff]
    %v3267 = vld [vmem:[#allocation9 + $0x160] sm:$0xff]
    %v3268 = vld [vmem:[#allocation9 + $0x168] sm:$0xff]
    %v3269 = vld [vmem:[#allocation9 + $0x170] sm:$0xff]
    %v3270 = vld [vmem:[#allocation9 + $0x178] sm:$0xff]
    %v3271 = vld [vmem:[#allocation9 + $0x180] sm:$0xff]
    %v3272 = vld [vmem:[#allocation9 + $0x188] sm:$0xff]
    %v3273 = vld [vmem:[#allocation9 + $0x190] sm:$0xff]
    %v3274 = vld [vmem:[#allocation9 + $0x198] sm:$0xff]
    %v3275 = vld [vmem:[#allocation9 + $0x1a0] sm:$0xff]
    %v3276 = vld [vmem:[#allocation9 + $0x1a8] sm:$0xff]
    %v3277 = vld [vmem:[#allocation9 + $0x1b0] sm:$0xff]
    %v3278 = vld [vmem:[#allocation9 + $0x1b8] sm:$0xff]
    %v3279 = vld [vmem:[#allocation9 + $0x1c0] sm:$0xff]
    %v3280 = vld [vmem:[#allocation9 + $0x1c8] sm:$0xff]
    %v3281 = vld [vmem:[#allocation9 + $0x1d0] sm:$0xff]
    %v3282 = vld [vmem:[#allocation9 + $0x1d8] sm:$0xff]
    %v3283 = vld [vmem:[#allocation9 + $0x1e0] sm:$0xff]
    %v3284 = vld [vmem:[#allocation9 + $0x1e8] sm:$0xff]
    %v3285 = vld [vmem:[#allocation9 + $0x1f0] sm:$0xff]
    %v3286 = vld [vmem:[#allocation9 + $0x1f8] sm:$0xff]
    %v3287 = vld [vmem:[%s10] sm:$0x3]
    %v3289 = vperm.slane %v3287, 0
    %v3290 = vperm.slane %v3287, 1
    %v3357 = vunpack.c.l.b16 %v3223
    %v3358 = vunpack.c.h.b16 %v3223
    %v3359 = vunpack.c.l.b16 %v3224
    %v3360 = vunpack.c.h.b16 %v3224
    %v3361 = vunpack.c.l.b16 %v3225
    %v3362 = vunpack.c.h.b16 %v3225
    %v3363 = vunpack.c.l.b16 %v3226
    %v3364 = vunpack.c.h.b16 %v3226
    %v3365 = vunpack.c.l.b16 %v3227
    %v3366 = vunpack.c.h.b16 %v3227
    %v3367 = vunpack.c.l.b16 %v3228
    %v3368 = vunpack.c.h.b16 %v3228
    %v3369 = vunpack.c.l.b16 %v3229
    %v3370 = vunpack.c.h.b16 %v3229
    %v3371 = vunpack.c.l.b16 %v3230
    %v3372 = vunpack.c.h.b16 %v3230
    %v3373 = vunpack.c.l.b16 %v3231
    %v3374 = vunpack.c.h.b16 %v3231
    %v3375 = vunpack.c.l.b16 %v3232
    %v3376 = vunpack.c.h.b16 %v3232
    %v3377 = vunpack.c.l.b16 %v3233
    %v3378 = vunpack.c.h.b16 %v3233
    %v3379 = vunpack.c.l.b16 %v3234
    %v3380 = vunpack.c.h.b16 %v3234
    %v3381 = vunpack.c.l.b16 %v3235
    %v3382 = vunpack.c.h.b16 %v3235
    %v3383 = vunpack.c.l.b16 %v3236
    %v3384 = vunpack.c.h.b16 %v3236
    %v3385 = vunpack.c.l.b16 %v3237
    %v3386 = vunpack.c.h.b16 %v3237
    %v3387 = vunpack.c.l.b16 %v3238
    %v3388 = vunpack.c.h.b16 %v3238
    %v3389 = vunpack.c.l.b16 %v3239
    %v3390 = vunpack.c.h.b16 %v3239
    %v3391 = vunpack.c.l.b16 %v3240
    %v3392 = vunpack.c.h.b16 %v3240
    %v3393 = vunpack.c.l.b16 %v3241
    %v3394 = vunpack.c.h.b16 %v3241
    %v3395 = vunpack.c.l.b16 %v3242
    %v3396 = vunpack.c.h.b16 %v3242
    %v3397 = vunpack.c.l.b16 %v3243
    %v3398 = vunpack.c.h.b16 %v3243
    %v3399 = vunpack.c.l.b16 %v3244
    %v3400 = vunpack.c.h.b16 %v3244
    %v3401 = vunpack.c.l.b16 %v3245
    %v3402 = vunpack.c.h.b16 %v3245
    %v3403 = vunpack.c.l.b16 %v3246
    %v3404 = vunpack.c.h.b16 %v3246
    %v3405 = vunpack.c.l.b16 %v3247
    %v3406 = vunpack.c.h.b16 %v3247
    %v3407 = vunpack.c.l.b16 %v3248
    %v3408 = vunpack.c.h.b16 %v3248
    %v3409 = vunpack.c.l.b16 %v3249
    %v3410 = vunpack.c.h.b16 %v3249
    %v3411 = vunpack.c.l.b16 %v3250
    %v3412 = vunpack.c.h.b16 %v3250
    %v3413 = vunpack.c.l.b16 %v3251
    %v3414 = vunpack.c.h.b16 %v3251
    %v3415 = vunpack.c.l.b16 %v3252
    %v3416 = vunpack.c.h.b16 %v3252
    %v3417 = vunpack.c.l.b16 %v3253
    %v3418 = vunpack.c.h.b16 %v3253
    %v3419 = vunpack.c.l.b16 %v3254
    %v3420 = vunpack.c.h.b16 %v3254
    %v3421 = vunpack.c.l.b16 %v3255
    %v3422 = vunpack.c.h.b16 %v3255
    %v3423 = vunpack.c.l.b16 %v3256
    %v3424 = vunpack.c.h.b16 %v3256
    %v3425 = vunpack.c.l.b16 %v3257
    %v3426 = vunpack.c.h.b16 %v3257
    %v3427 = vunpack.c.l.b16 %v3258
    %v3428 = vunpack.c.h.b16 %v3258
    %v3429 = vunpack.c.l.b16 %v3259
    %v3430 = vunpack.c.h.b16 %v3259
    %v3431 = vunpack.c.l.b16 %v3260
    %v3432 = vunpack.c.h.b16 %v3260
    %v3433 = vunpack.c.l.b16 %v3261
    %v3434 = vunpack.c.h.b16 %v3261
    %v3435 = vunpack.c.l.b16 %v3262
    %v3436 = vunpack.c.h.b16 %v3262
    %v3437 = vunpack.c.l.b16 %v3263
    %v3438 = vunpack.c.h.b16 %v3263
    %v3439 = vunpack.c.l.b16 %v3264
    %v3440 = vunpack.c.h.b16 %v3264
    %v3441 = vunpack.c.l.b16 %v3265
    %v3442 = vunpack.c.h.b16 %v3265
    %v3443 = vunpack.c.l.b16 %v3266
    %v3444 = vunpack.c.h.b16 %v3266
    %v3445 = vunpack.c.l.b16 %v3267
    %v3446 = vunpack.c.h.b16 %v3267
    %v3447 = vunpack.c.l.b16 %v3268
    %v3448 = vunpack.c.h.b16 %v3268
    %v3449 = vunpack.c.l.b16 %v3269
    %v3450 = vunpack.c.h.b16 %v3269
    %v3451 = vunpack.c.l.b16 %v3270
    %v3452 = vunpack.c.h.b16 %v3270
    %v3453 = vunpack.c.l.b16 %v3271
    %v3454 = vunpack.c.h.b16 %v3271
    %v3455 = vunpack.c.l.b16 %v3272
    %v3456 = vunpack.c.h.b16 %v3272
    %v3457 = vunpack.c.l.b16 %v3273
    %v3458 = vunpack.c.h.b16 %v3273
    %v3459 = vunpack.c.l.b16 %v3274
    %v3460 = vunpack.c.h.b16 %v3274
    %v3461 = vunpack.c.l.b16 %v3275
    %v3462 = vunpack.c.h.b16 %v3275
    %v3463 = vunpack.c.l.b16 %v3276
    %v3464 = vunpack.c.h.b16 %v3276
    %v3465 = vunpack.c.l.b16 %v3277
    %v3466 = vunpack.c.h.b16 %v3277
    %v3467 = vunpack.c.l.b16 %v3278
    %v3468 = vunpack.c.h.b16 %v3278
    %v3469 = vunpack.c.l.b16 %v3279
    %v3470 = vunpack.c.h.b16 %v3279
    %v3471 = vunpack.c.l.b16 %v3280
    %v3472 = vunpack.c.h.b16 %v3280
    %v3473 = vunpack.c.l.b16 %v3281
    %v3474 = vunpack.c.h.b16 %v3281
    %v3475 = vunpack.c.l.b16 %v3282
    %v3476 = vunpack.c.h.b16 %v3282
    %v3477 = vunpack.c.l.b16 %v3283
    %v3478 = vunpack.c.h.b16 %v3283
    %v3479 = vunpack.c.l.b16 %v3284
    %v3480 = vunpack.c.h.b16 %v3284
    %v3481 = vunpack.c.l.b16 %v3285
    %v3482 = vunpack.c.h.b16 %v3285
    %v3483 = vunpack.c.l.b16 %v3286
    %v3484 = vunpack.c.h.b16 %v3286
    %v3485 = vpack.c.b16 %v3359, %v3357
    %v3486 = vpack.c.b16 %v3360, %v3358
    %v3487 = vpack.c.b16 %v3363, %v3361
    %v3488 = vpack.c.b16 %v3364, %v3362
    %v3489 = vpack.c.b16 %v3367, %v3365
    %v3490 = vpack.c.b16 %v3368, %v3366
    %v3491 = vpack.c.b16 %v3371, %v3369
    %v3492 = vpack.c.b16 %v3372, %v3370
    %v3493 = vpack.c.b16 %v3375, %v3373
    %v3494 = vpack.c.b16 %v3376, %v3374
    %v3495 = vpack.c.b16 %v3379, %v3377
    %v3496 = vpack.c.b16 %v3380, %v3378
    %v3497 = vpack.c.b16 %v3383, %v3381
    %v3498 = vpack.c.b16 %v3384, %v3382
    %v3499 = vpack.c.b16 %v3387, %v3385
    %v3500 = vpack.c.b16 %v3388, %v3386
    %v3501 = vpack.c.b16 %v3391, %v3389
    %v3502 = vpack.c.b16 %v3392, %v3390
    %v3503 = vpack.c.b16 %v3395, %v3393
    %v3504 = vpack.c.b16 %v3396, %v3394
    %v3505 = vpack.c.b16 %v3399, %v3397
    %v3506 = vpack.c.b16 %v3400, %v3398
    %v3507 = vpack.c.b16 %v3403, %v3401
    %v3508 = vpack.c.b16 %v3404, %v3402
    %v3509 = vpack.c.b16 %v3407, %v3405
    %v3510 = vpack.c.b16 %v3408, %v3406
    %v3511 = vpack.c.b16 %v3411, %v3409
    %v3512 = vpack.c.b16 %v3412, %v3410
    %v3513 = vpack.c.b16 %v3415, %v3413
    %v3514 = vpack.c.b16 %v3416, %v3414
    %v3515 = vpack.c.b16 %v3419, %v3417
    %v3516 = vpack.c.b16 %v3420, %v3418
    %v3517 = vpack.c.b16 %v3423, %v3421
    %v3518 = vpack.c.b16 %v3424, %v3422
    %v3519 = vpack.c.b16 %v3427, %v3425
    %v3520 = vpack.c.b16 %v3428, %v3426
    %v3521 = vpack.c.b16 %v3431, %v3429
    %v3522 = vpack.c.b16 %v3432, %v3430
    %v3523 = vpack.c.b16 %v3435, %v3433
    %v3524 = vpack.c.b16 %v3436, %v3434
    %v3525 = vpack.c.b16 %v3439, %v3437
    %v3526 = vpack.c.b16 %v3440, %v3438
    %v3527 = vpack.c.b16 %v3443, %v3441
    %v3528 = vpack.c.b16 %v3444, %v3442
    %v3529 = vpack.c.b16 %v3447, %v3445
    %v3530 = vpack.c.b16 %v3448, %v3446
    %v3531 = vpack.c.b16 %v3451, %v3449
    %v3532 = vpack.c.b16 %v3452, %v3450
    %v3533 = vpack.c.b16 %v3455, %v3453
    %v3534 = vpack.c.b16 %v3456, %v3454
    %v3535 = vpack.c.b16 %v3459, %v3457
    %v3536 = vpack.c.b16 %v3460, %v3458
    %v3537 = vpack.c.b16 %v3463, %v3461
    %v3538 = vpack.c.b16 %v3464, %v3462
    %v3539 = vpack.c.b16 %v3467, %v3465
    %v3540 = vpack.c.b16 %v3468, %v3466
    %v3541 = vpack.c.b16 %v3471, %v3469
    %v3542 = vpack.c.b16 %v3472, %v3470
    %v3543 = vpack.c.b16 %v3475, %v3473
    %v3544 = vpack.c.b16 %v3476, %v3474
    %v3545 = vpack.c.b16 %v3479, %v3477
    %v3546 = vpack.c.b16 %v3480, %v3478
    %v3547 = vpack.c.b16 %v3483, %v3481
    %v3548 = vpack.c.b16 %v3484, %v3482
    %3613 = vmatpush.bf16.msra.mxu0 %v3499
    %3614 = vmatpush.bf16.msra.mxu0 %v3497
    %3615 = vmatpush.bf16.msra.mxu0 %v3495
    %3616 = vmatpush.bf16.msra.mxu0 %v3493
    %3617 = vmatpush.bf16.msra.mxu0 %v3491
    %3618 = vmatpush.bf16.msra.mxu0 %v3489
    %3619 = vmatpush.bf16.msra.mxu0 %v3487
    %3620 = vmatpush.bf16.msra.mxu0 %v3485
    %3621 = vmatmul.bf16.gmra.mxu0 %v3219
    %v3622 = vpop.f32.mrf.mxu0
    %v3623 = vadd.f32 %v3289, %v3622
    %v3624 = vpop.f32.mrf.mxu0
    %3625 = vdwg.mxu0
    %3626 = vmatpush.bf16.msra.mxu0 %v3515
    %3627 = vmatpush.bf16.msra.mxu0 %v3513
    %3628 = vmatpush.bf16.msra.mxu0 %v3511
    %3629 = vmatpush.bf16.msra.mxu0 %v3509
    %3630 = vmatpush.bf16.msra.mxu0 %v3507
    %3631 = vmatpush.bf16.msra.mxu0 %v3505
    %3632 = vmatpush.bf16.msra.mxu0 %v3503
    %3633 = vmatpush.bf16.msra.mxu0 %v3501
    %3634 = vmatmul.bf16.gmra.mxu0 %v3220
    %v3635 = vpop.f32.mrf.mxu0
    %v3636 = vadd.f32 %v3623, %v3635
    %v3637 = vpop.f32.mrf.mxu0
    %3638 = vdwg.mxu0
    %3639 = vmatpush.bf16.msra.mxu0 %v3531
    %3640 = vmatpush.bf16.msra.mxu0 %v3529
    %3641 = vmatpush.bf16.msra.mxu0 %v3527
    %3642 = vmatpush.bf16.msra.mxu0 %v3525
    %3643 = vmatpush.bf16.msra.mxu0 %v3523
    %3644 = vmatpush.bf16.msra.mxu0 %v3521
    %3645 = vmatpush.bf16.msra.mxu0 %v3519
    %3646 = vmatpush.bf16.msra.mxu0 %v3517
    %3647 = vmatmul.bf16.gmra.mxu0 %v3221
    %v3648 = vpop.f32.mrf.mxu0
    %v3649 = vadd.f32 %v3636, %v3648
    %v3650 = vpop.f32.mrf.mxu0
    %3651 = vdwg.mxu0
    %3652 = vmatpush.bf16.msra.mxu0 %v3547
    %3653 = vmatpush.bf16.msra.mxu0 %v3545
    %3654 = vmatpush.bf16.msra.mxu0 %v3543
    %3655 = vmatpush.bf16.msra.mxu0 %v3541
    %3656 = vmatpush.bf16.msra.mxu0 %v3539
    %3657 = vmatpush.bf16.msra.mxu0 %v3537
    %3658 = vmatpush.bf16.msra.mxu0 %v3535
    %3659 = vmatpush.bf16.msra.mxu0 %v3533
    %3660 = vmatmul.bf16.gmra.mxu0 %v3222
    %v3661 = vpop.f32.mrf.mxu0
    %v3662 = vadd.f32 %v3649, %v3661
    %v3663 = vpop.f32.mrf.mxu0
    %3664 = vdwg.mxu0
    %3665 = vmatpush.bf16.msra.mxu0 %v3500
    %3666 = vmatpush.bf16.msra.mxu0 %v3498
    %3667 = vmatpush.bf16.msra.mxu0 %v3496
    %3668 = vmatpush.bf16.msra.mxu0 %v3494
    %3669 = vmatpush.bf16.msra.mxu0 %v3492
    %3670 = vmatpush.bf16.msra.mxu0 %v3490
    %3671 = vmatpush.bf16.msra.mxu0 %v3488
    %3672 = vmatpush.bf16.msra.mxu0 %v3486
    %3673 = vmatmul.bf16.gmra.mxu0 %v3219
    %v3674 = vpop.f32.mrf.mxu0
    %v3675 = vadd.f32 %v3290, %v3674
    %v3676 = vpop.f32.mrf.mxu0
    %3677 = vdwg.mxu0
    %3678 = vmatpush.bf16.msra.mxu0 %v3516
    %3679 = vmatpush.bf16.msra.mxu0 %v3514
    %3680 = vmatpush.bf16.msra.mxu0 %v3512
    %3681 = vmatpush.bf16.msra.mxu0 %v3510
    %3682 = vmatpush.bf16.msra.mxu0 %v3508
    %3683 = vmatpush.bf16.msra.mxu0 %v3506
    %3684 = vmatpush.bf16.msra.mxu0 %v3504
    %3685 = vmatpush.bf16.msra.mxu0 %v3502
    %3686 = vmatmul.bf16.gmra.mxu0 %v3220
    %v3687 = vpop.f32.mrf.mxu0
    %v3688 = vadd.f32 %v3675, %v3687
    %v3689 = vpop.f32.mrf.mxu0
    %3690 = vdwg.mxu0
    %3691 = vmatpush.bf16.msra.mxu0 %v3532
    %3692 = vmatpush.bf16.msra.mxu0 %v3530
    %3693 = vmatpush.bf16.msra.mxu0 %v3528
    %3694 = vmatpush.bf16.msra.mxu0 %v3526
    %3695 = vmatpush.bf16.msra.mxu0 %v3524
    %3696 = vmatpush.bf16.msra.mxu0 %v3522
    %3697 = vmatpush.bf16.msra.mxu0 %v3520
    %3698 = vmatpush.bf16.msra.mxu0 %v3518
    %3699 = vmatmul.bf16.gmra.mxu0 %v3221
    %v3700 = vpop.f32.mrf.mxu0
    %v3701 = vadd.f32 %v3688, %v3700
    %v3702 = vpop.f32.mrf.mxu0
    %3703 = vdwg.mxu0
    %3704 = vmatpush.bf16.msra.mxu0 %v3548
    %3705 = vmatpush.bf16.msra.mxu0 %v3546
    %3706 = vmatpush.bf16.msra.mxu0 %v3544
    %3707 = vmatpush.bf16.msra.mxu0 %v3542
    %3708 = vmatpush.bf16.msra.mxu0 %v3540
    %3709 = vmatpush.bf16.msra.mxu0 %v3538
    %3710 = vmatpush.bf16.msra.mxu0 %v3536
    %3711 = vmatpush.bf16.msra.mxu0 %v3534
    %3712 = vmatmul.bf16.gmra.mxu0 %v3222
    %v3713 = vpop.f32.mrf.mxu0
    %v3714 = vadd.f32 %v3701, %v3713
    %v3715 = vpop.f32.mrf.mxu0
    %3716 = vdwg.mxu0
    %v3717 = vlaneseq
    %v3718 = vshrl.u32 %v3717, 7
    %v3719 = vlaneseq
    %v3720 = vand.u32 %v3719, 127
    %vm3721 = vcmp.lt.s32.totalorder %v3718, 2
    %vm3722 = vcmp.lt.s32.totalorder %v3720, 8
    %vm3723 = vmand %vm3721, %vm3722
    %v3724 = vsel %vm3723, %v3662, 0.0
    %3725 = vadd.xlane.f32.xlu0 %v3724
    %v3726 = vpop.xlane.xlu0 %3725
    %v3727 = vrot.slane %v3726, 4
    %v3728 = vadd.f32 %v3726, %v3727
    %v3729 = vrot.slane %v3728, 2
    %v3730 = vadd.f32 %v3728, %v3729
    %v3731 = vrot.slane %v3730, 1
    %v3732 = vadd.f32 %v3730, %v3731
    %s3733 = vtos %v3732
    %s3734 = smul.f32 %s3733, 0.0625
    %v3735 = vadd.f32 %v3714, %v3662
    %v3736 = vstv %s3734
    %v3737 = vsub.f32 %v3735, %v3736
    %3738 = vst [vmem:[%s11] sm:$0xff] %v3737
    // Predicated region
    $region66: #{dueling_q_forward.1} parent=1 // pred_check
      _
    $region67: #{dueling_q_forward.1} parent=1 // pred_check_branch
      %3740 = sbr.rel (0) target = $region69
    $region68: #{dueling_q_forward.1} parent=1 // pred_region
      _
    $region69: #{dueling_q_forward.1} parent=1 // pred_fallthru
      _
    // Predicated region
    $region70: #{dueling_q_forward.1} parent=1 // pred_check
      _
    $region71: #{dueling_q_forward.1} parent=1 // pred_check_branch
      %3742 = sbr.rel (0) target = $region73
    $region72: #{dueling_q_forward.1} parent=1 // pred_region
      _
    $region73: #{dueling_q_forward.1} parent=1 // pred_fallthru
      _
    %3743 = vsyncpa [#allocation3], 1
    %3744 = vsyncpa [#allocation5], 1
    %3745 = vsyncpa [#allocation8], 1

</llo_original>
